<compile_context>
chip_gen: v7x
topology: tpu7x:2x2x1
jax: 0.10.0
libtpu: 0.0.40
codegen_flags: <defaults>
</compile_context>

<pallas_src>
import functools

import jax
import jax.numpy as jnp
from jax.experimental import pallas as pl
from jax.experimental.pallas import tpu as pltpu

NEG_INF = -1e12
LANE = 128


def _round_up(x, m):
    return ((x + m - 1) // m) * m


def _pad_axis(x, axis, target, value=0.0):
    if x.shape[axis] == target:
        return x
    pads = [(0, 0)] * x.ndim
    pads[axis] = (0, target - x.shape[axis])
    return jnp.pad(x, pads, constant_values=value)


def _tpu_config():
    """Returns (vmem_limit_bytes, tensorcores_per_chip, bf16_activations_ok)."""
    kind = ""
    try:
        kind = (jax.devices()[0].device_kind or "").lower()
    except Exception:
        pass
    if "v7" in kind:
        return 48 * 1024 * 1024, 2, True      # 64 MiB physical VMEM, 2 TC/chip
    if "v6" in kind:
        return 96 * 1024 * 1024, 1, True      # 128 MiB physical VMEM
    if "v5" in kind:
        return 96 * 1024 * 1024, 1, False     # no bf16 VPU/EUP on v5e
    return 64 * 1024 * 1024, 1, False


def _pick_b_blk(B, S_p, NP_p, NC_p, H, O, L, vmem_budget, n_cores):
    """Largest batch block (multiple of 16, <=128) that fits the VMEM budget."""
    def est_bytes(bb):
        b = 0
        b += 2 * bb * S_p * H * 2             # enc bf16, double-buffered
        b += 2 * bb * NP_p * H * 2            # num_pades bf16, double-buffered
        b += 2 * bb * (4 * H + 8) * 4         # small per-batch blocks (cur/left/masks)
        b += 3 * bb * S_p * 2 * H * 4         # f32 EPj / feat / attn temporaries
        b += 2 * bb * (NP_p + NC_p) * H * 4   # f32 num-score feature temporaries
        b += 2 * bb * L * H * 4               # logic-attention feature temporaries
        b += 4 * bb * 8 * LANE * 4            # output slabs (rough)
        return b

    b_ceiling = max(16, _round_up(B, 16))
    if n_cores > 1 and B > 16:
        # keep >= 2 grid steps so dimension_semantics=("parallel",) can use both TCs
        b_ceiling = min(b_ceiling, max(16, _round_up((B + 1) // 2, 16)))
    bb = 16
    for cand in (128, 64, 32, 16):
        if cand <= b_ceiling and est_bytes(cand) <= int(vmem_budget * 0.6):
            bb = cand
            break
    return bb


def prediction_inter_kernel(
    # batch-blocked data
    cur_ref, left_ref, hasl_ref, enc_ref, pades_ref, seqm_ref, nmc_ref, nmp_ref,
    # grid-invariant precomputes / packed weights
    le_ref, lp_ref, cproj_ref,
    wc_ref, wl2_ref, wn_ref, wx_ref, we_ref, wnse_ref, wglg_ref, wsblk_ref,
    bc_ref, qb_ref, bop_ref, bns_ref, wns_s_ref, wgl_s_ref, bgl_s_ref,
    # lane-dense packed outputs
    scores_out, vec_out,
    *, act_dtype):
    f32, bf16 = jnp.float32, jnp.bfloat16

    C = cur_ref[...]            # (B, H)   current node embedding (or padding_hidden)
    Lc = left_ref[...]          # (B, H)   left-child embedding (zeros where None)
    HL = hasl_ref[...]          # (B, 1)   1.0 if left child present
    ENC = enc_ref[...]          # (B, S, H)   bf16
    PAD = pades_ref[...]        # (B, NP, H)  bf16 (num_pades only; constants hoisted)
    SM = seqm_ref[...]          # (B, S)   1.0 = masked
    NMC = nmc_ref[...]          # (B, NC)  mask for constant-table scores
    NMP = nmp_ref[...]          # (B, NP)  mask for num_pades scores
    LE = le_ref[...]            # (L, H)   logic embedding table (f32)
    LPRE = lp_ref[...]          # (L, H)   LE @ wgl_l + bgl (precomputed)
    CPROJ = cproj_ref[...]      # (NC, H)  embedding_weight @ wns_e (precomputed)

    B, H = C.shape
    S = ENC.shape[1]
    NPn = PAD.shape[1]
    NCn = CPROJ.shape[0]
    L = LE.shape[0]
    O = bop_ref.shape[1]

    # ----- gated current node (dropout == identity in eval mode) -----
    CP = jnp.dot(C.astype(bf16), wc_ref[...], preferred_element_type=f32) + bc_ref[...]
    LPm = jnp.dot(Lc.astype(bf16), wl2_ref[...], preferred_element_type=f32)
    node_noleft = jnp.tanh(CP[:, 0:H]) * jax.nn.sigmoid(CP[:, H:2 * H])
    node_left = (jnp.tanh(LPm[:, 0:H] + CP[:, 2 * H:3 * H])
                 * jax.nn.sigmoid(LPm[:, H:2 * H] + CP[:, 3 * H:4 * H]))
    node = jnp.where(HL > 0.5, node_left, node_noleft)                      # (B, H) f32

    # ----- node-side packed projections: [tree-q | logic-q | num-leaf | op] -----
    NPj = jnp.dot(node.astype(bf16), wn_ref[...], preferred_element_type=f32)
    q_pack = NPj[:, 0:2 * H] + qb_ref[...]        # attention biases folded into query
    leaf_node = NPj[:, 2 * H:3 * H]
    op_node = NPj[:, 3 * H:3 * H + O]

    # ----- both encoder attention projections fused: (B*S, H) @ (H, 2H) -----
    EPj = jnp.dot(ENC.reshape(B * S, H), we_ref[...], preferred_element_type=f32)
    feat = jnp.tanh((EPj.reshape(B, S, 2 * H) + q_pack[:, None, :]).astype(act_dtype))

    # ----- Linear(H,1) score heads as one MXU matmul vs blockdiag(wta_s, wla_s) -----
    sc2 = jnp.dot(feat.reshape(B * S, 2 * H).astype(bf16), wsblk_ref[...],
                  preferred_element_type=f32).reshape(B, S, 2)
    sc2 = jnp.where(SM[:, :, None] > 0.5, NEG_INF, sc2)
    m = jnp.max(sc2, axis=1, keepdims=True)
    e = jnp.exp(sc2 - m)
    attn = e * pl.reciprocal(jnp.sum(e, axis=1, keepdims=True), approx=True)  # (B,S,2)

    ENCf = ENC.astype(f32)
    ctx = jnp.sum(attn[:, :, 0:1] * ENCf, axis=1)        # (B, H) tree-attn context
    goal_ctx = jnp.sum(attn[:, :, 1:2] * ENCf, axis=1)   # (B, H) logic-attn context

    # ----- context-side packed projection: [num-leaf | op] -----
    XPj = jnp.dot(ctx.astype(bf16), wx_ref[...], preferred_element_type=f32)
    leaf = leaf_node + XPj[:, 0:H] + bns_ref[...]
    op_score = op_node + XPj[:, H:H + O] + bop_ref[...]

    # ----- num score: constant table projection hoisted; only num_pades projected here
    ws_num = wns_s_ref[...][None, :, :]                  # (1, 1, H)
    cfeat = jnp.tanh(CPROJ[None, :, :] + leaf[:, None, :])
    nscore_c = jnp.sum(cfeat * ws_num, axis=-1)
    nscore_c = jnp.where(NMC > 0.5, NEG_INF, nscore_c)
    pproj = jnp.dot(PAD.reshape(B * NPn, H), wnse_ref[...],
                    preferred_element_type=f32).reshape(B, NPn, H)
    pfeat = jnp.tanh(pproj + leaf[:, None, :])
    nscore_p = jnp.sum(pfeat * ws_num, axis=-1)
    nscore_p = jnp.where(NMP > 0.5, NEG_INF, nscore_p)

    # ----- goal <-> logic attention (LE @ wgl_l + bgl precomputed in the wrapper) -----
    gq = jnp.dot(goal_ctx.astype(bf16), wglg_ref[...], preferred_element_type=f32)
    gfeat = jnp.tanh(gq[:, None, :] + LPRE[None, :, :])
    gscore = jnp.sum(gfeat * wgl_s_ref[...][None, :, :], axis=-1) + bgl_s_ref[...]
    gm = jnp.max(gscore, axis=-1, keepdims=True)
    ge = jnp.exp(gscore - gm)
    lprobs = ge * pl.reciprocal(jnp.sum(ge, axis=-1, keepdims=True), approx=True)
    goal_with_logic = jnp.sum(lprobs[:, :, None] * LE[None, :, :], axis=1)   # (B, H)

    # ----- direct slice stores into lane-dense slabs (128-aligned segment offsets) ---
    oNP = _round_up(NCn, LANE)
    oOP = oNP + _round_up(NPn, LANE)
    oLG = oOP + _round_up(O, LANE)
    scores_out[:, 0:NCn] = nscore_c
    scores_out[:, oNP:oNP + NPn] = nscore_p
    scores_out[:, oOP:oOP + O] = op_score
    scores_out[:, oLG:oLG + L] = gscore

    HSEG = _round_up(H, LANE)
    vec_out[:, 0:H] = node + goal_with_logic
    vec_out[:, HSEG:HSEG + H] = ctx


def pack_prediction_inter_params(p):
    """One-time weight packing / bf16 casting / batch-invariant precomputes.

    TODO(synk): in a real decode loop keep these resident across steps (cross-call
    prefetch) instead of re-feeding them from HBM at every kernel invocation.
    """
    f32, bf16 = jnp.float32, jnp.bfloat16
    H = p['wl'].shape[0]
    pp = {'H': H,
          'O': p['bop'].shape[1],
          'L': p['logic_embedding'].shape[0],
          'Nin': p['embedding_weight'].shape[1]}

    # packed shared-LHS weights (bf16 MXU inputs, f32 accumulation in-kernel)
    pp['wc'] = jnp.concatenate([p['wl'], p['wlg'], p['wr_c'], p['wrg_c']], axis=1).astype(bf16)
    pp['wl2'] = jnp.concatenate([p['wr_l'], p['wrg_l']], axis=1).astype(bf16)
    pp['wn'] = jnp.concatenate([p['wta_h'], p['wla_g'], p['wns_n'], p['wop_n']], axis=1).astype(bf16)
    pp['wx'] = jnp.concatenate([p['wns_c'], p['wop_c']], axis=1).astype(bf16)
    pp['we'] = jnp.concatenate([p['wta_e'], p['wla_e']], axis=1).astype(bf16)
    pp['wnse'] = p['wns_e'].astype(bf16)
    pp['wglg'] = p['wgl_g'].astype(bf16)

    # block-diagonal score matrix so the Linear(H,1) encoder heads run on the MXU
    zcol = jnp.zeros((H, 1), f32)
    ws_blk = jnp.concatenate(
        [jnp.concatenate([p['wta_s'].reshape(H, 1), zcol], axis=1),
         jnp.concatenate([zcol, p['wla_s'].reshape(H, 1)], axis=1)], axis=0)     # (2H, 2)
    pp['ws_blk'] = ws_blk.astype(bf16)

    # biases (f32).  bta_s / bla_s are dropped: uniform logit offsets cancel in softmax.
    pp['bc'] = jnp.concatenate([p['bl'], p['blg'], p['br'], p['brg']], axis=1)   # (1, 4H)
    pp['qb'] = jnp.concatenate([p['bta'], p['bla']], axis=1)                     # (1, 2H)
    pp['bop'] = p['bop']
    pp['bns'] = p['bns']
    pp['wns_s'] = p['wns_s']
    pp['wgl_s'] = p['wgl_s']
    pp['bgl_s'] = p['bgl_s']

    # batch-invariant precomputes hoisted out of the per-batch kernel path
    pp['LE'] = p['logic_embedding'].astype(f32)
    pp['lp_pre'] = p['logic_embedding'] @ p['wgl_l'] + p['bgl']                  # (L, H)
    NCp = _round_up(pp['Nin'], 8)
    pp['cproj'] = _pad_axis(p['embedding_weight'][0] @ p['wns_e'], 0, NCp)       # (NCp, H)
    pp['embedding_weight'] = p['embedding_weight']
    return pp


def prediction_inter_forward(pp, cur_emb, left, has_left, encoder_outputs,
                             num_pades, seq_mask, mask_nums):
    f32, bf16 = jnp.float32, jnp.bfloat16
    B, H = cur_emb.shape
    S = encoder_outputs.shape[0]
    Nin, O, L = pp['Nin'], pp['O'], pp['L']
    Npad = num_pades.shape[1]
    # TODO(synk): if the real model's H is not 128-aligned, also pad H (and the packed
    # weight blocks) to multiples of 128 here for fully aligned lane slices.

    vmem_limit, n_cores, bf16_act = _tpu_config()
    act_dtype = jnp.bfloat16 if bf16_act else jnp.float32

    S_p = _round_up(S, 16)          # bf16 sublane packing
    NP_p = _round_up(Npad, 16)
    NC_p = pp['cproj'].shape[0]

    B_BLK = _pick_b_blk(B, S_p, NP_p, NC_p, H, O, L, vmem_limit, n_cores)
    B_pad = _round_up(B, B_BLK)
    grid = (B_pad // B_BLK,)

    # ---- batch-blocked kernel inputs (big tensors shipped as bf16; masks pad to 1.0) --
    enc = jnp.transpose(encoder_outputs, (1, 0, 2))                              # (B,S,H)
    enc_k = _pad_axis(_pad_axis(enc, 1, S_p), 0, B_pad).astype(bf16)
    pades_k = _pad_axis(_pad_axis(num_pades, 1, NP_p), 0, B_pad).astype(bf16)
    seqm_k = _pad_axis(_pad_axis(seq_mask.astype(f32), 1, S_p, 1.0), 0, B_pad, 1.0)
    nmc_k = _pad_axis(_pad_axis(mask_nums[:, :Nin].astype(f32), 1, NC_p, 1.0), 0, B_pad, 1.0)
    nmp_k = _pad_axis(_pad_axis(mask_nums[:, Nin:].astype(f32), 1, NP_p, 1.0), 0, B_pad, 1.0)
    cur_k = _pad_axis(cur_emb.astype(f32), 0, B_pad)
    left_k = _pad_axis(left.astype(f32), 0, B_pad)
    hasl_k = _pad_axis(has_left.astype(f32), 0, B_pad)

    # ---- output slab layout (128-aligned segments) ----
    oNP = _round_up(NC_p, LANE)
    oOP = oNP + _round_up(NP_p, LANE)
    oLG = oOP + _round_up(O, LANE)
    SW = oLG + _round_up(L, LANE)
    HSEG = _round_up(H, LANE)
    VW = 2 * HSEG

    def bb(a):                       # batch-blocked spec
        nd = a.ndim
        return pl.BlockSpec((B_BLK,) + a.shape[1:], lambda i: (i,) + (0,) * (nd - 1))

    def full(a):                     # whole-array (grid-invariant) spec
        shape = a.shape
        return pl.BlockSpec(shape, lambda i: (0,) * len(shape))

    batch_args = [cur_k, left_k, hasl_k, enc_k, pades_k, seqm_k, nmc_k, nmp_k]
    shared_args = [pp['LE'], pp['lp_pre'], pp['cproj'],
                   pp['wc'], pp['wl2'], pp['wn'], pp['wx'], pp['we'],
                   pp['wnse'], pp['wglg'], pp['ws_blk'],
                   pp['bc'], pp['qb'], pp['bop'], pp['bns'],
                   pp['wns_s'], pp['wgl_s'], pp['bgl_s']]
    in_specs = [bb(a) for a in batch_args] + [full(a) for a in shared_args]

    out_shape = (jax.ShapeDtypeStruct((B_pad, SW), f32),
                 jax.ShapeDtypeStruct((B_pad, VW), f32))
    out_specs = (pl.BlockSpec((B_BLK, SW), lambda i: (i, 0)),
                 pl.BlockSpec((B_BLK, VW), lambda i: (i, 0)))

    kernel = functools.partial(prediction_inter_kernel, act_dtype=act_dtype)
    scores, vec = pl.pallas_call(
        kernel,
        out_shape=out_shape,
        grid=grid,
        in_specs=in_specs,
        out_specs=out_specs,
        compiler_params=pltpu.CompilerParams(
            dimension_semantics=("parallel",),
            vmem_limit_bytes=vmem_limit),
    )(*batch_args, *shared_args)

    num_score = jnp.concatenate(
        [scores[:B, 0:Nin], scores[:B, oNP:oNP + Npad]], axis=1)
    op_score = scores[:B, oOP:oOP + O]
    logic_score = scores[:B, oLG:oLG + L]
    cur_node = vec[:B, 0:H].reshape(B, 1, H)
    cur_ctx = vec[:B, HSEG:HSEG + H].reshape(B, 1, H)
    # Returned embedding_weight is pure data plumbing; it never enters the kernel.
    embw = jnp.concatenate(
        [jnp.broadcast_to(pp['embedding_weight'], (B, Nin, H)), num_pades], axis=1)
    return (num_score, op_score, logic_score, cur_node, cur_ctx, embw)


def prediction_inter_ref(p, cur_emb, left, has_left, encoder_outputs,
                         num_pades, seq_mask, mask_nums):
    """Pure-JAX reference mirroring the PyTorch forward (eval mode)."""
    enc = jnp.transpose(encoder_outputs, (1, 0, 2))
    node = jnp.where(
        has_left > 0.5,
        jnp.tanh(left @ p['wr_l'] + cur_emb @ p['wr_c'] + p['br'])
        * jax.nn.sigmoid(left @ p['wrg_l'] + cur_emb @ p['wrg_c'] + p['brg']),
        jnp.tanh(cur_emb @ p['wl'] + p['bl'])
        * jax.nn.sigmoid(cur_emb @ p['wlg'] + p['blg']))

    def attn_over_enc(wq, we, b, ws, bs):
        feat = jnp.tanh(jnp.einsum('bsh,hk->bsk', enc, we) + (node @ wq)[:, None, :] + b[None])
        sc = jnp.einsum('bsh,h->bs', feat, ws[0]) + bs[0, 0]
        sc = jnp.where(seq_mask > 0.5, NEG_INF, sc)
        return jax.nn.softmax(sc, axis=1)

    a = attn_over_enc(p['wta_h'], p['wta_e'], p['bta'], p['wta_s'], p['bta_s'])
    ctx = jnp.einsum('bs,bsh->bh', a, enc)
    B = cur_emb.shape[0]
    embw = jnp.concatenate(
        [jnp.broadcast_to(p['embedding_weight'], (B,) + p['embedding_weight'].shape[1:]),
         num_pades], axis=1)
    leafp = node @ p['wns_n'] + ctx @ p['wns_c']
    nfeat = jnp.tanh(jnp.einsum('bnh,hk->bnk', embw, p['wns_e']) + leafp[:, None, :] + p['bns'][None])
    nsc = jnp.einsum('bnh,h->bn', nfeat, p['wns_s'][0])
    nsc = jnp.where(mask_nums > 0.5, NEG_INF, nsc)
    opsc = node @ p['wop_n'] + ctx @ p['wop_c'] + p['bop']
    la = attn_over_enc(p['wla_g'], p['wla_e'], p['bla'], p['wla_s'], p['bla_s'])
    gctx = jnp.einsum('bs,bsh->bh', la, enc)
    LE = p['logic_embedding']
    gfeat = jnp.tanh((gctx @ p['wgl_g'])[:, None, :] + (LE @ p['wgl_l'])[None] + p['bgl'][None])
    gsc = jnp.einsum('blh,h->bl', gfeat, p['wgl_s'][0]) + p['bgl_s'][0, 0]
    gwl = jax.nn.softmax(gsc, axis=1) @ LE
    return (nsc, opsc, gsc, (node + gwl)[:, None, :], ctx[:, None, :], embw)


def init_params(key, H, O, Nin, L):
    ks = jax.random.split(key, 16)
    s = 0.1

    def lin(k, fin, fout):
        kw, kb = jax.random.split(k)
        return (jax.random.normal(kw, (fin, fout), jnp.float32) * s,
                jax.random.normal(kb, (1, fout), jnp.float32) * s)

    p = {}
    p['wl'], p['bl'] = lin(ks[0], H, H)
    p['wlg'], p['blg'] = lin(ks[1], H, H)
    wr, p['br'] = lin(ks[2], 2 * H, H); p['wr_l'], p['wr_c'] = wr[:H], wr[H:]
    wrg, p['brg'] = lin(ks[3], 2 * H, H); p['wrg_l'], p['wrg_c'] = wrg[:H], wrg[H:]
    wop, p['bop'] = lin(ks[4], 2 * H, O); p['wop_n'], p['wop_c'] = wop[:H], wop[H:]
    # tree_attn: attn Linear(2H,H), score Linear(H,1)
    wta, p['bta'] = lin(ks[5], 2 * H, H); p['wta_h'], p['wta_e'] = wta[:H], wta[H:]
    wts, p['bta_s'] = lin(ks[6], H, 1); p['wta_s'] = wts.reshape(1, H)
    # num_score Score: attn Linear(3H,H), score Linear(H,1,bias=False)
    wns, p['bns'] = lin(ks[7], 3 * H, H)
    p['wns_n'], p['wns_c'], p['wns_e'] = wns[:H], wns[H:2 * H], wns[2 * H:]
    p['wns_s'] = (jax.random.normal(ks[8], (H, 1), jnp.float32) * s).reshape(1, H)
    # logic_attn: attn Linear(2H,H), score Linear(H,1)
    wla, p['bla'] = lin(ks[9], 2 * H, H); p['wla_g'], p['wla_e'] = wla[:H], wla[H:]
    wls, p['bla_s'] = lin(ks[10], H, 1); p['wla_s'] = wls.reshape(1, H)
    # goal_logic_attn: attn Linear(2H,H), score Linear(H,1)
    wgl, p['bgl'] = lin(ks[11], 2 * H, H); p['wgl_g'], p['wgl_l'] = wgl[:H], wgl[H:]
    wgs, p['bgl_s'] = lin(ks[12], H, 1); p['wgl_s'] = wgs.reshape(1, H)
    # module parameters (logic_embedding is synthetic; original uses torch.load)
    p['logic_embedding'] = jax.random.normal(ks[13], (L, H), jnp.float32)
    p['embedding_weight'] = jax.random.normal(ks[14], (1, Nin, H), jnp.float32)
    return p


if __name__ == "__main__":
    H, B, S, Nin, Npad, O, L = 32, 2, 8, 4, 3, 5, 6
    Ntot = Nin + Npad

    key = jax.random.PRNGKey(0)
    kp, kd = jax.random.split(key)
    params = init_params(kp, H, O, Nin, L)
    packed = pack_prediction_inter_params(params)   # one-time setup (kept resident)
    dks = jax.random.split(kd, 6)

    # Host-side glue replacing node_stacks / left_childs / padding_hidden:
    # batch 0: non-empty stack, no left child; batch 1: empty stack, has left child.
    padding_hidden = jnp.zeros((1, H), jnp.float32)
    node_emb0 = jax.random.normal(dks[0], (1, H), jnp.float32)
    cur_emb = jnp.concatenate([node_emb0, padding_hidden], axis=0)        # (B, H)
    left1 = jax.random.normal(dks[1], (1, H), jnp.float32)
    left = jnp.concatenate([jnp.zeros((1, H), jnp.float32), left1], axis=0)
    has_left = jnp.array([[0.0], [1.0]], jnp.float32)                     # (B, 1)

    encoder_outputs = jax.random.normal(dks[2], (S, B, H), jnp.float32)   # PyTorch (S, B, H)
    num_pades = jax.random.normal(dks[3], (B, Npad, H), jnp.float32)
    seq_mask = jnp.zeros((B, S), jnp.float32).at[1, S - 2:].set(1.0)      # 1.0 = masked
    mask_nums = jnp.zeros((B, Ntot), jnp.float32).at[0, Ntot - 1].set(1.0)

    outs = prediction_inter_forward(packed, cur_emb, left, has_left,
                                    encoder_outputs, num_pades, seq_mask, mask_nums)
    outs = jax.block_until_ready(outs)

    refs = prediction_inter_ref(params, cur_emb, left, has_left,
                                encoder_outputs, num_pades, seq_mask, mask_nums)
    for o_k, o_r in zip(outs, refs):
        assert o_k.shape == o_r.shape
        assert bool(jnp.all(jnp.isfinite(o_k)))
        assert bool(jnp.allclose(o_k, o_r, rtol=5e-2, atol=5e-2))

    print("KERNEL_OK")
</pallas_src>

<mosaic_0001>
module attributes {stable_mosaic.version = 11 : i64} {
  func.func @prediction_inter_kernel(%arg0: i32, %arg1: memref<16x32xf32, #tpu.memory_space<vmem>>, %arg2: memref<16x32xf32, #tpu.memory_space<vmem>>, %arg3: memref<16x1xf32, #tpu.memory_space<vmem>>, %arg4: memref<16x16x32xbf16, #tpu.memory_space<vmem>>, %arg5: memref<16x16x32xbf16, #tpu.memory_space<vmem>>, %arg6: memref<16x16xf32, #tpu.memory_space<vmem>>, %arg7: memref<16x8xf32, #tpu.memory_space<vmem>>, %arg8: memref<16x16xf32, #tpu.memory_space<vmem>>, %arg9: memref<6x32xf32, #tpu.memory_space<vmem>>, %arg10: memref<6x32xf32, #tpu.memory_space<vmem>>, %arg11: memref<8x32xf32, #tpu.memory_space<vmem>>, %arg12: memref<32x128xbf16, #tpu.memory_space<vmem>>, %arg13: memref<32x64xbf16, #tpu.memory_space<vmem>>, %arg14: memref<32x101xbf16, #tpu.memory_space<vmem>>, %arg15: memref<32x37xbf16, #tpu.memory_space<vmem>>, %arg16: memref<32x64xbf16, #tpu.memory_space<vmem>>, %arg17: memref<32x32xbf16, #tpu.memory_space<vmem>>, %arg18: memref<32x32xbf16, #tpu.memory_space<vmem>>, %arg19: memref<64x2xbf16, #tpu.memory_space<vmem>>, %arg20: memref<1x128xf32, #tpu.memory_space<vmem>>, %arg21: memref<1x64xf32, #tpu.memory_space<vmem>>, %arg22: memref<1x5xf32, #tpu.memory_space<vmem>>, %arg23: memref<1x32xf32, #tpu.memory_space<vmem>>, %arg24: memref<1x32xf32, #tpu.memory_space<vmem>>, %arg25: memref<1x32xf32, #tpu.memory_space<vmem>>, %arg26: memref<1x1xf32, #tpu.memory_space<vmem>>, %arg27: memref<16x512xf32, #tpu.memory_space<vmem>>, %arg28: memref<16x256xf32, #tpu.memory_space<vmem>>) attributes {dimension_semantics = [#tpu.dimension_semantics<parallel>], iteration_bounds = array<i64: 1>, scalar_prefetch = 0 : i64, scratch_operands = 0 : i64, tpu.core_type = #tpu.core_type<tc>, window_params = [{transform_indices = @transform_0, window_bounds = array<i64: 16, 32>}, {transform_indices = @transform_1, window_bounds = array<i64: 16, 32>}, {transform_indices = @transform_2, window_bounds = array<i64: 16, 1>}, {transform_indices = @transform_3, window_bounds = array<i64: 16, 16, 32>}, {transform_indices = @transform_4, window_bounds = array<i64: 16, 16, 32>}, {transform_indices = @transform_5, window_bounds = array<i64: 16, 16>}, {transform_indices = @transform_6, window_bounds = array<i64: 16, 8>}, {transform_indices = @transform_7, window_bounds = array<i64: 16, 16>}, {pipeline_mode = #tpu.pipeline_mode<synchronous>, transform_indices = @transform_8, window_bounds = array<i64: 6, 32>}, {pipeline_mode = #tpu.pipeline_mode<synchronous>, transform_indices = @transform_9, window_bounds = array<i64: 6, 32>}, {pipeline_mode = #tpu.pipeline_mode<synchronous>, transform_indices = @transform_10, window_bounds = array<i64: 8, 32>}, {pipeline_mode = #tpu.pipeline_mode<synchronous>, transform_indices = @transform_11, window_bounds = array<i64: 32, 128>}, {pipeline_mode = #tpu.pipeline_mode<synchronous>, transform_indices = @transform_12, window_bounds = array<i64: 32, 64>}, {pipeline_mode = #tpu.pipeline_mode<synchronous>, transform_indices = @transform_13, window_bounds = array<i64: 32, 101>}, {pipeline_mode = #tpu.pipeline_mode<synchronous>, transform_indices = @transform_14, window_bounds = array<i64: 32, 37>}, {pipeline_mode = #tpu.pipeline_mode<synchronous>, transform_indices = @transform_15, window_bounds = array<i64: 32, 64>}, {pipeline_mode = #tpu.pipeline_mode<synchronous>, transform_indices = @transform_16, window_bounds = array<i64: 32, 32>}, {pipeline_mode = #tpu.pipeline_mode<synchronous>, transform_indices = @transform_17, window_bounds = array<i64: 32, 32>}, {pipeline_mode = #tpu.pipeline_mode<synchronous>, transform_indices = @transform_18, window_bounds = array<i64: 64, 2>}, {pipeline_mode = #tpu.pipeline_mode<synchronous>, transform_indices = @transform_19, window_bounds = array<i64: 1, 128>}, {pipeline_mode = #tpu.pipeline_mode<synchronous>, transform_indices = @transform_20, window_bounds = array<i64: 1, 64>}, {pipeline_mode = #tpu.pipeline_mode<synchronous>, transform_indices = @transform_21, window_bounds = array<i64: 1, 5>}, {pipeline_mode = #tpu.pipeline_mode<synchronous>, transform_indices = @transform_22, window_bounds = array<i64: 1, 32>}, {pipeline_mode = #tpu.pipeline_mode<synchronous>, transform_indices = @transform_23, window_bounds = array<i64: 1, 32>}, {pipeline_mode = #tpu.pipeline_mode<synchronous>, transform_indices = @transform_24, window_bounds = array<i64: 1, 32>}, {pipeline_mode = #tpu.pipeline_mode<synchronous>, transform_indices = @transform_25, window_bounds = array<i64: 1, 1>}, {transform_indices = @transform_26, window_bounds = array<i64: 16, 512>}, {transform_indices = @transform_27, window_bounds = array<i64: 16, 256>}]} {
    %c0 = arith.constant 0 : index
    %c0_0 = arith.constant 0 : index
    %0 = vector.load %arg1[%c0, %c0_0] : memref<16x32xf32, #tpu.memory_space<vmem>>, vector<16x32xf32>
    %c0_1 = arith.constant 0 : index
    %c0_2 = arith.constant 0 : index
    %1 = vector.load %arg2[%c0_1, %c0_2] : memref<16x32xf32, #tpu.memory_space<vmem>>, vector<16x32xf32>
    %c0_3 = arith.constant 0 : index
    %c0_4 = arith.constant 0 : index
    %2 = vector.load %arg3[%c0_3, %c0_4] : memref<16x1xf32, #tpu.memory_space<vmem>>, vector<16x1xf32>
    %c0_5 = arith.constant 0 : index
    %c0_6 = arith.constant 0 : index
    %c0_7 = arith.constant 0 : index
    %3 = vector.load %arg4[%c0_5, %c0_6, %c0_7] : memref<16x16x32xbf16, #tpu.memory_space<vmem>>, vector<16x16x32xbf16>
    %c0_8 = arith.constant 0 : index
    %c0_9 = arith.constant 0 : index
    %c0_10 = arith.constant 0 : index
    %4 = vector.load %arg5[%c0_8, %c0_9, %c0_10] : memref<16x16x32xbf16, #tpu.memory_space<vmem>>, vector<16x16x32xbf16>
    %c0_11 = arith.constant 0 : index
    %c0_12 = arith.constant 0 : index
    %5 = vector.load %arg6[%c0_11, %c0_12] : memref<16x16xf32, #tpu.memory_space<vmem>>, vector<16x16xf32>
    %c0_13 = arith.constant 0 : index
    %c0_14 = arith.constant 0 : index
    %6 = vector.load %arg7[%c0_13, %c0_14] : memref<16x8xf32, #tpu.memory_space<vmem>>, vector<16x8xf32>
    %c0_15 = arith.constant 0 : index
    %c0_16 = arith.constant 0 : index
    %7 = vector.load %arg8[%c0_15, %c0_16] : memref<16x16xf32, #tpu.memory_space<vmem>>, vector<16x16xf32>
    %c0_17 = arith.constant 0 : index
    %c0_18 = arith.constant 0 : index
    %8 = vector.load %arg9[%c0_17, %c0_18] : memref<6x32xf32, #tpu.memory_space<vmem>>, vector<6x32xf32>
    %c0_19 = arith.constant 0 : index
    %c0_20 = arith.constant 0 : index
    %9 = vector.load %arg10[%c0_19, %c0_20] : memref<6x32xf32, #tpu.memory_space<vmem>>, vector<6x32xf32>
    %c0_21 = arith.constant 0 : index
    %c0_22 = arith.constant 0 : index
    %10 = vector.load %arg11[%c0_21, %c0_22] : memref<8x32xf32, #tpu.memory_space<vmem>>, vector<8x32xf32>
    %11 = arith.truncf %0 : vector<16x32xf32> to vector<16x32xbf16>
    %c0_23 = arith.constant 0 : index
    %c0_24 = arith.constant 0 : index
    %12 = vector.load %arg12[%c0_23, %c0_24] : memref<32x128xbf16, #tpu.memory_space<vmem>>, vector<32x128xbf16>
    %cst = arith.constant dense<0.000000e+00> : vector<16x128xf32>
    %13 = tpu.matmul %11, %12, %cst {dimension_numbers = #tpu.dot_dimension_numbers<[1], [0], [0], [1], [0, 0, 1, 1], [], []>} : vector<16x32xbf16>, vector<32x128xbf16>, vector<16x128xf32> -> vector<16x128xf32>
    %c0_25 = arith.constant 0 : index
    %c0_26 = arith.constant 0 : index
    %14 = vector.load %arg20[%c0_25, %c0_26] : memref<1x128xf32, #tpu.memory_space<vmem>>, vector<1x128xf32>
    %15 = vector.broadcast %14 : vector<1x128xf32> to vector<16x128xf32>
    %16 = arith.addf %13, %15 : vector<16x128xf32>
    %17 = arith.truncf %1 : vector<16x32xf32> to vector<16x32xbf16>
    %c0_27 = arith.constant 0 : index
    %c0_28 = arith.constant 0 : index
    %18 = vector.load %arg13[%c0_27, %c0_28] : memref<32x64xbf16, #tpu.memory_space<vmem>>, vector<32x64xbf16>
    %cst_29 = arith.constant dense<0.000000e+00> : vector<16x64xf32>
    %19 = tpu.matmul %17, %18, %cst_29 {dimension_numbers = #tpu.dot_dimension_numbers<[1], [0], [0], [1], [0, 0, 1, 1], [], []>} : vector<16x32xbf16>, vector<32x64xbf16>, vector<16x64xf32> -> vector<16x64xf32>
    %20 = vector.extract_strided_slice %16 {offsets = [0, 0], sizes = [16, 32], strides = [1, 1]} : vector<16x128xf32> to vector<16x32xf32>
    %21 = math.tanh %20 : vector<16x32xf32>
    %22 = vector.extract_strided_slice %16 {offsets = [0, 32], sizes = [16, 32], strides = [1, 1]} : vector<16x128xf32> to vector<16x32xf32>
    %23 = arith.negf %22 : vector<16x32xf32>
    %24 = math.exp %23 : vector<16x32xf32>
    %cst_30 = arith.constant 1.000000e+00 : f32
    %25 = vector.broadcast %cst_30 : f32 to vector<16x32xf32>
    %26 = arith.addf %25, %24 : vector<16x32xf32>
    %27 = arith.divf %25, %26 : vector<16x32xf32>
    %28 = arith.mulf %21, %27 : vector<16x32xf32>
    %29 = vector.extract_strided_slice %19 {offsets = [0, 0], sizes = [16, 32], strides = [1, 1]} : vector<16x64xf32> to vector<16x32xf32>
    %30 = vector.extract_strided_slice %16 {offsets = [0, 64], sizes = [16, 32], strides = [1, 1]} : vector<16x128xf32> to vector<16x32xf32>
    %31 = arith.addf %29, %30 : vector<16x32xf32>
    %32 = math.tanh %31 : vector<16x32xf32>
    %33 = vector.extract_strided_slice %19 {offsets = [0, 32], sizes = [16, 32], strides = [1, 1]} : vector<16x64xf32> to vector<16x32xf32>
    %34 = vector.extract_strided_slice %16 {offsets = [0, 96], sizes = [16, 32], strides = [1, 1]} : vector<16x128xf32> to vector<16x32xf32>
    %35 = arith.addf %33, %34 : vector<16x32xf32>
    %36 = arith.negf %35 : vector<16x32xf32>
    %37 = math.exp %36 : vector<16x32xf32>
    %cst_31 = arith.constant 1.000000e+00 : f32
    %38 = vector.broadcast %cst_31 : f32 to vector<16x32xf32>
    %39 = arith.addf %38, %37 : vector<16x32xf32>
    %40 = arith.divf %38, %39 : vector<16x32xf32>
    %41 = arith.mulf %32, %40 : vector<16x32xf32>
    %cst_32 = arith.constant 5.000000e-01 : f32
    %42 = vector.broadcast %cst_32 : f32 to vector<16x1xf32>
    %43 = arith.cmpf ogt, %2, %42 : vector<16x1xf32>
    %44 = vector.shape_cast %43 : vector<16x1xi1> to vector<16x1xi1>
    %45 = vector.broadcast %44 : vector<16x1xi1> to vector<16x32xi1>
    %46 = arith.select %45, %41, %28 : vector<16x32xi1>, vector<16x32xf32>
    %47 = arith.truncf %46 : vector<16x32xf32> to vector<16x32xbf16>
    %c0_33 = arith.constant 0 : index
    %c0_34 = arith.constant 0 : index
    %48 = vector.load %arg14[%c0_33, %c0_34] : memref<32x101xbf16, #tpu.memory_space<vmem>>, vector<32x101xbf16>
    %cst_35 = arith.constant dense<0.000000e+00> : vector<16x101xf32>
    %49 = tpu.matmul %47, %48, %cst_35 {dimension_numbers = #tpu.dot_dimension_numbers<[1], [0], [0], [1], [0, 0, 1, 1], [], []>} : vector<16x32xbf16>, vector<32x101xbf16>, vector<16x101xf32> -> vector<16x101xf32>
    %50 = vector.extract_strided_slice %49 {offsets = [0, 0], sizes = [16, 64], strides = [1, 1]} : vector<16x101xf32> to vector<16x64xf32>
    %c0_36 = arith.constant 0 : index
    %c0_37 = arith.constant 0 : index
    %51 = vector.load %arg21[%c0_36, %c0_37] : memref<1x64xf32, #tpu.memory_space<vmem>>, vector<1x64xf32>
    %52 = vector.broadcast %51 : vector<1x64xf32> to vector<16x64xf32>
    %53 = arith.addf %50, %52 : vector<16x64xf32>
    %54 = vector.extract_strided_slice %49 {offsets = [0, 64], sizes = [16, 32], strides = [1, 1]} : vector<16x101xf32> to vector<16x32xf32>
    %55 = vector.extract_strided_slice %49 {offsets = [0, 96], sizes = [16, 5], strides = [1, 1]} : vector<16x101xf32> to vector<16x5xf32>
    %56 = vector.shape_cast %3 : vector<16x16x32xbf16> to vector<256x32xbf16>
    %c0_38 = arith.constant 0 : index
    %c0_39 = arith.constant 0 : index
    %57 = vector.load %arg16[%c0_38, %c0_39] : memref<32x64xbf16, #tpu.memory_space<vmem>>, vector<32x64xbf16>
    %cst_40 = arith.constant dense<0.000000e+00> : vector<256x64xf32>
    %58 = tpu.matmul %56, %57, %cst_40 {dimension_numbers = #tpu.dot_dimension_numbers<[1], [0], [0], [1], [0, 0, 1, 1], [], []>} : vector<256x32xbf16>, vector<32x64xbf16>, vector<256x64xf32> -> vector<256x64xf32>
    %59 = vector.shape_cast %58 : vector<256x64xf32> to vector<16x16x64xf32>
    %60 = vector.shape_cast %53 : vector<16x64xf32> to vector<16x1x64xf32>
    %61 = vector.broadcast %60 : vector<16x1x64xf32> to vector<16x16x64xf32>
    %62 = arith.addf %59, %61 : vector<16x16x64xf32>
    %63 = math.tanh %62 : vector<16x16x64xf32>
    %64 = vector.shape_cast %63 : vector<16x16x64xf32> to vector<256x64xf32>
    %65 = arith.truncf %64 : vector<256x64xf32> to vector<256x64xbf16>
    %c0_41 = arith.constant 0 : index
    %c0_42 = arith.constant 0 : index
    %66 = vector.load %arg19[%c0_41, %c0_42] : memref<64x2xbf16, #tpu.memory_space<vmem>>, vector<64x2xbf16>
    %cst_43 = arith.constant dense<0.000000e+00> : vector<256x2xf32>
    %67 = tpu.matmul %65, %66, %cst_43 {dimension_numbers = #tpu.dot_dimension_numbers<[1], [0], [0], [1], [0, 0, 1, 1], [], []>} : vector<256x64xbf16>, vector<64x2xbf16>, vector<256x2xf32> -> vector<256x2xf32>
    %68 = vector.shape_cast %67 : vector<256x2xf32> to vector<16x16x2xf32>
    %69 = vector.shape_cast %5 : vector<16x16xf32> to vector<16x16x1xf32>
    %cst_44 = arith.constant 5.000000e-01 : f32
    %70 = vector.broadcast %cst_44 : f32 to vector<16x16x1xf32>
    %71 = arith.cmpf ogt, %69, %70 : vector<16x16x1xf32>
    %cst_45 = arith.constant -9.99999995E+11 : f32
    %72 = vector.shape_cast %71 : vector<16x16x1xi1> to vector<16x16x1xi1>
    %73 = vector.broadcast %72 : vector<16x16x1xi1> to vector<16x16x2xi1>
    %74 = vector.broadcast %cst_45 : f32 to vector<16x16x2xf32>
    %75 = arith.select %73, %74, %68 : vector<16x16x2xi1>, vector<16x16x2xf32>
    %cst_46 = arith.constant dense<0xFF800000> : vector<16x2xf32>
    %76 = vector.multi_reduction <maximumf>, %75, %cst_46 [1] : vector<16x16x2xf32> to vector<16x2xf32>
    %77 = vector.shape_cast %76 : vector<16x2xf32> to vector<16x1x2xf32>
    %78 = vector.broadcast %77 : vector<16x1x2xf32> to vector<16x16x2xf32>
    %79 = arith.subf %75, %78 : vector<16x16x2xf32>
    %80 = math.exp %79 : vector<16x16x2xf32>
    %cst_47 = arith.constant dense<0.000000e+00> : vector<16x2xf32>
    %81 = vector.multi_reduction <add>, %80, %cst_47 [1] : vector<16x16x2xf32> to vector<16x2xf32>
    %82 = vector.shape_cast %81 : vector<16x2xf32> to vector<16x1x2xf32>
    %83 = tpu.reciprocal %82 {approx = true} : vector<16x1x2xf32> -> vector<16x1x2xf32>
    %84 = vector.broadcast %83 : vector<16x1x2xf32> to vector<16x16x2xf32>
    %85 = arith.mulf %80, %84 : vector<16x16x2xf32>
    %86 = arith.extf %3 : vector<16x16x32xbf16> to vector<16x16x32xf32>
    %87 = vector.extract_strided_slice %85 {offsets = [0, 0, 0], sizes = [16, 16, 1], strides = [1, 1, 1]} : vector<16x16x2xf32> to vector<16x16x1xf32>
    %88 = vector.broadcast %87 : vector<16x16x1xf32> to vector<16x16x32xf32>
    %89 = arith.mulf %88, %86 : vector<16x16x32xf32>
    %cst_48 = arith.constant dense<0.000000e+00> : vector<16x32xf32>
    %90 = vector.multi_reduction <add>, %89, %cst_48 [1] : vector<16x16x32xf32> to vector<16x32xf32>
    %91 = vector.extract_strided_slice %85 {offsets = [0, 0, 1], sizes = [16, 16, 1], strides = [1, 1, 1]} : vector<16x16x2xf32> to vector<16x16x1xf32>
    %92 = vector.broadcast %91 : vector<16x16x1xf32> to vector<16x16x32xf32>
    %93 = arith.mulf %92, %86 : vector<16x16x32xf32>
    %cst_49 = arith.constant dense<0.000000e+00> : vector<16x32xf32>
    %94 = vector.multi_reduction <add>, %93, %cst_49 [1] : vector<16x16x32xf32> to vector<16x32xf32>
    %95 = arith.truncf %90 : vector<16x32xf32> to vector<16x32xbf16>
    %c0_50 = arith.constant 0 : index
    %c0_51 = arith.constant 0 : index
    %96 = vector.load %arg15[%c0_50, %c0_51] : memref<32x37xbf16, #tpu.memory_space<vmem>>, vector<32x37xbf16>
    %cst_52 = arith.constant dense<0.000000e+00> : vector<16x37xf32>
    %97 = tpu.matmul %95, %96, %cst_52 {dimension_numbers = #tpu.dot_dimension_numbers<[1], [0], [0], [1], [0, 0, 1, 1], [], []>} : vector<16x32xbf16>, vector<32x37xbf16>, vector<16x37xf32> -> vector<16x37xf32>
    %98 = vector.extract_strided_slice %97 {offsets = [0, 0], sizes = [16, 32], strides = [1, 1]} : vector<16x37xf32> to vector<16x32xf32>
    %99 = arith.addf %54, %98 : vector<16x32xf32>
    %c0_53 = arith.constant 0 : index
    %c0_54 = arith.constant 0 : index
    %100 = vector.load %arg23[%c0_53, %c0_54] : memref<1x32xf32, #tpu.memory_space<vmem>>, vector<1x32xf32>
    %101 = vector.broadcast %100 : vector<1x32xf32> to vector<16x32xf32>
    %102 = arith.addf %99, %101 : vector<16x32xf32>
    %103 = vector.extract_strided_slice %97 {offsets = [0, 32], sizes = [16, 5], strides = [1, 1]} : vector<16x37xf32> to vector<16x5xf32>
    %104 = arith.addf %55, %103 : vector<16x5xf32>
    %c0_55 = arith.constant 0 : index
    %c0_56 = arith.constant 0 : index
    %105 = vector.load %arg22[%c0_55, %c0_56] : memref<1x5xf32, #tpu.memory_space<vmem>>, vector<1x5xf32>
    %106 = vector.broadcast %105 : vector<1x5xf32> to vector<16x5xf32>
    %107 = arith.addf %104, %106 : vector<16x5xf32>
    %c0_57 = arith.constant 0 : index
    %c0_58 = arith.constant 0 : index
    %108 = vector.load %arg24[%c0_57, %c0_58] : memref<1x32xf32, #tpu.memory_space<vmem>>, vector<1x32xf32>
    %109 = vector.shape_cast %108 : vector<1x32xf32> to vector<1x1x32xf32>
    %110 = vector.shape_cast %10 : vector<8x32xf32> to vector<1x8x32xf32>
    %111 = vector.shape_cast %102 : vector<16x32xf32> to vector<16x1x32xf32>
    %112 = vector.broadcast %110 : vector<1x8x32xf32> to vector<16x8x32xf32>
    %113 = vector.broadcast %111 : vector<16x1x32xf32> to vector<16x8x32xf32>
    %114 = arith.addf %112, %113 : vector<16x8x32xf32>
    %115 = math.tanh %114 : vector<16x8x32xf32>
    %116 = vector.broadcast %109 : vector<1x1x32xf32> to vector<16x8x32xf32>
    %117 = arith.mulf %115, %116 : vector<16x8x32xf32>
    %cst_59 = arith.constant dense<0.000000e+00> : vector<16x8xf32>
    %118 = vector.multi_reduction <add>, %117, %cst_59 [2] : vector<16x8x32xf32> to vector<16x8xf32>
    %cst_60 = arith.constant 5.000000e-01 : f32
    %119 = vector.broadcast %cst_60 : f32 to vector<16x8xf32>
    %120 = arith.cmpf ogt, %6, %119 : vector<16x8xf32>
    %cst_61 = arith.constant -9.99999995E+11 : f32
    %121 = vector.broadcast %cst_61 : f32 to vector<16x8xf32>
    %122 = arith.select %120, %121, %118 : vector<16x8xi1>, vector<16x8xf32>
    %123 = vector.shape_cast %4 : vector<16x16x32xbf16> to vector<256x32xbf16>
    %c0_62 = arith.constant 0 : index
    %c0_63 = arith.constant 0 : index
    %124 = vector.load %arg17[%c0_62, %c0_63] : memref<32x32xbf16, #tpu.memory_space<vmem>>, vector<32x32xbf16>
    %cst_64 = arith.constant dense<0.000000e+00> : vector<256x32xf32>
    %125 = tpu.matmul %123, %124, %cst_64 {dimension_numbers = #tpu.dot_dimension_numbers<[1], [0], [0], [1], [0, 0, 1, 1], [], []>} : vector<256x32xbf16>, vector<32x32xbf16>, vector<256x32xf32> -> vector<256x32xf32>
    %126 = vector.shape_cast %125 : vector<256x32xf32> to vector<16x16x32xf32>
    %127 = vector.shape_cast %102 : vector<16x32xf32> to vector<16x1x32xf32>
    %128 = vector.broadcast %127 : vector<16x1x32xf32> to vector<16x16x32xf32>
    %129 = arith.addf %126, %128 : vector<16x16x32xf32>
    %130 = math.tanh %129 : vector<16x16x32xf32>
    %131 = vector.broadcast %109 : vector<1x1x32xf32> to vector<16x16x32xf32>
    %132 = arith.mulf %130, %131 : vector<16x16x32xf32>
    %cst_65 = arith.constant dense<0.000000e+00> : vector<16x16xf32>
    %133 = vector.multi_reduction <add>, %132, %cst_65 [2] : vector<16x16x32xf32> to vector<16x16xf32>
    %cst_66 = arith.constant 5.000000e-01 : f32
    %134 = vector.broadcast %cst_66 : f32 to vector<16x16xf32>
    %135 = arith.cmpf ogt, %7, %134 : vector<16x16xf32>
    %cst_67 = arith.constant -9.99999995E+11 : f32
    %136 = vector.broadcast %cst_67 : f32 to vector<16x16xf32>
    %137 = arith.select %135, %136, %133 : vector<16x16xi1>, vector<16x16xf32>
    %138 = arith.truncf %94 : vector<16x32xf32> to vector<16x32xbf16>
    %c0_68 = arith.constant 0 : index
    %c0_69 = arith.constant 0 : index
    %139 = vector.load %arg18[%c0_68, %c0_69] : memref<32x32xbf16, #tpu.memory_space<vmem>>, vector<32x32xbf16>
    %cst_70 = arith.constant dense<0.000000e+00> : vector<16x32xf32>
    %140 = tpu.matmul %138, %139, %cst_70 {dimension_numbers = #tpu.dot_dimension_numbers<[1], [0], [0], [1], [0, 0, 1, 1], [], []>} : vector<16x32xbf16>, vector<32x32xbf16>, vector<16x32xf32> -> vector<16x32xf32>
    %141 = vector.shape_cast %140 : vector<16x32xf32> to vector<16x1x32xf32>
    %142 = vector.shape_cast %9 : vector<6x32xf32> to vector<1x6x32xf32>
    %143 = vector.broadcast %141 : vector<16x1x32xf32> to vector<16x6x32xf32>
    %144 = vector.broadcast %142 : vector<1x6x32xf32> to vector<16x6x32xf32>
    %145 = arith.addf %143, %144 : vector<16x6x32xf32>
    %146 = math.tanh %145 : vector<16x6x32xf32>
    %c0_71 = arith.constant 0 : index
    %c0_72 = arith.constant 0 : index
    %147 = vector.load %arg25[%c0_71, %c0_72] : memref<1x32xf32, #tpu.memory_space<vmem>>, vector<1x32xf32>
    %148 = vector.shape_cast %147 : vector<1x32xf32> to vector<1x1x32xf32>
    %149 = vector.broadcast %148 : vector<1x1x32xf32> to vector<16x6x32xf32>
    %150 = arith.mulf %146, %149 : vector<16x6x32xf32>
    %cst_73 = arith.constant dense<0.000000e+00> : vector<16x6xf32>
    %151 = vector.multi_reduction <add>, %150, %cst_73 [2] : vector<16x6x32xf32> to vector<16x6xf32>
    %c0_74 = arith.constant 0 : index
    %c0_75 = arith.constant 0 : index
    %152 = vector.load %arg26[%c0_74, %c0_75] : memref<1x1xf32, #tpu.memory_space<vmem>>, vector<1x1xf32>
    %153 = vector.broadcast %152 : vector<1x1xf32> to vector<16x6xf32>
    %154 = arith.addf %151, %153 : vector<16x6xf32>
    %cst_76 = arith.constant dense<0xFF800000> : vector<16xf32>
    %155 = vector.multi_reduction <maximumf>, %154, %cst_76 [1] : vector<16x6xf32> to vector<16xf32>
    %156 = vector.shape_cast %155 : vector<16xf32> to vector<16x1xf32>
    %157 = vector.broadcast %156 : vector<16x1xf32> to vector<16x6xf32>
    %158 = arith.subf %154, %157 : vector<16x6xf32>
    %159 = math.exp %158 : vector<16x6xf32>
    %cst_77 = arith.constant dense<0.000000e+00> : vector<16xf32>
    %160 = vector.multi_reduction <add>, %159, %cst_77 [1] : vector<16x6xf32> to vector<16xf32>
    %161 = vector.shape_cast %160 : vector<16xf32> to vector<16x1xf32>
    %162 = tpu.reciprocal %161 {approx = true} : vector<16x1xf32> -> vector<16x1xf32>
    %163 = vector.broadcast %162 : vector<16x1xf32> to vector<16x6xf32>
    %164 = arith.mulf %159, %163 : vector<16x6xf32>
    %165 = vector.shape_cast %164 : vector<16x6xf32> to vector<16x6x1xf32>
    %166 = vector.shape_cast %8 : vector<6x32xf32> to vector<1x6x32xf32>
    %167 = vector.broadcast %165 : vector<16x6x1xf32> to vector<16x6x32xf32>
    %168 = vector.broadcast %166 : vector<1x6x32xf32> to vector<16x6x32xf32>
    %169 = arith.mulf %167, %168 : vector<16x6x32xf32>
    %cst_78 = arith.constant dense<0.000000e+00> : vector<16x32xf32>
    %170 = vector.multi_reduction <add>, %169, %cst_78 [1] : vector<16x6x32xf32> to vector<16x32xf32>
    %c0_79 = arith.constant 0 : index
    %c0_80 = arith.constant 0 : index
    %171 = vector.load %arg27[%c0_79, %c0_80] : memref<16x512xf32, #tpu.memory_space<vmem>>, vector<16x8xf32>
    tpu.vector_store %arg27[%c0_79, %c0_80], %122 {strides = array<i32>} : memref<16x512xf32, #tpu.memory_space<vmem>>, vector<16x8xf32>,
    %c0_81 = arith.constant 0 : index
    %c128 = arith.constant 128 : index
    %172 = vector.load %arg27[%c0_81, %c128] : memref<16x512xf32, #tpu.memory_space<vmem>>, vector<16x16xf32>
    tpu.vector_store %arg27[%c0_81, %c128], %137 {strides = array<i32>} : memref<16x512xf32, #tpu.memory_space<vmem>>, vector<16x16xf32>,
    %c0_82 = arith.constant 0 : index
    %c256 = arith.constant 256 : index
    %173 = vector.load %arg27[%c0_82, %c256] : memref<16x512xf32, #tpu.memory_space<vmem>>, vector<16x5xf32>
    tpu.vector_store %arg27[%c0_82, %c256], %107 {strides = array<i32>} : memref<16x512xf32, #tpu.memory_space<vmem>>, vector<16x5xf32>,
    %c0_83 = arith.constant 0 : index
    %c384 = arith.constant 384 : index
    %174 = vector.load %arg27[%c0_83, %c384] : memref<16x512xf32, #tpu.memory_space<vmem>>, vector<16x6xf32>
    tpu.vector_store %arg27[%c0_83, %c384], %154 {strides = array<i32>} : memref<16x512xf32, #tpu.memory_space<vmem>>, vector<16x6xf32>,
    %175 = arith.addf %46, %170 : vector<16x32xf32>
    %c0_84 = arith.constant 0 : index
    %c0_85 = arith.constant 0 : index
    %176 = vector.load %arg28[%c0_84, %c0_85] : memref<16x256xf32, #tpu.memory_space<vmem>>, vector<16x32xf32>
    tpu.vector_store %arg28[%c0_84, %c0_85], %175 {strides = array<i32>} : memref<16x256xf32, #tpu.memory_space<vmem>>, vector<16x32xf32>,
    %c0_86 = arith.constant 0 : index
    %c128_87 = arith.constant 128 : index
    %177 = vector.load %arg28[%c0_86, %c128_87] : memref<16x256xf32, #tpu.memory_space<vmem>>, vector<16x32xf32>
    tpu.vector_store %arg28[%c0_86, %c128_87], %90 {strides = array<i32>} : memref<16x256xf32, #tpu.memory_space<vmem>>, vector<16x32xf32>,
    return
  }
  func.func @transform_0(%arg0: i32) -> (i32, i32) {
    %c0_i32 = arith.constant 0 : i32
    %c0_i32_0 = arith.constant 0 : i32
    return %arg0, %c0_i32 : i32, i32
  }
  func.func @transform_1(%arg0: i32) -> (i32, i32) {
    %c0_i32 = arith.constant 0 : i32
    %c0_i32_0 = arith.constant 0 : i32
    return %arg0, %c0_i32 : i32, i32
  }
  func.func @transform_2(%arg0: i32) -> (i32, i32) {
    %c0_i32 = arith.constant 0 : i32
    %c0_i32_0 = arith.constant 0 : i32
    return %arg0, %c0_i32 : i32, i32
  }
  func.func @transform_3(%arg0: i32) -> (i32, i32, i32) {
    %c0_i32 = arith.constant 0 : i32
    %c0_i32_0 = arith.constant 0 : i32
    %c0_i32_1 = arith.constant 0 : i32
    return %arg0, %c0_i32, %c0_i32_0 : i32, i32, i32
  }
  func.func @transform_4(%arg0: i32) -> (i32, i32, i32) {
    %c0_i32 = arith.constant 0 : i32
    %c0_i32_0 = arith.constant 0 : i32
    %c0_i32_1 = arith.constant 0 : i32
    return %arg0, %c0_i32, %c0_i32_0 : i32, i32, i32
  }
  func.func @transform_5(%arg0: i32) -> (i32, i32) {
    %c0_i32 = arith.constant 0 : i32
    %c0_i32_0 = arith.constant 0 : i32
    return %arg0, %c0_i32 : i32, i32
  }
  func.func @transform_6(%arg0: i32) -> (i32, i32) {
    %c0_i32 = arith.constant 0 : i32
    %c0_i32_0 = arith.constant 0 : i32
    return %arg0, %c0_i32 : i32, i32
  }
  func.func @transform_7(%arg0: i32) -> (i32, i32) {
    %c0_i32 = arith.constant 0 : i32
    %c0_i32_0 = arith.constant 0 : i32
    return %arg0, %c0_i32 : i32, i32
  }
  func.func @transform_8(%arg0: i32) -> (i32, i32) {
    %c0_i32 = arith.constant 0 : i32
    %c0_i32_0 = arith.constant 0 : i32
    %c0_i32_1 = arith.constant 0 : i32
    return %c0_i32, %c0_i32_0 : i32, i32
  }
  func.func @transform_9(%arg0: i32) -> (i32, i32) {
    %c0_i32 = arith.constant 0 : i32
    %c0_i32_0 = arith.constant 0 : i32
    %c0_i32_1 = arith.constant 0 : i32
    return %c0_i32, %c0_i32_0 : i32, i32
  }
  func.func @transform_10(%arg0: i32) -> (i32, i32) {
    %c0_i32 = arith.constant 0 : i32
    %c0_i32_0 = arith.constant 0 : i32
    %c0_i32_1 = arith.constant 0 : i32
    return %c0_i32, %c0_i32_0 : i32, i32
  }
  func.func @transform_11(%arg0: i32) -> (i32, i32) {
    %c0_i32 = arith.constant 0 : i32
    %c0_i32_0 = arith.constant 0 : i32
    %c0_i32_1 = arith.constant 0 : i32
    return %c0_i32, %c0_i32_0 : i32, i32
  }
  func.func @transform_12(%arg0: i32) -> (i32, i32) {
    %c0_i32 = arith.constant 0 : i32
    %c0_i32_0 = arith.constant 0 : i32
    %c0_i32_1 = arith.constant 0 : i32
    return %c0_i32, %c0_i32_0 : i32, i32
  }
  func.func @transform_13(%arg0: i32) -> (i32, i32) {
    %c0_i32 = arith.constant 0 : i32
    %c0_i32_0 = arith.constant 0 : i32
    %c0_i32_1 = arith.constant 0 : i32
    return %c0_i32, %c0_i32_0 : i32, i32
  }
  func.func @transform_14(%arg0: i32) -> (i32, i32) {
    %c0_i32 = arith.constant 0 : i32
    %c0_i32_0 = arith.constant 0 : i32
    %c0_i32_1 = arith.constant 0 : i32
    return %c0_i32, %c0_i32_0 : i32, i32
  }
  func.func @transform_15(%arg0: i32) -> (i32, i32) {
    %c0_i32 = arith.constant 0 : i32
    %c0_i32_0 = arith.constant 0 : i32
    %c0_i32_1 = arith.constant 0 : i32
    return %c0_i32, %c0_i32_0 : i32, i32
  }
  func.func @transform_16(%arg0: i32) -> (i32, i32) {
    %c0_i32 = arith.constant 0 : i32
    %c0_i32_0 = arith.constant 0 : i32
    %c0_i32_1 = arith.constant 0 : i32
    return %c0_i32, %c0_i32_0 : i32, i32
  }
  func.func @transform_17(%arg0: i32) -> (i32, i32) {
    %c0_i32 = arith.constant 0 : i32
    %c0_i32_0 = arith.constant 0 : i32
    %c0_i32_1 = arith.constant 0 : i32
    return %c0_i32, %c0_i32_0 : i32, i32
  }
  func.func @transform_18(%arg0: i32) -> (i32, i32) {
    %c0_i32 = arith.constant 0 : i32
    %c0_i32_0 = arith.constant 0 : i32
    %c0_i32_1 = arith.constant 0 : i32
    return %c0_i32, %c0_i32_0 : i32, i32
  }
  func.func @transform_19(%arg0: i32) -> (i32, i32) {
    %c0_i32 = arith.constant 0 : i32
    %c0_i32_0 = arith.constant 0 : i32
    %c0_i32_1 = arith.constant 0 : i32
    return %c0_i32, %c0_i32_0 : i32, i32
  }
  func.func @transform_20(%arg0: i32) -> (i32, i32) {
    %c0_i32 = arith.constant 0 : i32
    %c0_i32_0 = arith.constant 0 : i32
    %c0_i32_1 = arith.constant 0 : i32
    return %c0_i32, %c0_i32_0 : i32, i32
  }
  func.func @transform_21(%arg0: i32) -> (i32, i32) {
    %c0_i32 = arith.constant 0 : i32
    %c0_i32_0 = arith.constant 0 : i32
    %c0_i32_1 = arith.constant 0 : i32
    return %c0_i32, %c0_i32_0 : i32, i32
  }
  func.func @transform_22(%arg0: i32) -> (i32, i32) {
    %c0_i32 = arith.constant 0 : i32
    %c0_i32_0 = arith.constant 0 : i32
    %c0_i32_1 = arith.constant 0 : i32
    return %c0_i32, %c0_i32_0 : i32, i32
  }
  func.func @transform_23(%arg0: i32) -> (i32, i32) {
    %c0_i32 = arith.constant 0 : i32
    %c0_i32_0 = arith.constant 0 : i32
    %c0_i32_1 = arith.constant 0 : i32
    return %c0_i32, %c0_i32_0 : i32, i32
  }
  func.func @transform_24(%arg0: i32) -> (i32, i32) {
    %c0_i32 = arith.constant 0 : i32
    %c0_i32_0 = arith.constant 0 : i32
    %c0_i32_1 = arith.constant 0 : i32
    return %c0_i32, %c0_i32_0 : i32, i32
  }
  func.func @transform_25(%arg0: i32) -> (i32, i32) {
    %c0_i32 = arith.constant 0 : i32
    %c0_i32_0 = arith.constant 0 : i32
    %c0_i32_1 = arith.constant 0 : i32
    return %c0_i32, %c0_i32_0 : i32, i32
  }
  func.func @transform_26(%arg0: i32) -> (i32, i32) {
    %c0_i32 = arith.constant 0 : i32
    %c0_i32_0 = arith.constant 0 : i32
    return %arg0, %c0_i32 : i32, i32
  }
  func.func @transform_27(%arg0: i32) -> (i32, i32) {
    %c0_i32 = arith.constant 0 : i32
    %c0_i32_0 = arith.constant 0 : i32
    return %arg0, %c0_i32 : i32, i32
  }
}

</mosaic_0001>

<llo_original>
// kernel: tpu_custom_call.1
$region0: #{tpu_custom_call.1}
  #allocation0 [shape = 'u32[]', space=smem, size = 0x4, offset = 0x4, fixed_abs, tag = 'smem constant byte address 0x4 - core index']
  #allocation1 [shape = 'u32[144,128]{1,0:T(1,128)}', space=vmem, size = 0x12000, scoped, tag = 'internal scratch']
  #allocation2 [shape = 'f32[1,1]{1,0:T(1,128)S(1)}', space=vmem, size = 0x200, scoped, tag = 'scoped memory for tpu_custom_call.1']
  %s0 = inlined_call_operand.hbm [shape: f32[16,32], index: 0, kind: input, shape index: {}]
  %s1 = inlined_call_operand.hbm [shape: f32[16,32], index: 1, kind: input, shape index: {}]
  %s2 = inlined_call_operand.hbm [shape: f32[16,1], index: 2, kind: input, shape index: {}]
  %s3 = inlined_call_operand.hbm [shape: bf16[16,16,32], index: 3, kind: input, shape index: {}]
  %s4 = inlined_call_operand.hbm [shape: bf16[16,16,32], index: 4, kind: input, shape index: {}]
  %s5 = inlined_call_operand.hbm [shape: f32[16,16], index: 5, kind: input, shape index: {}]
  %s6 = inlined_call_operand.hbm [shape: f32[16,8], index: 6, kind: input, shape index: {}]
  %s7 = inlined_call_operand.hbm [shape: f32[16,16], index: 7, kind: input, shape index: {}]
  %s8 = inlined_call_operand.hbm [shape: f32[6,32], index: 8, kind: input, shape index: {}]
  %s9 = inlined_call_operand.hbm [shape: f32[6,32], index: 9, kind: input, shape index: {}]
  %s10 = inlined_call_operand.hbm [shape: f32[8,32], index: 10, kind: input, shape index: {}]
  %s11 = inlined_call_operand.hbm [shape: bf16[32,128], index: 11, kind: input, shape index: {}]
  %s12 = inlined_call_operand.hbm [shape: bf16[32,64], index: 12, kind: input, shape index: {}]
  %s13 = inlined_call_operand.hbm [shape: bf16[32,101], index: 13, kind: input, shape index: {}]
  %s14 = inlined_call_operand.hbm [shape: bf16[32,37], index: 14, kind: input, shape index: {}]
  %s15 = inlined_call_operand.hbm [shape: bf16[32,64], index: 15, kind: input, shape index: {}]
  %s16 = inlined_call_operand.hbm [shape: bf16[32,32], index: 16, kind: input, shape index: {}]
  %s17 = inlined_call_operand.hbm [shape: bf16[32,32], index: 17, kind: input, shape index: {}]
  %s18 = inlined_call_operand.hbm [shape: bf16[64,2], index: 18, kind: input, shape index: {}]
  %s19 = inlined_call_operand.hbm [shape: f32[1,128], index: 19, kind: input, shape index: {}]
  %s20 = inlined_call_operand.hbm [shape: f32[1,64], index: 20, kind: input, shape index: {}]
  %s21 = inlined_call_operand.hbm [shape: f32[1,5], index: 21, kind: input, shape index: {}]
  %s22 = inlined_call_operand.hbm [shape: f32[1,32], index: 22, kind: input, shape index: {}]
  %s23 = inlined_call_operand.hbm [shape: f32[1,32], index: 23, kind: input, shape index: {}]
  %s24 = inlined_call_operand.hbm [shape: f32[1,32], index: 24, kind: input, shape index: {}]
  %s25 = inlined_call_operand.<no memory space> [shape: f32[1,1], index: 25, kind: input, shape index: {}]
  %s26 = inlined_call_operand.hbm [shape: f32[16,512], index: 26, kind: output, shape index: {0}]
  %s27 = inlined_call_operand.hbm [shape: f32[16,256], index: 27, kind: output, shape index: {1}]
  %28 = xla_tuple %s26, %s27
  %s29 = sld [smem:[#allocation0]]
  $region222: #{tpu_custom_call.1} parent=0
    _
  %s31 = ssub.s32 1, %s29
  %s32 = scalar_select 0, %s31, %s29
  %v33 = vstv %s25
  %34 = vst [vmem:[#allocation2] sm:$0x1] %v33
  $region1: #{tpu_custom_call.1} parent=0
    #allocation3 [shape = 'u8[8192]{0}', space=vmem, size = 0x2000, scoped, tag = 'input window, operand 0, single buffered']
    #allocation4 [shape = 's32[1]{0}', space=sflag, size = 0x4, scoped, tag = 'scoped memory for tpu_custom_call.1']
    #allocation5 [shape = 's32[1]{0}', space=sflag, size = 0x4, scoped, tag = 'scoped memory for tpu_custom_call.1']
    #allocation6 [shape = 'u8[8192]{0}', space=vmem, size = 0x2000, scoped, tag = 'input window, operand 1, single buffered']
    #allocation7 [shape = 's32[1]{0}', space=sflag, size = 0x4, scoped, tag = 'scoped memory for tpu_custom_call.1']
    #allocation8 [shape = 'u8[8192]{0}', space=vmem, size = 0x2000, scoped, tag = 'input window, operand 2, single buffered']
    #allocation9 [shape = 'u8[65536]{0}', space=vmem, size = 0x10000, scoped, tag = 'input window, operand 3, single buffered']
    #allocation10 [shape = 's32[1]{0}', space=sflag, size = 0x4, scoped, tag = 'scoped memory for tpu_custom_call.1']
    #allocation11 [shape = 'u8[65536]{0}', space=vmem, size = 0x10000, scoped, tag = 'input window, operand 4, single buffered']
    #allocation12 [shape = 'u8[8192]{0}', space=vmem, size = 0x2000, scoped, tag = 'input window, operand 5, single buffered']
    #allocation13 [shape = 's32[1]{0}', space=sflag, size = 0x4, scoped, tag = 'scoped memory for tpu_custom_call.1']
    #allocation14 [shape = 'u8[8192]{0}', space=vmem, size = 0x2000, scoped, tag = 'input window, operand 6, single buffered']
    #allocation15 [shape = 'u8[8192]{0}', space=vmem, size = 0x2000, scoped, tag = 'input window, operand 7, single buffered']
    #allocation16 [shape = 's32[1]{0}', space=sflag, size = 0x4, scoped, tag = 'scoped memory for tpu_custom_call.1']
    #allocation17 [shape = 'u8[4096]{0}', space=vmem, size = 0x1000, scoped, tag = 'input window, operand 8, single buffered']
    #allocation18 [shape = 'u8[4096]{0}', space=vmem, size = 0x1000, scoped, tag = 'input window, operand 9, single buffered']
    #allocation19 [shape = 's32[1]{0}', space=sflag, size = 0x4, scoped, tag = 'scoped memory for tpu_custom_call.1']
    #allocation20 [shape = 'u8[4096]{0}', space=vmem, size = 0x1000, scoped, tag = 'input window, operand 10, single buffered']
    #allocation21 [shape = 'u8[8192]{0}', space=vmem, size = 0x2000, scoped, tag = 'input window, operand 11, single buffered']
    #allocation22 [shape = 's32[1]{0}', space=sflag, size = 0x4, scoped, tag = 'scoped memory for tpu_custom_call.1']
    #allocation23 [shape = 'u8[8192]{0}', space=vmem, size = 0x2000, scoped, tag = 'input window, operand 12, single buffered']
    #allocation24 [shape = 'u8[8192]{0}', space=vmem, size = 0x2000, scoped, tag = 'input window, operand 13, single buffered']
    #allocation25 [shape = 's32[1]{0}', space=sflag, size = 0x4, scoped, tag = 'scoped memory for tpu_custom_call.1']
    #allocation26 [shape = 'u8[8192]{0}', space=vmem, size = 0x2000, scoped, tag = 'input window, operand 14, single buffered']
    #allocation27 [shape = 'u8[8192]{0}', space=vmem, size = 0x2000, scoped, tag = 'input window, operand 15, single buffered']
    #allocation28 [shape = 's32[1]{0}', space=sflag, size = 0x4, scoped, tag = 'scoped memory for tpu_custom_call.1']
    #allocation29 [shape = 'u8[8192]{0}', space=vmem, size = 0x2000, scoped, tag = 'input window, operand 16, single buffered']
    #allocation30 [shape = 'u8[8192]{0}', space=vmem, size = 0x2000, scoped, tag = 'input window, operand 17, single buffered']
    #allocation31 [shape = 's32[1]{0}', space=sflag, size = 0x4, scoped, tag = 'scoped memory for tpu_custom_call.1']
    #allocation32 [shape = 'u8[16384]{0}', space=vmem, size = 0x4000, scoped, tag = 'input window, operand 18, single buffered']
    #allocation33 [shape = 'u8[512]{0}', space=vmem, size = 0x400, scoped, tag = 'input window, operand 19, single buffered']
    #allocation34 [shape = 's32[1]{0}', space=sflag, size = 0x4, scoped, tag = 'scoped memory for tpu_custom_call.1']
    #allocation35 [shape = 'u8[512]{0}', space=vmem, size = 0x400, scoped, tag = 'input window, operand 20, single buffered']
    #allocation36 [shape = 'u8[512]{0}', space=vmem, size = 0x400, scoped, tag = 'input window, operand 21, single buffered']
    #allocation37 [shape = 's32[1]{0}', space=sflag, size = 0x4, scoped, tag = 'scoped memory for tpu_custom_call.1']
    #allocation38 [shape = 'u8[512]{0}', space=vmem, size = 0x400, scoped, tag = 'input window, operand 22, single buffered']
    #allocation39 [shape = 'u8[512]{0}', space=vmem, size = 0x400, scoped, tag = 'input window, operand 23, single buffered']
    #allocation40 [shape = 's32[1]{0}', space=sflag, size = 0x4, scoped, tag = 'scoped memory for tpu_custom_call.1']
    #allocation41 [shape = 'u8[512]{0}', space=vmem, size = 0x400, scoped, tag = 'input window, operand 24, single buffered']
    #allocation42 [shape = 'u8[32768]{0}', space=vmem, size = 0x8000, scoped, tag = 'output window, operand 0, single buffered']
    #allocation43 [shape = 'u8[16384]{0}', space=vmem, size = 0x4000, scoped, tag = 'output window, operand 1, single buffered']
    #allocation44 [shape = 's32[1]{0}', space=sflag, size = 0x4, scoped, tag = 'scoped memory for tpu_custom_call.1']
    %35 = vsyncpa [#allocation4], 0
    %36 = vsyncpa [#allocation7], 0
    %37 = vsyncpa [#allocation10], 0
    %38 = vsyncpa [#allocation13], 0
    %39 = vsyncpa [#allocation16], 0
    %40 = vsyncpa [#allocation19], 0
    %41 = vsyncpa [#allocation22], 0
    %42 = vsyncpa [#allocation25], 0
    %43 = vsyncpa [#allocation28], 0
    %44 = vsyncpa [#allocation31], 0
    %45 = vsyncpa [#allocation34], 0
    %46 = vsyncpa [#allocation37], 0
    %47 = vsyncpa [#allocation40], 0
    %48 = vsyncpa [#allocation5], 0
    %49 = vsyncpa [#allocation44], 0
    // Predicated region
    $region2: #{tpu_custom_call.1} parent=1 // pred_check
      _
    $region3: #{tpu_custom_call.1} parent=1 // pred_check_branch
      %51 = sbr.rel (0) target = $region5
    $region4: #{tpu_custom_call.1} parent=1 // pred_region
      %s53 = ssub.s32 256, 256
      %54 = vsyncadd [#allocation4], %s53
      %s55 = sshll.u32 [#allocation3], 4
      %s56 = int_to_ptr.vmem [resolvable:$true] %s55
      %61 = dma.hbm_to_vmem [thread:$0]  %s0, 256, %s56, [#allocation4], 128, 128, 8
    $region5: #{tpu_custom_call.1} parent=1 // pred_fallthru
      _
    // Predicated region
    $region6: #{tpu_custom_call.1} parent=1 // pred_check
      _
    $region7: #{tpu_custom_call.1} parent=1 // pred_check_branch
      %63 = sbr.rel (0) target = $region9
    $region8: #{tpu_custom_call.1} parent=1 // pred_region
      %s65 = ssub.s32 256, 256
      %66 = vsyncadd [#allocation7], %s65
      %s67 = sshll.u32 [#allocation6], 4
      %s68 = int_to_ptr.vmem [resolvable:$true] %s67
      %73 = dma.hbm_to_vmem [thread:$0]  %s1, 256, %s68, [#allocation7], 128, 128, 8
    $region9: #{tpu_custom_call.1} parent=1 // pred_fallthru
      _
    // Predicated region
    $region10: #{tpu_custom_call.1} parent=1 // pred_check
      _
    $region11: #{tpu_custom_call.1} parent=1 // pred_check_branch
      %75 = sbr.rel (0) target = $region13
    $region12: #{tpu_custom_call.1} parent=1 // pred_region
      %s77 = ssub.s32 256, 256
      %78 = vsyncadd [#allocation7], %s77
      %s79 = sshll.u32 [#allocation8], 4
      %s80 = int_to_ptr.vmem [resolvable:$true] %s79
      %85 = dma.hbm_to_vmem [thread:$0]  %s2, 256, %s80, [#allocation7], 128, 128, 8
    $region13: #{tpu_custom_call.1} parent=1 // pred_fallthru
      _
    // Predicated region
    $region14: #{tpu_custom_call.1} parent=1 // pred_check
      _
    $region15: #{tpu_custom_call.1} parent=1 // pred_check_branch
      %87 = sbr.rel (0) target = $region17
    $region16: #{tpu_custom_call.1} parent=1 // pred_region
      %s89 = ssub.s32 2048, 2048
      %90 = vsyncadd [#allocation10], %s89
      %s91 = sshll.u32 [#allocation9], 4
      %s92 = int_to_ptr.vmem [resolvable:$true] %s91
      %97 = dma.hbm_to_vmem [thread:$0]  %s3, 2048, %s92, [#allocation10], 64, 64, 4
    $region17: #{tpu_custom_call.1} parent=1 // pred_fallthru
      _
    // Predicated region
    $region18: #{tpu_custom_call.1} parent=1 // pred_check
      _
    $region19: #{tpu_custom_call.1} parent=1 // pred_check_branch
      %99 = sbr.rel (0) target = $region21
    $region20: #{tpu_custom_call.1} parent=1 // pred_region
      %s101 = ssub.s32 2048, 2048
      %102 = vsyncadd [#allocation10], %s101
      %s103 = sshll.u32 [#allocation11], 4
      %s104 = int_to_ptr.vmem [resolvable:$true] %s103
      %109 = dma.hbm_to_vmem [thread:$0]  %s4, 2048, %s104, [#allocation10], 64, 64, 4
    $region21: #{tpu_custom_call.1} parent=1 // pred_fallthru
      _
    // Predicated region
    $region22: #{tpu_custom_call.1} parent=1 // pred_check
      _
    $region23: #{tpu_custom_call.1} parent=1 // pred_check_branch
      %111 = sbr.rel (0) target = $region25
    $region24: #{tpu_custom_call.1} parent=1 // pred_region
      %s113 = ssub.s32 256, 256
      %114 = vsyncadd [#allocation13], %s113
      %s115 = sshll.u32 [#allocation12], 4
      %s116 = int_to_ptr.vmem [resolvable:$true] %s115
      %121 = dma.hbm_to_vmem [thread:$0]  %s5, 256, %s116, [#allocation13], 128, 128, 8
    $region25: #{tpu_custom_call.1} parent=1 // pred_fallthru
      _
    // Predicated region
    $region26: #{tpu_custom_call.1} parent=1 // pred_check
      _
    $region27: #{tpu_custom_call.1} parent=1 // pred_check_branch
      %123 = sbr.rel (0) target = $region29
    $region28: #{tpu_custom_call.1} parent=1 // pred_region
      %s125 = ssub.s32 256, 256
      %126 = vsyncadd [#allocation13], %s125
      %s127 = sshll.u32 [#allocation14], 4
      %s128 = int_to_ptr.vmem [resolvable:$true] %s127
      %133 = dma.hbm_to_vmem [thread:$0]  %s6, 256, %s128, [#allocation13], 128, 128, 8
    $region29: #{tpu_custom_call.1} parent=1 // pred_fallthru
      _
    // Predicated region
    $region30: #{tpu_custom_call.1} parent=1 // pred_check
      _
    $region31: #{tpu_custom_call.1} parent=1 // pred_check_branch
      %135 = sbr.rel (0) target = $region33
    $region32: #{tpu_custom_call.1} parent=1 // pred_region
      %s137 = ssub.s32 256, 256
      %138 = vsyncadd [#allocation16], %s137
      %s139 = sshll.u32 [#allocation15], 4
      %s140 = int_to_ptr.vmem [resolvable:$true] %s139
      %145 = dma.hbm_to_vmem [thread:$0]  %s7, 256, %s140, [#allocation16], 128, 128, 8
    $region33: #{tpu_custom_call.1} parent=1 // pred_fallthru
      _
    // Predicated region
    $region34: #{tpu_custom_call.1} parent=1 // pred_check
      _
    $region35: #{tpu_custom_call.1} parent=1 // pred_check_branch
      %147 = sbr.rel (0) target = $region37
    $region36: #{tpu_custom_call.1} parent=1 // pred_region
      %s149 = ssub.s32 128, 128
      %150 = vsyncadd [#allocation16], %s149
      %s152 = sshll.u32 [#allocation17], 4
      %s153 = int_to_ptr.vmem [resolvable:$true] %s152
      %155 = dma.hbm_to_vmem [thread:$0]  %s8, 128, %s153, [#allocation16]
    $region37: #{tpu_custom_call.1} parent=1 // pred_fallthru
      _
    // Predicated region
    $region38: #{tpu_custom_call.1} parent=1 // pred_check
      _
    $region39: #{tpu_custom_call.1} parent=1 // pred_check_branch
      %157 = sbr.rel (0) target = $region41
    $region40: #{tpu_custom_call.1} parent=1 // pred_region
      %s159 = ssub.s32 128, 128
      %160 = vsyncadd [#allocation19], %s159
      %s162 = sshll.u32 [#allocation18], 4
      %s163 = int_to_ptr.vmem [resolvable:$true] %s162
      %165 = dma.hbm_to_vmem [thread:$0]  %s9, 128, %s163, [#allocation19]
    $region41: #{tpu_custom_call.1} parent=1 // pred_fallthru
      _
    // Predicated region
    $region42: #{tpu_custom_call.1} parent=1 // pred_check
      _
    $region43: #{tpu_custom_call.1} parent=1 // pred_check_branch
      %167 = sbr.rel (0) target = $region45
    $region44: #{tpu_custom_call.1} parent=1 // pred_region
      %s169 = ssub.s32 128, 128
      %170 = vsyncadd [#allocation19], %s169
      %s172 = sshll.u32 [#allocation20], 4
      %s173 = int_to_ptr.vmem [resolvable:$true] %s172
      %175 = dma.hbm_to_vmem [thread:$0]  %s10, 128, %s173, [#allocation19]
    $region45: #{tpu_custom_call.1} parent=1 // pred_fallthru
      _
    // Predicated region
    $region46: #{tpu_custom_call.1} parent=1 // pred_check
      _
    $region47: #{tpu_custom_call.1} parent=1 // pred_check_branch
      %177 = sbr.rel (0) target = $region49
    $region48: #{tpu_custom_call.1} parent=1 // pred_region
      %s179 = ssub.s32 256, 256
      %180 = vsyncadd [#allocation22], %s179
      %s181 = sshll.u32 [#allocation21], 4
      %s182 = int_to_ptr.vmem [resolvable:$true] %s181
      %187 = dma.hbm_to_vmem [thread:$0]  %s11, 256, %s182, [#allocation22], 64, 64, 4
    $region49: #{tpu_custom_call.1} parent=1 // pred_fallthru
      _
    // Predicated region
    $region50: #{tpu_custom_call.1} parent=1 // pred_check
      _
    $region51: #{tpu_custom_call.1} parent=1 // pred_check_branch
      %189 = sbr.rel (0) target = $region53
    $region52: #{tpu_custom_call.1} parent=1 // pred_region
      %s191 = ssub.s32 256, 256
      %192 = vsyncadd [#allocation22], %s191
      %s193 = sshll.u32 [#allocation23], 4
      %s194 = int_to_ptr.vmem [resolvable:$true] %s193
      %199 = dma.hbm_to_vmem [thread:$0]  %s12, 256, %s194, [#allocation22], 64, 64, 4
    $region53: #{tpu_custom_call.1} parent=1 // pred_fallthru
      _
    // Predicated region
    $region54: #{tpu_custom_call.1} parent=1 // pred_check
      _
    $region55: #{tpu_custom_call.1} parent=1 // pred_check_branch
      %201 = sbr.rel (0) target = $region57
    $region56: #{tpu_custom_call.1} parent=1 // pred_region
      %s203 = ssub.s32 256, 256
      %204 = vsyncadd [#allocation25], %s203
      %s205 = sshll.u32 [#allocation24], 4
      %s206 = int_to_ptr.vmem [resolvable:$true] %s205
      %211 = dma.hbm_to_vmem [thread:$0]  %s13, 256, %s206, [#allocation25], 64, 64, 4
    $region57: #{tpu_custom_call.1} parent=1 // pred_fallthru
      _
    // Predicated region
    $region58: #{tpu_custom_call.1} parent=1 // pred_check
      _
    $region59: #{tpu_custom_call.1} parent=1 // pred_check_branch
      %213 = sbr.rel (0) target = $region61
    $region60: #{tpu_custom_call.1} parent=1 // pred_region
      %s215 = ssub.s32 256, 256
      %216 = vsyncadd [#allocation25], %s215
      %s217 = sshll.u32 [#allocation26], 4
      %s218 = int_to_ptr.vmem [resolvable:$true] %s217
      %223 = dma.hbm_to_vmem [thread:$0]  %s14, 256, %s218, [#allocation25], 64, 64, 4
    $region61: #{tpu_custom_call.1} parent=1 // pred_fallthru
      _
    // Predicated region
    $region62: #{tpu_custom_call.1} parent=1 // pred_check
      _
    $region63: #{tpu_custom_call.1} parent=1 // pred_check_branch
      %225 = sbr.rel (0) target = $region65
    $region64: #{tpu_custom_call.1} parent=1 // pred_region
      %s227 = ssub.s32 256, 256
      %228 = vsyncadd [#allocation28], %s227
      %s229 = sshll.u32 [#allocation27], 4
      %s230 = int_to_ptr.vmem [resolvable:$true] %s229
      %235 = dma.hbm_to_vmem [thread:$0]  %s15, 256, %s230, [#allocation28], 64, 64, 4
    $region65: #{tpu_custom_call.1} parent=1 // pred_fallthru
      _
    // Predicated region
    $region66: #{tpu_custom_call.1} parent=1 // pred_check
      _
    $region67: #{tpu_custom_call.1} parent=1 // pred_check_branch
      %237 = sbr.rel (0) target = $region69
    $region68: #{tpu_custom_call.1} parent=1 // pred_region
      %s239 = ssub.s32 256, 256
      %240 = vsyncadd [#allocation28], %s239
      %s241 = sshll.u32 [#allocation29], 4
      %s242 = int_to_ptr.vmem [resolvable:$true] %s241
      %247 = dma.hbm_to_vmem [thread:$0]  %s16, 256, %s242, [#allocation28], 64, 64, 4
    $region69: #{tpu_custom_call.1} parent=1 // pred_fallthru
      _
    // Predicated region
    $region70: #{tpu_custom_call.1} parent=1 // pred_check
      _
    $region71: #{tpu_custom_call.1} parent=1 // pred_check_branch
      %249 = sbr.rel (0) target = $region73
    $region72: #{tpu_custom_call.1} parent=1 // pred_region
      %s251 = ssub.s32 256, 256
      %252 = vsyncadd [#allocation31], %s251
      %s253 = sshll.u32 [#allocation30], 4
      %s254 = int_to_ptr.vmem [resolvable:$true] %s253
      %259 = dma.hbm_to_vmem [thread:$0]  %s17, 256, %s254, [#allocation31], 64, 64, 4
    $region73: #{tpu_custom_call.1} parent=1 // pred_fallthru
      _
    // Predicated region
    $region74: #{tpu_custom_call.1} parent=1 // pred_check
      _
    $region75: #{tpu_custom_call.1} parent=1 // pred_check_branch
      %261 = sbr.rel (0) target = $region77
    $region76: #{tpu_custom_call.1} parent=1 // pred_region
      %s263 = ssub.s32 512, 512
      %264 = vsyncadd [#allocation31], %s263
      %s265 = sshll.u32 [#allocation32], 4
      %s266 = int_to_ptr.vmem [resolvable:$true] %s265
      %271 = dma.hbm_to_vmem [thread:$0]  %s18, 512, %s266, [#allocation31], 64, 64, 4
    $region77: #{tpu_custom_call.1} parent=1 // pred_fallthru
      _
    // Predicated region
    $region78: #{tpu_custom_call.1} parent=1 // pred_check
      _
    $region79: #{tpu_custom_call.1} parent=1 // pred_check_branch
      %273 = sbr.rel (0) target = $region81
    $region80: #{tpu_custom_call.1} parent=1 // pred_region
      %s275 = ssub.s32 16, 16
      %276 = vsyncadd [#allocation34], %s275
      %s278 = sshll.u32 [#allocation33], 4
      %s279 = int_to_ptr.vmem [resolvable:$true] %s278
      %281 = dma.hbm_to_vmem [thread:$0]  %s19, 16, %s279, [#allocation34]
    $region81: #{tpu_custom_call.1} parent=1 // pred_fallthru
      _
    // Predicated region
    $region82: #{tpu_custom_call.1} parent=1 // pred_check
      _
    $region83: #{tpu_custom_call.1} parent=1 // pred_check_branch
      %283 = sbr.rel (0) target = $region85
    $region84: #{tpu_custom_call.1} parent=1 // pred_region
      %s285 = ssub.s32 16, 16
      %286 = vsyncadd [#allocation34], %s285
      %s288 = sshll.u32 [#allocation35], 4
      %s289 = int_to_ptr.vmem [resolvable:$true] %s288
      %291 = dma.hbm_to_vmem [thread:$0]  %s20, 16, %s289, [#allocation34]
    $region85: #{tpu_custom_call.1} parent=1 // pred_fallthru
      _
    // Predicated region
    $region86: #{tpu_custom_call.1} parent=1 // pred_check
      _
    $region87: #{tpu_custom_call.1} parent=1 // pred_check_branch
      %293 = sbr.rel (0) target = $region89
    $region88: #{tpu_custom_call.1} parent=1 // pred_region
      %s295 = ssub.s32 16, 16
      %296 = vsyncadd [#allocation37], %s295
      %s298 = sshll.u32 [#allocation36], 4
      %s299 = int_to_ptr.vmem [resolvable:$true] %s298
      %301 = dma.hbm_to_vmem [thread:$0]  %s21, 16, %s299, [#allocation37]
    $region89: #{tpu_custom_call.1} parent=1 // pred_fallthru
      _
    // Predicated region
    $region90: #{tpu_custom_call.1} parent=1 // pred_check
      _
    $region91: #{tpu_custom_call.1} parent=1 // pred_check_branch
      %303 = sbr.rel (0) target = $region93
    $region92: #{tpu_custom_call.1} parent=1 // pred_region
      %s305 = ssub.s32 16, 16
      %306 = vsyncadd [#allocation37], %s305
      %s308 = sshll.u32 [#allocation38], 4
      %s309 = int_to_ptr.vmem [resolvable:$true] %s308
      %311 = dma.hbm_to_vmem [thread:$0]  %s22, 16, %s309, [#allocation37]
    $region93: #{tpu_custom_call.1} parent=1 // pred_fallthru
      _
    // Predicated region
    $region94: #{tpu_custom_call.1} parent=1 // pred_check
      _
    $region95: #{tpu_custom_call.1} parent=1 // pred_check_branch
      %313 = sbr.rel (0) target = $region97
    $region96: #{tpu_custom_call.1} parent=1 // pred_region
      %s315 = ssub.s32 16, 16
      %316 = vsyncadd [#allocation40], %s315
      %s318 = sshll.u32 [#allocation39], 4
      %s319 = int_to_ptr.vmem [resolvable:$true] %s318
      %321 = dma.hbm_to_vmem [thread:$0]  %s23, 16, %s319, [#allocation40]
    $region97: #{tpu_custom_call.1} parent=1 // pred_fallthru
      _
    // Predicated region
    $region98: #{tpu_custom_call.1} parent=1 // pred_check
      _
    $region99: #{tpu_custom_call.1} parent=1 // pred_check_branch
      %323 = sbr.rel (0) target = $region101
    $region100: #{tpu_custom_call.1} parent=1 // pred_region
      %s325 = ssub.s32 16, 16
      %326 = vsyncadd [#allocation40], %s325
      %s328 = sshll.u32 [#allocation41], 4
      %s329 = int_to_ptr.vmem [resolvable:$true] %s328
      %331 = dma.hbm_to_vmem [thread:$0]  %s24, 16, %s329, [#allocation40]
    $region101: #{tpu_custom_call.1} parent=1 // pred_fallthru
      _
    // Predicated region
    $region102: #{tpu_custom_call.1} parent=1 // pred_check
      _
    $region103: #{tpu_custom_call.1} parent=1 // pred_check_branch
      %333 = sbr.rel (0) target = $region105
    $region104: #{tpu_custom_call.1} parent=1 // pred_region
      _
    $region105: #{tpu_custom_call.1} parent=1 // pred_fallthru
      _
    // Predicated region
    $region106: #{tpu_custom_call.1} parent=1 // pred_check
      _
    $region107: #{tpu_custom_call.1} parent=1 // pred_check_branch
      %335 = sbr.rel (0) target = $region109
    $region108: #{tpu_custom_call.1} parent=1 // pred_region
      %336 = dma.done [#allocation4], 256
    $region109: #{tpu_custom_call.1} parent=1 // pred_fallthru
      _
    // Predicated region
    $region110: #{tpu_custom_call.1} parent=1 // pred_check
      _
    $region111: #{tpu_custom_call.1} parent=1 // pred_check_branch
      %338 = sbr.rel (0) target = $region113
    $region112: #{tpu_custom_call.1} parent=1 // pred_region
      %339 = dma.done [#allocation7], 256
    $region113: #{tpu_custom_call.1} parent=1 // pred_fallthru
      _
    // Predicated region
    $region114: #{tpu_custom_call.1} parent=1 // pred_check
      _
    $region115: #{tpu_custom_call.1} parent=1 // pred_check_branch
      %341 = sbr.rel (0) target = $region117
    $region116: #{tpu_custom_call.1} parent=1 // pred_region
      %342 = dma.done [#allocation7], 256
    $region117: #{tpu_custom_call.1} parent=1 // pred_fallthru
      _
    // Predicated region
    $region118: #{tpu_custom_call.1} parent=1 // pred_check
      _
    $region119: #{tpu_custom_call.1} parent=1 // pred_check_branch
      %344 = sbr.rel (0) target = $region121
    $region120: #{tpu_custom_call.1} parent=1 // pred_region
      %345 = dma.done [#allocation10], 2048
    $region121: #{tpu_custom_call.1} parent=1 // pred_fallthru
      _
    // Predicated region
    $region122: #{tpu_custom_call.1} parent=1 // pred_check
      _
    $region123: #{tpu_custom_call.1} parent=1 // pred_check_branch
      %347 = sbr.rel (0) target = $region125
    $region124: #{tpu_custom_call.1} parent=1 // pred_region
      %348 = dma.done [#allocation10], 2048
    $region125: #{tpu_custom_call.1} parent=1 // pred_fallthru
      _
    // Predicated region
    $region126: #{tpu_custom_call.1} parent=1 // pred_check
      _
    $region127: #{tpu_custom_call.1} parent=1 // pred_check_branch
      %350 = sbr.rel (0) target = $region129
    $region128: #{tpu_custom_call.1} parent=1 // pred_region
      %351 = dma.done [#allocation13], 256
    $region129: #{tpu_custom_call.1} parent=1 // pred_fallthru
      _
    // Predicated region
    $region130: #{tpu_custom_call.1} parent=1 // pred_check
      _
    $region131: #{tpu_custom_call.1} parent=1 // pred_check_branch
      %353 = sbr.rel (0) target = $region133
    $region132: #{tpu_custom_call.1} parent=1 // pred_region
      %354 = dma.done [#allocation13], 256
    $region133: #{tpu_custom_call.1} parent=1 // pred_fallthru
      _
    // Predicated region
    $region134: #{tpu_custom_call.1} parent=1 // pred_check
      _
    $region135: #{tpu_custom_call.1} parent=1 // pred_check_branch
      %356 = sbr.rel (0) target = $region137
    $region136: #{tpu_custom_call.1} parent=1 // pred_region
      %357 = dma.done [#allocation16], 256
    $region137: #{tpu_custom_call.1} parent=1 // pred_fallthru
      _
    // Predicated region
    $region138: #{tpu_custom_call.1} parent=1 // pred_check
      _
    $region139: #{tpu_custom_call.1} parent=1 // pred_check_branch
      %359 = sbr.rel (0) target = $region141
    $region140: #{tpu_custom_call.1} parent=1 // pred_region
      %360 = dma.done [#allocation16], 128
    $region141: #{tpu_custom_call.1} parent=1 // pred_fallthru
      _
    // Predicated region
    $region142: #{tpu_custom_call.1} parent=1 // pred_check
      _
    $region143: #{tpu_custom_call.1} parent=1 // pred_check_branch
      %362 = sbr.rel (0) target = $region145
    $region144: #{tpu_custom_call.1} parent=1 // pred_region
      %363 = dma.done [#allocation19], 128
    $region145: #{tpu_custom_call.1} parent=1 // pred_fallthru
      _
    // Predicated region
    $region146: #{tpu_custom_call.1} parent=1 // pred_check
      _
    $region147: #{tpu_custom_call.1} parent=1 // pred_check_branch
      %365 = sbr.rel (0) target = $region149
    $region148: #{tpu_custom_call.1} parent=1 // pred_region
      %366 = dma.done [#allocation19], 128
    $region149: #{tpu_custom_call.1} parent=1 // pred_fallthru
      _
    // Predicated region
    $region150: #{tpu_custom_call.1} parent=1 // pred_check
      _
    $region151: #{tpu_custom_call.1} parent=1 // pred_check_branch
      %368 = sbr.rel (0) target = $region153
    $region152: #{tpu_custom_call.1} parent=1 // pred_region
      %369 = dma.done [#allocation22], 256
    $region153: #{tpu_custom_call.1} parent=1 // pred_fallthru
      _
    // Predicated region
    $region154: #{tpu_custom_call.1} parent=1 // pred_check
      _
    $region155: #{tpu_custom_call.1} parent=1 // pred_check_branch
      %371 = sbr.rel (0) target = $region157
    $region156: #{tpu_custom_call.1} parent=1 // pred_region
      %372 = dma.done [#allocation22], 256
    $region157: #{tpu_custom_call.1} parent=1 // pred_fallthru
      _
    // Predicated region
    $region158: #{tpu_custom_call.1} parent=1 // pred_check
      _
    $region159: #{tpu_custom_call.1} parent=1 // pred_check_branch
      %374 = sbr.rel (0) target = $region161
    $region160: #{tpu_custom_call.1} parent=1 // pred_region
      %375 = dma.done [#allocation25], 256
    $region161: #{tpu_custom_call.1} parent=1 // pred_fallthru
      _
    // Predicated region
    $region162: #{tpu_custom_call.1} parent=1 // pred_check
      _
    $region163: #{tpu_custom_call.1} parent=1 // pred_check_branch
      %377 = sbr.rel (0) target = $region165
    $region164: #{tpu_custom_call.1} parent=1 // pred_region
      %378 = dma.done [#allocation25], 256
    $region165: #{tpu_custom_call.1} parent=1 // pred_fallthru
      _
    // Predicated region
    $region166: #{tpu_custom_call.1} parent=1 // pred_check
      _
    $region167: #{tpu_custom_call.1} parent=1 // pred_check_branch
      %380 = sbr.rel (0) target = $region169
    $region168: #{tpu_custom_call.1} parent=1 // pred_region
      %381 = dma.done [#allocation28], 256
    $region169: #{tpu_custom_call.1} parent=1 // pred_fallthru
      _
    // Predicated region
    $region170: #{tpu_custom_call.1} parent=1 // pred_check
      _
    $region171: #{tpu_custom_call.1} parent=1 // pred_check_branch
      %383 = sbr.rel (0) target = $region173
    $region172: #{tpu_custom_call.1} parent=1 // pred_region
      %384 = dma.done [#allocation28], 256
    $region173: #{tpu_custom_call.1} parent=1 // pred_fallthru
      _
    // Predicated region
    $region174: #{tpu_custom_call.1} parent=1 // pred_check
      _
    $region175: #{tpu_custom_call.1} parent=1 // pred_check_branch
      %386 = sbr.rel (0) target = $region177
    $region176: #{tpu_custom_call.1} parent=1 // pred_region
      %387 = dma.done [#allocation31], 256
    $region177: #{tpu_custom_call.1} parent=1 // pred_fallthru
      _
    // Predicated region
    $region178: #{tpu_custom_call.1} parent=1 // pred_check
      _
    $region179: #{tpu_custom_call.1} parent=1 // pred_check_branch
      %389 = sbr.rel (0) target = $region181
    $region180: #{tpu_custom_call.1} parent=1 // pred_region
      %390 = dma.done [#allocation31], 512
    $region181: #{tpu_custom_call.1} parent=1 // pred_fallthru
      _
    // Predicated region
    $region182: #{tpu_custom_call.1} parent=1 // pred_check
      _
    $region183: #{tpu_custom_call.1} parent=1 // pred_check_branch
      %392 = sbr.rel (0) target = $region185
    $region184: #{tpu_custom_call.1} parent=1 // pred_region
      %393 = dma.done [#allocation34], 16
    $region185: #{tpu_custom_call.1} parent=1 // pred_fallthru
      _
    // Predicated region
    $region186: #{tpu_custom_call.1} parent=1 // pred_check
      _
    $region187: #{tpu_custom_call.1} parent=1 // pred_check_branch
      %395 = sbr.rel (0) target = $region189
    $region188: #{tpu_custom_call.1} parent=1 // pred_region
      %396 = dma.done [#allocation34], 16
    $region189: #{tpu_custom_call.1} parent=1 // pred_fallthru
      _
    // Predicated region
    $region190: #{tpu_custom_call.1} parent=1 // pred_check
      _
    $region191: #{tpu_custom_call.1} parent=1 // pred_check_branch
      %398 = sbr.rel (0) target = $region193
    $region192: #{tpu_custom_call.1} parent=1 // pred_region
      %399 = dma.done [#allocation37], 16
    $region193: #{tpu_custom_call.1} parent=1 // pred_fallthru
      _
    // Predicated region
    $region194: #{tpu_custom_call.1} parent=1 // pred_check
      _
    $region195: #{tpu_custom_call.1} parent=1 // pred_check_branch
      %401 = sbr.rel (0) target = $region197
    $region196: #{tpu_custom_call.1} parent=1 // pred_region
      %402 = dma.done [#allocation37], 16
    $region197: #{tpu_custom_call.1} parent=1 // pred_fallthru
      _
    // Predicated region
    $region198: #{tpu_custom_call.1} parent=1 // pred_check
      _
    $region199: #{tpu_custom_call.1} parent=1 // pred_check_branch
      %404 = sbr.rel (0) target = $region201
    $region200: #{tpu_custom_call.1} parent=1 // pred_region
      %405 = dma.done [#allocation40], 16
    $region201: #{tpu_custom_call.1} parent=1 // pred_fallthru
      _
    // Predicated region
    $region202: #{tpu_custom_call.1} parent=1 // pred_check
      _
    $region203: #{tpu_custom_call.1} parent=1 // pred_check_branch
      %407 = sbr.rel (0) target = $region205
    $region204: #{tpu_custom_call.1} parent=1 // pred_region
      %408 = dma.done [#allocation40], 16
    $region205: #{tpu_custom_call.1} parent=1 // pred_fallthru
      _
    %v410 = vld [vmem:[#allocation3] sm:$0xff]
    %v411 = vld [vmem:[#allocation3 + $0x8] sm:$0xff]
    %v412 = vld [vmem:[#allocation6] sm:$0xff]
    %v413 = vld [vmem:[#allocation6 + $0x8] sm:$0xff]
    %v414 = vld [vmem:[#allocation8] sm:$0xff]
    %v415 = vld [vmem:[#allocation8 + $0x8] sm:$0xff]
    %v416 = vld [vmem:[#allocation9] sm:$0xf]
    %v417 = vld [vmem:[#allocation9 + $0x4] sm:$0xf]
    %v418 = vld [vmem:[#allocation9 + $0x8] sm:$0xf]
    %v419 = vld [vmem:[#allocation9 + $0xc] sm:$0xf]
    %v420 = vld [vmem:[#allocation9 + $0x10] sm:$0xf]
    %v421 = vld [vmem:[#allocation9 + $0x14] sm:$0xf]
    %v422 = vld [vmem:[#allocation9 + $0x18] sm:$0xf]
    %v423 = vld [vmem:[#allocation9 + $0x1c] sm:$0xf]
    %v424 = vld [vmem:[#allocation9 + $0x20] sm:$0xf]
    %v425 = vld [vmem:[#allocation9 + $0x24] sm:$0xf]
    %v426 = vld [vmem:[#allocation9 + $0x28] sm:$0xf]
    %v427 = vld [vmem:[#allocation9 + $0x2c] sm:$0xf]
    %v428 = vld [vmem:[#allocation9 + $0x30] sm:$0xf]
    %v429 = vld [vmem:[#allocation9 + $0x34] sm:$0xf]
    %v430 = vld [vmem:[#allocation9 + $0x38] sm:$0xf]
    %v431 = vld [vmem:[#allocation9 + $0x3c] sm:$0xf]
    %v432 = vld [vmem:[#allocation9 + $0x40] sm:$0xf]
    %v433 = vld [vmem:[#allocation9 + $0x44] sm:$0xf]
    %v434 = vld [vmem:[#allocation9 + $0x48] sm:$0xf]
    %v435 = vld [vmem:[#allocation9 + $0x4c] sm:$0xf]
    %v436 = vld [vmem:[#allocation9 + $0x50] sm:$0xf]
    %v437 = vld [vmem:[#allocation9 + $0x54] sm:$0xf]
    %v438 = vld [vmem:[#allocation9 + $0x58] sm:$0xf]
    %v439 = vld [vmem:[#allocation9 + $0x5c] sm:$0xf]
    %v440 = vld [vmem:[#allocation9 + $0x60] sm:$0xf]
    %v441 = vld [vmem:[#allocation9 + $0x64] sm:$0xf]
    %v442 = vld [vmem:[#allocation9 + $0x68] sm:$0xf]
    %v443 = vld [vmem:[#allocation9 + $0x6c] sm:$0xf]
    %v444 = vld [vmem:[#allocation9 + $0x70] sm:$0xf]
    %v445 = vld [vmem:[#allocation9 + $0x74] sm:$0xf]
    %v446 = vld [vmem:[#allocation9 + $0x78] sm:$0xf]
    %v447 = vld [vmem:[#allocation9 + $0x7c] sm:$0xf]
    %v448 = vld [vmem:[#allocation11] sm:$0xf]
    %v449 = vld [vmem:[#allocation11 + $0x4] sm:$0xf]
    %v450 = vld [vmem:[#allocation11 + $0x8] sm:$0xf]
    %v451 = vld [vmem:[#allocation11 + $0xc] sm:$0xf]
    %v452 = vld [vmem:[#allocation11 + $0x10] sm:$0xf]
    %v453 = vld [vmem:[#allocation11 + $0x14] sm:$0xf]
    %v454 = vld [vmem:[#allocation11 + $0x18] sm:$0xf]
    %v455 = vld [vmem:[#allocation11 + $0x1c] sm:$0xf]
    %v456 = vld [vmem:[#allocation11 + $0x20] sm:$0xf]
    %v457 = vld [vmem:[#allocation11 + $0x24] sm:$0xf]
    %v458 = vld [vmem:[#allocation11 + $0x28] sm:$0xf]
    %v459 = vld [vmem:[#allocation11 + $0x2c] sm:$0xf]
    %v460 = vld [vmem:[#allocation11 + $0x30] sm:$0xf]
    %v461 = vld [vmem:[#allocation11 + $0x34] sm:$0xf]
    %v462 = vld [vmem:[#allocation11 + $0x38] sm:$0xf]
    %v463 = vld [vmem:[#allocation11 + $0x3c] sm:$0xf]
    %v464 = vld [vmem:[#allocation11 + $0x40] sm:$0xf]
    %v465 = vld [vmem:[#allocation11 + $0x44] sm:$0xf]
    %v466 = vld [vmem:[#allocation11 + $0x48] sm:$0xf]
    %v467 = vld [vmem:[#allocation11 + $0x4c] sm:$0xf]
    %v468 = vld [vmem:[#allocation11 + $0x50] sm:$0xf]
    %v469 = vld [vmem:[#allocation11 + $0x54] sm:$0xf]
    %v470 = vld [vmem:[#allocation11 + $0x58] sm:$0xf]
    %v471 = vld [vmem:[#allocation11 + $0x5c] sm:$0xf]
    %v472 = vld [vmem:[#allocation11 + $0x60] sm:$0xf]
    %v473 = vld [vmem:[#allocation11 + $0x64] sm:$0xf]
    %v474 = vld [vmem:[#allocation11 + $0x68] sm:$0xf]
    %v475 = vld [vmem:[#allocation11 + $0x6c] sm:$0xf]
    %v476 = vld [vmem:[#allocation11 + $0x70] sm:$0xf]
    %v477 = vld [vmem:[#allocation11 + $0x74] sm:$0xf]
    %v478 = vld [vmem:[#allocation11 + $0x78] sm:$0xf]
    %v479 = vld [vmem:[#allocation11 + $0x7c] sm:$0xf]
    %v480 = vld [vmem:[#allocation12] sm:$0xff]
    %v481 = vld [vmem:[#allocation12 + $0x8] sm:$0xff]
    %v482 = vld [vmem:[#allocation14] sm:$0xff]
    %v483 = vld [vmem:[#allocation14 + $0x8] sm:$0xff]
    %v484 = vld [vmem:[#allocation15] sm:$0xff]
    %v485 = vld [vmem:[#allocation15 + $0x8] sm:$0xff]
    %v486 = vld [vmem:[#allocation17] sm:$0x3f]
    %v487 = vld [vmem:[#allocation18] sm:$0x3f]
    %v488 = vld [vmem:[#allocation20] sm:$0xff]
    %v489 = vpack.c.bf16 %v411, %v410
    %v490 = vld [vmem:[#allocation21] sm:$0xf]
    %v491 = vld [vmem:[#allocation21 + $0x4] sm:$0xf]
    %v492 = vld [vmem:[#allocation21 + $0x8] sm:$0xf]
    %v493 = vld [vmem:[#allocation21 + $0xc] sm:$0xf]
    %v494 = vld [vmem:[#allocation33] sm:$0x1]
    %v496 = vlaneseq
    %v497 = vshrl.u32 %v496, 7
    %v498 = vsub.s32 0, %v497
    %v499 = vrot.slane %v494, %v498
    %v505 = vunpack.c.l.b16 %v490
    %v506 = vunpack.c.l.b16 %v491
    %v507 = vunpack.c.l.b16 %v492
    %v508 = vunpack.c.l.b16 %v493
    %v509 = vpack.c.b16 %v506, %v505
    %v510 = vpack.c.b16 %v508, %v507
    %vm513 = vcmask 261120
    %v515 = vsel %vm513, %v489, 0
    %517 = vmatprep.subr.bf16.mxu0 0
    %518 = vmatpush1.bf16.msra.mxu0 %v509
    %519 = vmatprep.subr.bf16.mxu0 0
    %520 = vmatpush1.bf16.msra.mxu0 %v510
    %521 = vmatprep.subr.bf16.mxu0 0
    %522 = vmatpush1.bf16.msra.mxu0 0
    %523 = vmatprep.subr.bf16.mxu0 0
    %524 = vmatpush1.bf16.msra.mxu0 0
    %525 = vmatprep.subr.bf16.mxu0 0
    %526 = vmatpush1.bf16.msra.mxu0 0
    %527 = vmatprep.subr.bf16.mxu0 0
    %528 = vmatpush1.bf16.msra.mxu0 0
    %529 = vmatprep.subr.bf16.mxu0 0
    %530 = vmatpush1.bf16.msra.mxu0 0
    %531 = vmatprep.subr.bf16.mxu0 0
    %532 = vmatpush1.bf16.msra.mxu0 0
    %533 = vmatprep.subr.bf16.mxu0 0
    %534 = vmatpush1.bf16.msra.mxu0 0
    %535 = vmatprep.subr.bf16.mxu0 0
    %536 = vmatpush1.bf16.msra.mxu0 0
    %537 = vmatprep.subr.bf16.mxu0 0
    %538 = vmatpush1.bf16.msra.mxu0 0
    %539 = vmatprep.subr.bf16.mxu0 0
    %540 = vmatpush1.bf16.msra.mxu0 0
    %541 = vmatprep.subr.bf16.mxu0 0
    %542 = vmatpush1.bf16.msra.mxu0 0
    %543 = vmatprep.subr.bf16.mxu0 0
    %544 = vmatpush1.bf16.msra.mxu0 0
    %545 = vmatprep.subr.bf16.mxu0 0
    %546 = vmatpush1.bf16.msra.mxu0 0
    %547 = vmatprep.subr.bf16.mxu0 0
    %548 = vmatpush1.bf16.msra.mxu0 0
    %549 = vmatprep.mubr.bf16.mxu0 0
    %550 = vmatmul.mubr.bf16.gmra.mrb[0].mxu0 %v515
    %v551 = vpop.f32.mrb[0].mxu0
    %v552 = vadd.f32 %v499, %v551
    %v553 = vpop.f32.mrb[0].mxu0
    %v554 = vpop.f32.mrb[0].mxu0
    %v555 = vadd.f32 %v499, %v554
    %v556 = vpop.f32.mrb[0].mxu0
    %557 = vdwg.mxu0
    %v558 = vpack.c.bf16 %v413, %v412
    %v559 = vld [vmem:[#allocation23] sm:$0xf]
    %v560 = vld [vmem:[#allocation23 + $0x4] sm:$0xf]
    %v561 = vld [vmem:[#allocation23 + $0x8] sm:$0xf]
    %v562 = vld [vmem:[#allocation23 + $0xc] sm:$0xf]
    %v567 = vunpack.c.l.b16 %v559
    %v568 = vunpack.c.l.b16 %v560
    %v569 = vunpack.c.l.b16 %v561
    %v570 = vunpack.c.l.b16 %v562
    %v571 = vpack.c.b16 %v568, %v567
    %v572 = vpack.c.b16 %v570, %v569
    %v576 = vsel %vm513, %v558, 0
    %578 = vmatprep.subr.bf16.mxu0 0
    %579 = vmatpush1.bf16.msra.mxu0 %v571
    %580 = vmatprep.subr.bf16.mxu0 0
    %581 = vmatpush1.bf16.msra.mxu0 %v572
    %582 = vmatprep.subr.bf16.mxu0 0
    %583 = vmatpush1.bf16.msra.mxu0 0
    %584 = vmatprep.subr.bf16.mxu0 0
    %585 = vmatpush1.bf16.msra.mxu0 0
    %586 = vmatprep.subr.bf16.mxu0 0
    %587 = vmatpush1.bf16.msra.mxu0 0
    %588 = vmatprep.subr.bf16.mxu0 0
    %589 = vmatpush1.bf16.msra.mxu0 0
    %590 = vmatprep.subr.bf16.mxu0 0
    %591 = vmatpush1.bf16.msra.mxu0 0
    %592 = vmatprep.subr.bf16.mxu0 0
    %593 = vmatpush1.bf16.msra.mxu0 0
    %594 = vmatprep.subr.bf16.mxu0 0
    %595 = vmatpush1.bf16.msra.mxu0 0
    %596 = vmatprep.subr.bf16.mxu0 0
    %597 = vmatpush1.bf16.msra.mxu0 0
    %598 = vmatprep.subr.bf16.mxu0 0
    %599 = vmatpush1.bf16.msra.mxu0 0
    %600 = vmatprep.subr.bf16.mxu0 0
    %601 = vmatpush1.bf16.msra.mxu0 0
    %602 = vmatprep.subr.bf16.mxu0 0
    %603 = vmatpush1.bf16.msra.mxu0 0
    %604 = vmatprep.subr.bf16.mxu0 0
    %605 = vmatpush1.bf16.msra.mxu0 0
    %606 = vmatprep.subr.bf16.mxu0 0
    %607 = vmatpush1.bf16.msra.mxu0 0
    %608 = vmatprep.subr.bf16.mxu0 0
    %609 = vmatpush1.bf16.msra.mxu0 0
    %610 = vmatprep.mubr.bf16.mxu0 0
    %611 = vmatmul.mubr.bf16.gmra.mrb[0].mxu0 %v576
    %v612 = vpop.f32.mrb[0].mxu0
    %v613 = vadd.f32 0.0, %v612
    %v614 = vpop.f32.mrb[0].mxu0
    %v615 = vpop.f32.mrb[0].mxu0
    %v616 = vadd.f32 0.0, %v615
    %v617 = vpop.f32.mrb[0].mxu0
    %618 = vdwg.mxu0
    %v619 = vtanh.pop %v552
    %v620 = vtanh.pop %v555
    %v621 = vxor.u32 %v552, 2147483648
    %v622 = vxor.u32 %v555, 2147483648
    %v623 = vmul.f32 %v621, 1.442695
    %v624 = vpow.pop %v623
    %v625 = vmul.f32 %v622, 1.442695
    %v626 = vpow.pop %v625
    %v627 = vadd.f32 %v624, 1.0
    %v628 = vadd.f32 %v626, 1.0
    %v629 = vrcp.pop %v627
    %v630 = vmul.f32 1.0, %v629
    %v631 = vrcp.pop %v628
    %v632 = vmul.f32 1.0, %v631
    %635 = vrot.lane.b32.xlu0 %v630, 96
    %v636 = vpop.permute.xlu0 %635
    %637 = vrot.lane.b32.xlu0 %v632, 96
    %v638 = vpop.permute.xlu0 %637
    %v641 = vmul.f32 %v619, %v636
    %v642 = vmul.f32 %v620, %v638
    %645 = vrot.lane.b32.xlu0 %v552, 64
    %v646 = vpop.permute.xlu0 %645
    %647 = vrot.lane.b32.xlu0 %v555, 64
    %v648 = vpop.permute.xlu0 %647
    %v651 = vadd.f32 %v613, %v646
    %v652 = vadd.f32 %v616, %v648
    %v653 = vtanh.pop %v651
    %v654 = vtanh.pop %v652
    %v655 = vxor.u32 %v651, 2147483648
    %v656 = vxor.u32 %v652, 2147483648
    %v657 = vmul.f32 %v655, 1.442695
    %v658 = vpow.pop %v657
    %v659 = vmul.f32 %v656, 1.442695
    %v660 = vpow.pop %v659
    %v661 = vadd.f32 %v658, 1.0
    %v662 = vadd.f32 %v660, 1.0
    %v663 = vrcp.pop %v661
    %v664 = vmul.f32 1.0, %v663
    %v665 = vrcp.pop %v662
    %v666 = vmul.f32 1.0, %v665
    %669 = vrot.lane.b32.xlu0 %v664, 96
    %v670 = vpop.permute.xlu0 %669
    %671 = vrot.lane.b32.xlu0 %v666, 96
    %v672 = vpop.permute.xlu0 %671
    %v675 = vmul.f32 %v653, %v670
    %v676 = vmul.f32 %v654, %v672
    %vm677 = vcmp.gt.f32.partialorder %v414, 0.5
    %vm678 = vcmp.gt.f32.partialorder %v415, 0.5
    %v679 = vsel %vm677, 1, 0
    %v680 = vsel %vm678, 1, 0
    %681 = vset.pattern.permute.xlu0 0
    %682 = vperm.xlu0 %681, %v679
    %v683 = vpop.permute.xlu0 %682
    %684 = vset.pattern.permute.xlu0 0
    %685 = vperm.xlu0 %684, %v680
    %v686 = vpop.permute.xlu0 %685
    %vm687 = vcmp.eq.s32.totalorder %v683, 1
    %vm688 = vcmp.eq.s32.totalorder %v686, 1
    %v689 = vsel %vm687, %v675, %v641
    %v690 = vsel %vm688, %v676, %v642
    %v691 = vpack.c.bf16 %v690, %v689
    %v692 = vld [vmem:[#allocation24] sm:$0xf]
    %v693 = vld [vmem:[#allocation24 + $0x4] sm:$0xf]
    %v694 = vld [vmem:[#allocation24 + $0x8] sm:$0xf]
    %v695 = vld [vmem:[#allocation24 + $0xc] sm:$0xf]
    %v700 = vunpack.c.l.b16 %v692
    %v701 = vunpack.c.l.b16 %v693
    %v702 = vunpack.c.l.b16 %v694
    %v703 = vunpack.c.l.b16 %v695
    %v704 = vpack.c.b16 %v701, %v700
    %v705 = vpack.c.b16 %v703, %v702
    %v709 = vsel %vm513, %v691, 0
    %711 = vmatprep.subr.bf16.mxu0 0
    %712 = vmatpush1.bf16.msra.mxu0 %v704
    %713 = vmatprep.subr.bf16.mxu0 0
    %714 = vmatpush1.bf16.msra.mxu0 %v705
    %715 = vmatprep.subr.bf16.mxu0 0
    %716 = vmatpush1.bf16.msra.mxu0 0
    %717 = vmatprep.subr.bf16.mxu0 0
    %718 = vmatpush1.bf16.msra.mxu0 0
    %719 = vmatprep.subr.bf16.mxu0 0
    %720 = vmatpush1.bf16.msra.mxu0 0
    %721 = vmatprep.subr.bf16.mxu0 0
    %722 = vmatpush1.bf16.msra.mxu0 0
    %723 = vmatprep.subr.bf16.mxu0 0
    %724 = vmatpush1.bf16.msra.mxu0 0
    %725 = vmatprep.subr.bf16.mxu0 0
    %726 = vmatpush1.bf16.msra.mxu0 0
    %727 = vmatprep.subr.bf16.mxu0 0
    %728 = vmatpush1.bf16.msra.mxu0 0
    %729 = vmatprep.subr.bf16.mxu0 0
    %730 = vmatpush1.bf16.msra.mxu0 0
    %731 = vmatprep.subr.bf16.mxu0 0
    %732 = vmatpush1.bf16.msra.mxu0 0
    %733 = vmatprep.subr.bf16.mxu0 0
    %734 = vmatpush1.bf16.msra.mxu0 0
    %735 = vmatprep.subr.bf16.mxu0 0
    %736 = vmatpush1.bf16.msra.mxu0 0
    %737 = vmatprep.subr.bf16.mxu0 0
    %738 = vmatpush1.bf16.msra.mxu0 0
    %739 = vmatprep.subr.bf16.mxu0 0
    %740 = vmatpush1.bf16.msra.mxu0 0
    %741 = vmatprep.subr.bf16.mxu0 0
    %742 = vmatpush1.bf16.msra.mxu0 0
    %743 = vmatprep.mubr.bf16.mxu0 0
    %744 = vmatmul.mubr.bf16.gmra.mrb[0].mxu0 %v709
    %v745 = vpop.f32.mrb[0].mxu0
    %v746 = vadd.f32 0.0, %v745
    %v747 = vpop.f32.mrb[0].mxu0
    %v748 = vpop.f32.mrb[0].mxu0
    %v749 = vadd.f32 0.0, %v748
    %v750 = vpop.f32.mrb[0].mxu0
    %751 = vdwg.mxu0
    %v752 = vld [vmem:[#allocation35] sm:$0x1]
    %v754 = vlaneseq
    %v755 = vshrl.u32 %v754, 7
    %v756 = vsub.s32 0, %v755
    %v757 = vrot.slane %v752, %v756
    %v759 = vadd.f32 %v746, %v757
    %v760 = vadd.f32 %v749, %v757
    %v761 = vld [vmem:[#allocation27] sm:$0xf]
    %v762 = vld [vmem:[#allocation27 + $0x4] sm:$0xf]
    %v763 = vld [vmem:[#allocation27 + $0x8] sm:$0xf]
    %v764 = vld [vmem:[#allocation27 + $0xc] sm:$0xf]
    %v797 = vunpack.c.l.b16 %v416
    %v798 = vunpack.c.l.b16 %v417
    %v799 = vunpack.c.l.b16 %v418
    %v800 = vunpack.c.l.b16 %v419
    %v801 = vunpack.c.l.b16 %v420
    %v802 = vunpack.c.l.b16 %v421
    %v803 = vunpack.c.l.b16 %v422
    %v804 = vunpack.c.l.b16 %v423
    %v805 = vunpack.c.l.b16 %v424
    %v806 = vunpack.c.l.b16 %v425
    %v807 = vunpack.c.l.b16 %v426
    %v808 = vunpack.c.l.b16 %v427
    %v809 = vunpack.c.l.b16 %v428
    %v810 = vunpack.c.l.b16 %v429
    %v811 = vunpack.c.l.b16 %v430
    %v812 = vunpack.c.l.b16 %v431
    %v813 = vunpack.c.l.b16 %v432
    %v814 = vunpack.c.l.b16 %v433
    %v815 = vunpack.c.l.b16 %v434
    %v816 = vunpack.c.l.b16 %v435
    %v817 = vunpack.c.l.b16 %v436
    %v818 = vunpack.c.l.b16 %v437
    %v819 = vunpack.c.l.b16 %v438
    %v820 = vunpack.c.l.b16 %v439
    %v821 = vunpack.c.l.b16 %v440
    %v822 = vunpack.c.l.b16 %v441
    %v823 = vunpack.c.l.b16 %v442
    %v824 = vunpack.c.l.b16 %v443
    %v825 = vunpack.c.l.b16 %v444
    %v826 = vunpack.c.l.b16 %v445
    %v827 = vunpack.c.l.b16 %v446
    %v828 = vunpack.c.l.b16 %v447
    %v829 = vpack.c.b16 %v798, %v797
    %v830 = vpack.c.b16 %v800, %v799
    %v831 = vpack.c.b16 %v802, %v801
    %v832 = vpack.c.b16 %v804, %v803
    %v833 = vpack.c.b16 %v806, %v805
    %v834 = vpack.c.b16 %v808, %v807
    %v835 = vpack.c.b16 %v810, %v809
    %v836 = vpack.c.b16 %v812, %v811
    %v837 = vpack.c.b16 %v814, %v813
    %v838 = vpack.c.b16 %v816, %v815
    %v839 = vpack.c.b16 %v818, %v817
    %v840 = vpack.c.b16 %v820, %v819
    %v841 = vpack.c.b16 %v822, %v821
    %v842 = vpack.c.b16 %v824, %v823
    %v843 = vpack.c.b16 %v826, %v825
    %v844 = vpack.c.b16 %v828, %v827
    %v849 = vunpack.c.l.b16 %v761
    %v850 = vunpack.c.l.b16 %v762
    %v851 = vunpack.c.l.b16 %v763
    %v852 = vunpack.c.l.b16 %v764
    %v853 = vpack.c.b16 %v850, %v849
    %v854 = vpack.c.b16 %v852, %v851
    %v858 = vsel %vm513, %v829, 0
    %v861 = vsel %vm513, %v830, 0
    %v864 = vsel %vm513, %v831, 0
    %v867 = vsel %vm513, %v832, 0
    %v870 = vsel %vm513, %v833, 0
    %v873 = vsel %vm513, %v834, 0
    %v876 = vsel %vm513, %v835, 0
    %v879 = vsel %vm513, %v836, 0
    %v882 = vsel %vm513, %v837, 0
    %v885 = vsel %vm513, %v838, 0
    %v888 = vsel %vm513, %v839, 0
    %v891 = vsel %vm513, %v840, 0
    %v894 = vsel %vm513, %v841, 0
    %v897 = vsel %vm513, %v842, 0
    %v900 = vsel %vm513, %v843, 0
    %v903 = vsel %vm513, %v844, 0
    %905 = vmatprep.subr.bf16.mxu0 0
    %906 = vmatpush1.bf16.msra.mxu0 %v853
    %907 = vmatprep.subr.bf16.mxu0 0
    %908 = vmatpush1.bf16.msra.mxu0 %v854
    %909 = vmatprep.subr.bf16.mxu0 0
    %910 = vmatpush1.bf16.msra.mxu0 0
    %911 = vmatprep.subr.bf16.mxu0 0
    %912 = vmatpush1.bf16.msra.mxu0 0
    %913 = vmatprep.subr.bf16.mxu0 0
    %914 = vmatpush1.bf16.msra.mxu0 0
    %915 = vmatprep.subr.bf16.mxu0 0
    %916 = vmatpush1.bf16.msra.mxu0 0
    %917 = vmatprep.subr.bf16.mxu0 0
    %918 = vmatpush1.bf16.msra.mxu0 0
    %919 = vmatprep.subr.bf16.mxu0 0
    %920 = vmatpush1.bf16.msra.mxu0 0
    %921 = vmatprep.subr.bf16.mxu0 0
    %922 = vmatpush1.bf16.msra.mxu0 0
    %923 = vmatprep.subr.bf16.mxu0 0
    %924 = vmatpush1.bf16.msra.mxu0 0
    %925 = vmatprep.subr.bf16.mxu0 0
    %926 = vmatpush1.bf16.msra.mxu0 0
    %927 = vmatprep.subr.bf16.mxu0 0
    %928 = vmatpush1.bf16.msra.mxu0 0
    %929 = vmatprep.subr.bf16.mxu0 0
    %930 = vmatpush1.bf16.msra.mxu0 0
    %931 = vmatprep.subr.bf16.mxu0 0
    %932 = vmatpush1.bf16.msra.mxu0 0
    %933 = vmatprep.subr.bf16.mxu0 0
    %934 = vmatpush1.bf16.msra.mxu0 0
    %935 = vmatprep.subr.bf16.mxu0 0
    %936 = vmatpush1.bf16.msra.mxu0 0
    %937 = vmatprep.mubr.bf16.mxu0 0
    %938 = vmatmul.mubr.bf16.gmra.mrb[0].mxu0 %v858
    %v939 = vpop.f32.mrb[0].mxu0
    %v940 = vadd.f32 0.0, %v939
    %v941 = vpop.f32.mrb[0].mxu0
    %v942 = vpop.f32.mrb[0].mxu0
    %v943 = vadd.f32 0.0, %v942
    %v944 = vpop.f32.mrb[0].mxu0
    %945 = vmatprep.mubr.bf16.mxu0 0
    %946 = vmatmul.mubr.bf16.gmra.mrb[0].mxu0 %v861
    %v947 = vpop.f32.mrb[0].mxu0
    %v948 = vadd.f32 0.0, %v947
    %v949 = vpop.f32.mrb[0].mxu0
    %v950 = vpop.f32.mrb[0].mxu0
    %v951 = vadd.f32 0.0, %v950
    %v952 = vpop.f32.mrb[0].mxu0
    %953 = vmatprep.mubr.bf16.mxu0 0
    %954 = vmatmul.mubr.bf16.gmra.mrb[0].mxu0 %v864
    %v955 = vpop.f32.mrb[0].mxu0
    %v956 = vadd.f32 0.0, %v955
    %v957 = vpop.f32.mrb[0].mxu0
    %v958 = vpop.f32.mrb[0].mxu0
    %v959 = vadd.f32 0.0, %v958
    %v960 = vpop.f32.mrb[0].mxu0
    %961 = vmatprep.mubr.bf16.mxu0 0
    %962 = vmatmul.mubr.bf16.gmra.mrb[0].mxu0 %v867
    %v963 = vpop.f32.mrb[0].mxu0
    %v964 = vadd.f32 0.0, %v963
    %v965 = vpop.f32.mrb[0].mxu0
    %v966 = vpop.f32.mrb[0].mxu0
    %v967 = vadd.f32 0.0, %v966
    %v968 = vpop.f32.mrb[0].mxu0
    %969 = vmatprep.mubr.bf16.mxu0 0
    %970 = vmatmul.mubr.bf16.gmra.mrb[0].mxu0 %v870
    %v971 = vpop.f32.mrb[0].mxu0
    %v972 = vadd.f32 0.0, %v971
    %v973 = vpop.f32.mrb[0].mxu0
    %v974 = vpop.f32.mrb[0].mxu0
    %v975 = vadd.f32 0.0, %v974
    %v976 = vpop.f32.mrb[0].mxu0
    %977 = vmatprep.mubr.bf16.mxu0 0
    %978 = vmatmul.mubr.bf16.gmra.mrb[0].mxu0 %v873
    %v979 = vpop.f32.mrb[0].mxu0
    %v980 = vadd.f32 0.0, %v979
    %v981 = vpop.f32.mrb[0].mxu0
    %v982 = vpop.f32.mrb[0].mxu0
    %v983 = vadd.f32 0.0, %v982
    %v984 = vpop.f32.mrb[0].mxu0
    %985 = vmatprep.mubr.bf16.mxu0 0
    %986 = vmatmul.mubr.bf16.gmra.mrb[0].mxu0 %v876
    %v987 = vpop.f32.mrb[0].mxu0
    %v988 = vadd.f32 0.0, %v987
    %v989 = vpop.f32.mrb[0].mxu0
    %v990 = vpop.f32.mrb[0].mxu0
    %v991 = vadd.f32 0.0, %v990
    %v992 = vpop.f32.mrb[0].mxu0
    %993 = vmatprep.mubr.bf16.mxu0 0
    %994 = vmatmul.mubr.bf16.gmra.mrb[0].mxu0 %v879
    %v995 = vpop.f32.mrb[0].mxu0
    %v996 = vadd.f32 0.0, %v995
    %v997 = vpop.f32.mrb[0].mxu0
    %v998 = vpop.f32.mrb[0].mxu0
    %v999 = vadd.f32 0.0, %v998
    %v1000 = vpop.f32.mrb[0].mxu0
    %1001 = vmatprep.mubr.bf16.mxu0 0
    %1002 = vmatmul.mubr.bf16.gmra.mrb[0].mxu0 %v882
    %v1003 = vpop.f32.mrb[0].mxu0
    %v1004 = vadd.f32 0.0, %v1003
    %v1005 = vpop.f32.mrb[0].mxu0
    %v1006 = vpop.f32.mrb[0].mxu0
    %v1007 = vadd.f32 0.0, %v1006
    %v1008 = vpop.f32.mrb[0].mxu0
    %1009 = vmatprep.mubr.bf16.mxu0 0
    %1010 = vmatmul.mubr.bf16.gmra.mrb[0].mxu0 %v885
    %v1011 = vpop.f32.mrb[0].mxu0
    %v1012 = vadd.f32 0.0, %v1011
    %v1013 = vpop.f32.mrb[0].mxu0
    %v1014 = vpop.f32.mrb[0].mxu0
    %v1015 = vadd.f32 0.0, %v1014
    %v1016 = vpop.f32.mrb[0].mxu0
    %1017 = vmatprep.mubr.bf16.mxu0 0
    %1018 = vmatmul.mubr.bf16.gmra.mrb[0].mxu0 %v888
    %v1019 = vpop.f32.mrb[0].mxu0
    %v1020 = vadd.f32 0.0, %v1019
    %v1021 = vpop.f32.mrb[0].mxu0
    %v1022 = vpop.f32.mrb[0].mxu0
    %v1023 = vadd.f32 0.0, %v1022
    %v1024 = vpop.f32.mrb[0].mxu0
    %1025 = vmatprep.mubr.bf16.mxu0 0
    %1026 = vmatmul.mubr.bf16.gmra.mrb[0].mxu0 %v891
    %v1027 = vpop.f32.mrb[0].mxu0
    %v1028 = vadd.f32 0.0, %v1027
    %v1029 = vpop.f32.mrb[0].mxu0
    %v1030 = vpop.f32.mrb[0].mxu0
    %v1031 = vadd.f32 0.0, %v1030
    %v1032 = vpop.f32.mrb[0].mxu0
    %1033 = vmatprep.mubr.bf16.mxu0 0
    %1034 = vmatmul.mubr.bf16.gmra.mrb[0].mxu0 %v894
    %v1035 = vpop.f32.mrb[0].mxu0
    %v1036 = vadd.f32 0.0, %v1035
    %v1037 = vpop.f32.mrb[0].mxu0
    %v1038 = vpop.f32.mrb[0].mxu0
    %v1039 = vadd.f32 0.0, %v1038
    %v1040 = vpop.f32.mrb[0].mxu0
    %1041 = vmatprep.mubr.bf16.mxu0 0
    %1042 = vmatmul.mubr.bf16.gmra.mrb[0].mxu0 %v897
    %v1043 = vpop.f32.mrb[0].mxu0
    %v1044 = vadd.f32 0.0, %v1043
    %v1045 = vpop.f32.mrb[0].mxu0
    %v1046 = vpop.f32.mrb[0].mxu0
    %v1047 = vadd.f32 0.0, %v1046
    %v1048 = vpop.f32.mrb[0].mxu0
    %1049 = vmatprep.mubr.bf16.mxu0 0
    %1050 = vmatmul.mubr.bf16.gmra.mrb[0].mxu0 %v900
    %v1051 = vpop.f32.mrb[0].mxu0
    %v1052 = vadd.f32 0.0, %v1051
    %v1053 = vpop.f32.mrb[0].mxu0
    %v1054 = vpop.f32.mrb[0].mxu0
    %v1055 = vadd.f32 0.0, %v1054
    %v1056 = vpop.f32.mrb[0].mxu0
    %1057 = vmatprep.mubr.bf16.mxu0 0
    %1058 = vmatmul.mubr.bf16.gmra.mrb[0].mxu0 %v903
    %v1059 = vpop.f32.mrb[0].mxu0
    %v1060 = vadd.f32 0.0, %v1059
    %v1061 = vpop.f32.mrb[0].mxu0
    %v1062 = vpop.f32.mrb[0].mxu0
    %v1063 = vadd.f32 0.0, %v1062
    %v1064 = vpop.f32.mrb[0].mxu0
    %1065 = vdwg.mxu0
    %v1068 = vcombine.high %v759, %v759
    %v1070 = vunpack.c.l.s4 1966171168
    %v1071 = vunpack.c.0.s8 %v1070
    %v1072 = vlaneseq
    %v1073 = vshrl.u32 %v1072, 7
    %v1074 = vsub.s32 %v1071, %v1073
    %v1075 = vrot.slane %v759, %v1074
    %v1077 = vunpack.c.l.s4 1966171168
    %v1078 = vunpack.c.0.s8 %v1077
    %v1079 = vlaneseq
    %v1080 = vshrl.u32 %v1079, 7
    %v1081 = vsub.s32 %v1078, %v1080
    %v1082 = vrot.slane %v1068, %v1081
    %v1083 = vcombine.high %v1075, %v1075
    %v1084 = vcombine.high %v1082, %v1082
    %v1086 = vunpack.c.l.s4 1966171168
    %v1087 = vunpack.c.0.s8 %v1086
    %v1088 = vlaneseq
    %v1089 = vshrl.u32 %v1088, 7
    %v1090 = vsub.s32 %v1087, %v1089
    %v1091 = vrot.slane %v1075, %v1090
    %v1093 = vunpack.c.l.s4 1966171168
    %v1094 = vunpack.c.0.s8 %v1093
    %v1095 = vlaneseq
    %v1096 = vshrl.u32 %v1095, 7
    %v1097 = vsub.s32 %v1094, %v1096
    %v1098 = vrot.slane %v1082, %v1097
    %v1100 = vunpack.c.l.s4 1966171168
    %v1101 = vunpack.c.0.s8 %v1100
    %v1102 = vlaneseq
    %v1103 = vshrl.u32 %v1102, 7
    %v1104 = vsub.s32 %v1101, %v1103
    %v1105 = vrot.slane %v1083, %v1104
    %v1107 = vunpack.c.l.s4 1966171168
    %v1108 = vunpack.c.0.s8 %v1107
    %v1109 = vlaneseq
    %v1110 = vshrl.u32 %v1109, 7
    %v1111 = vsub.s32 %v1108, %v1110
    %v1112 = vrot.slane %v1084, %v1111
    %v1113 = vcombine.high %v1091, %v1091
    %v1114 = vcombine.high %v1098, %v1098
    %v1115 = vcombine.high %v1105, %v1105
    %v1116 = vcombine.high %v1112, %v1112
    %v1117 = vcombine.high %v760, %v760
    %v1119 = vunpack.c.l.s4 1966171168
    %v1120 = vunpack.c.0.s8 %v1119
    %v1121 = vlaneseq
    %v1122 = vshrl.u32 %v1121, 7
    %v1123 = vsub.s32 %v1120, %v1122
    %v1124 = vrot.slane %v760, %v1123
    %v1126 = vunpack.c.l.s4 1966171168
    %v1127 = vunpack.c.0.s8 %v1126
    %v1128 = vlaneseq
    %v1129 = vshrl.u32 %v1128, 7
    %v1130 = vsub.s32 %v1127, %v1129
    %v1131 = vrot.slane %v1117, %v1130
    %v1132 = vcombine.high %v1124, %v1124
    %v1133 = vcombine.high %v1131, %v1131
    %v1135 = vunpack.c.l.s4 1966171168
    %v1136 = vunpack.c.0.s8 %v1135
    %v1137 = vlaneseq
    %v1138 = vshrl.u32 %v1137, 7
    %v1139 = vsub.s32 %v1136, %v1138
    %v1140 = vrot.slane %v1124, %v1139
    %v1142 = vunpack.c.l.s4 1966171168
    %v1143 = vunpack.c.0.s8 %v1142
    %v1144 = vlaneseq
    %v1145 = vshrl.u32 %v1144, 7
    %v1146 = vsub.s32 %v1143, %v1145
    %v1147 = vrot.slane %v1131, %v1146
    %v1149 = vunpack.c.l.s4 1966171168
    %v1150 = vunpack.c.0.s8 %v1149
    %v1151 = vlaneseq
    %v1152 = vshrl.u32 %v1151, 7
    %v1153 = vsub.s32 %v1150, %v1152
    %v1154 = vrot.slane %v1132, %v1153
    %v1156 = vunpack.c.l.s4 1966171168
    %v1157 = vunpack.c.0.s8 %v1156
    %v1158 = vlaneseq
    %v1159 = vshrl.u32 %v1158, 7
    %v1160 = vsub.s32 %v1157, %v1159
    %v1161 = vrot.slane %v1133, %v1160
    %v1162 = vcombine.high %v1140, %v1140
    %v1163 = vcombine.high %v1147, %v1147
    %v1164 = vcombine.high %v1154, %v1154
    %v1165 = vcombine.high %v1161, %v1161
    %v1166 = vlaneseq
    %v1167 = vshrl.u32 %v1166, 7
    %v1168 = vsub.s32 0, %v1167
    %v1169 = vrot.slane %v1091, %v1168
    %v1170 = vlaneseq
    %v1171 = vshrl.u32 %v1170, 7
    %v1172 = vsub.s32 0, %v1171
    %v1173 = vrot.slane %v1105, %v1172
    %v1174 = vlaneseq
    %v1175 = vshrl.u32 %v1174, 7
    %v1176 = vsub.s32 0, %v1175
    %v1177 = vrot.slane %v1113, %v1176
    %v1178 = vlaneseq
    %v1179 = vshrl.u32 %v1178, 7
    %v1180 = vsub.s32 0, %v1179
    %v1181 = vrot.slane %v1115, %v1180
    %v1182 = vlaneseq
    %v1183 = vshrl.u32 %v1182, 7
    %v1184 = vsub.s32 0, %v1183
    %v1185 = vrot.slane %v1098, %v1184
    %v1186 = vlaneseq
    %v1187 = vshrl.u32 %v1186, 7
    %v1188 = vsub.s32 0, %v1187
    %v1189 = vrot.slane %v1112, %v1188
    %v1190 = vlaneseq
    %v1191 = vshrl.u32 %v1190, 7
    %v1192 = vsub.s32 0, %v1191
    %v1193 = vrot.slane %v1114, %v1192
    %v1194 = vlaneseq
    %v1195 = vshrl.u32 %v1194, 7
    %v1196 = vsub.s32 0, %v1195
    %v1197 = vrot.slane %v1116, %v1196
    %v1198 = vlaneseq
    %v1199 = vshrl.u32 %v1198, 7
    %v1200 = vsub.s32 0, %v1199
    %v1201 = vrot.slane %v1140, %v1200
    %v1202 = vlaneseq
    %v1203 = vshrl.u32 %v1202, 7
    %v1204 = vsub.s32 0, %v1203
    %v1205 = vrot.slane %v1154, %v1204
    %v1206 = vlaneseq
    %v1207 = vshrl.u32 %v1206, 7
    %v1208 = vsub.s32 0, %v1207
    %v1209 = vrot.slane %v1162, %v1208
    %v1210 = vlaneseq
    %v1211 = vshrl.u32 %v1210, 7
    %v1212 = vsub.s32 0, %v1211
    %v1213 = vrot.slane %v1164, %v1212
    %v1214 = vlaneseq
    %v1215 = vshrl.u32 %v1214, 7
    %v1216 = vsub.s32 0, %v1215
    %v1217 = vrot.slane %v1147, %v1216
    %v1218 = vlaneseq
    %v1219 = vshrl.u32 %v1218, 7
    %v1220 = vsub.s32 0, %v1219
    %v1221 = vrot.slane %v1161, %v1220
    %v1222 = vlaneseq
    %v1223 = vshrl.u32 %v1222, 7
    %v1224 = vsub.s32 0, %v1223
    %v1225 = vrot.slane %v1163, %v1224
    %v1226 = vlaneseq
    %v1227 = vshrl.u32 %v1226, 7
    %v1228 = vsub.s32 0, %v1227
    %v1229 = vrot.slane %v1165, %v1228
    %v1246 = vadd.f32 %v940, %v1169
    %v1247 = vadd.f32 %v943, %v1169
    %v1248 = vadd.f32 %v948, %v1173
    %v1249 = vadd.f32 %v951, %v1173
    %v1250 = vadd.f32 %v956, %v1177
    %v1251 = vadd.f32 %v959, %v1177
    %v1252 = vadd.f32 %v964, %v1181
    %v1253 = vadd.f32 %v967, %v1181
    %v1254 = vadd.f32 %v972, %v1185
    %v1255 = vadd.f32 %v975, %v1185
    %v1256 = vadd.f32 %v980, %v1189
    %v1257 = vadd.f32 %v983, %v1189
    %v1258 = vadd.f32 %v988, %v1193
    %v1259 = vadd.f32 %v991, %v1193
    %v1260 = vadd.f32 %v996, %v1197
    %v1261 = vadd.f32 %v999, %v1197
    %v1262 = vadd.f32 %v1004, %v1201
    %v1263 = vadd.f32 %v1007, %v1201
    %v1264 = vadd.f32 %v1012, %v1205
    %v1265 = vadd.f32 %v1015, %v1205
    %v1266 = vadd.f32 %v1020, %v1209
    %v1267 = vadd.f32 %v1023, %v1209
    %v1268 = vadd.f32 %v1028, %v1213
    %v1269 = vadd.f32 %v1031, %v1213
    %v1270 = vadd.f32 %v1036, %v1217
    %v1271 = vadd.f32 %v1039, %v1217
    %v1272 = vadd.f32 %v1044, %v1221
    %v1273 = vadd.f32 %v1047, %v1221
    %v1274 = vadd.f32 %v1052, %v1225
    %v1275 = vadd.f32 %v1055, %v1225
    %v1276 = vadd.f32 %v1060, %v1229
    %v1277 = vadd.f32 %v1063, %v1229
    %v1278 = vtanh.pop %v1246
    %v1279 = vtanh.pop %v1247
    %v1280 = vtanh.pop %v1248
    %v1281 = vtanh.pop %v1249
    %v1282 = vtanh.pop %v1250
    %v1283 = vtanh.pop %v1251
    %v1284 = vtanh.pop %v1252
    %v1285 = vtanh.pop %v1253
    %v1286 = vtanh.pop %v1254
    %v1287 = vtanh.pop %v1255
    %v1288 = vtanh.pop %v1256
    %v1289 = vtanh.pop %v1257
    %v1290 = vtanh.pop %v1258
    %v1291 = vtanh.pop %v1259
    %v1292 = vtanh.pop %v1260
    %v1293 = vtanh.pop %v1261
    %v1294 = vtanh.pop %v1262
    %v1295 = vtanh.pop %v1263
    %v1296 = vtanh.pop %v1264
    %v1297 = vtanh.pop %v1265
    %v1298 = vtanh.pop %v1266
    %v1299 = vtanh.pop %v1267
    %v1300 = vtanh.pop %v1268
    %v1301 = vtanh.pop %v1269
    %v1302 = vtanh.pop %v1270
    %v1303 = vtanh.pop %v1271
    %v1304 = vtanh.pop %v1272
    %v1305 = vtanh.pop %v1273
    %v1306 = vtanh.pop %v1274
    %v1307 = vtanh.pop %v1275
    %v1308 = vtanh.pop %v1276
    %v1309 = vtanh.pop %v1277
    %v1310 = vpack.c.bf16 %v1279, %v1278
    %v1311 = vpack.c.bf16 %v1281, %v1280
    %v1312 = vpack.c.bf16 %v1283, %v1282
    %v1313 = vpack.c.bf16 %v1285, %v1284
    %v1314 = vpack.c.bf16 %v1287, %v1286
    %v1315 = vpack.c.bf16 %v1289, %v1288
    %v1316 = vpack.c.bf16 %v1291, %v1290
    %v1317 = vpack.c.bf16 %v1293, %v1292
    %v1318 = vpack.c.bf16 %v1295, %v1294
    %v1319 = vpack.c.bf16 %v1297, %v1296
    %v1320 = vpack.c.bf16 %v1299, %v1298
    %v1321 = vpack.c.bf16 %v1301, %v1300
    %v1322 = vpack.c.bf16 %v1303, %v1302
    %v1323 = vpack.c.bf16 %v1305, %v1304
    %v1324 = vpack.c.bf16 %v1307, %v1306
    %v1325 = vpack.c.bf16 %v1309, %v1308
    %v1326 = vld [vmem:[#allocation32] sm:$0xf]
    %v1327 = vld [vmem:[#allocation32 + $0x4] sm:$0xf]
    %v1328 = vld [vmem:[#allocation32 + $0x8] sm:$0xf]
    %v1329 = vld [vmem:[#allocation32 + $0xc] sm:$0xf]
    %v1330 = vld [vmem:[#allocation32 + $0x10] sm:$0xf]
    %v1331 = vld [vmem:[#allocation32 + $0x14] sm:$0xf]
    %v1332 = vld [vmem:[#allocation32 + $0x18] sm:$0xf]
    %v1333 = vld [vmem:[#allocation32 + $0x1c] sm:$0xf]
    %v1342 = vunpack.c.l.b16 %v1326
    %v1343 = vunpack.c.l.b16 %v1327
    %v1344 = vunpack.c.l.b16 %v1328
    %v1345 = vunpack.c.l.b16 %v1329
    %v1346 = vunpack.c.l.b16 %v1330
    %v1347 = vunpack.c.l.b16 %v1331
    %v1348 = vunpack.c.l.b16 %v1332
    %v1349 = vunpack.c.l.b16 %v1333
    %v1350 = vpack.c.b16 %v1343, %v1342
    %v1351 = vpack.c.b16 %v1345, %v1344
    %v1352 = vpack.c.b16 %v1347, %v1346
    %v1353 = vpack.c.b16 %v1349, %v1348
    %vm1358 = vcmask 523264
    %v1360 = vsel %vm1358, %v1310, 0
    %v1363 = vsel %vm1358, %v1311, 0
    %v1366 = vsel %vm1358, %v1312, 0
    %v1369 = vsel %vm1358, %v1313, 0
    %v1372 = vsel %vm1358, %v1314, 0
    %v1375 = vsel %vm1358, %v1315, 0
    %v1378 = vsel %vm1358, %v1316, 0
    %v1381 = vsel %vm1358, %v1317, 0
    %v1384 = vsel %vm1358, %v1318, 0
    %v1387 = vsel %vm1358, %v1319, 0
    %v1390 = vsel %vm1358, %v1320, 0
    %v1393 = vsel %vm1358, %v1321, 0
    %v1396 = vsel %vm1358, %v1322, 0
    %v1399 = vsel %vm1358, %v1323, 0
    %v1402 = vsel %vm1358, %v1324, 0
    %v1405 = vsel %vm1358, %v1325, 0
    %1407 = vmatprep.subr.bf16.mxu0 0
    %1408 = vmatpush1.bf16.msra.mxu0 %v1350
    %1409 = vmatprep.subr.bf16.mxu0 0
    %1410 = vmatpush1.bf16.msra.mxu0 %v1351
    %1411 = vmatprep.subr.bf16.mxu0 0
    %1412 = vmatpush1.bf16.msra.mxu0 %v1352
    %1413 = vmatprep.subr.bf16.mxu0 0
    %1414 = vmatpush1.bf16.msra.mxu0 %v1353
    %1415 = vmatprep.subr.bf16.mxu0 0
    %1416 = vmatpush1.bf16.msra.mxu0 0
    %1417 = vmatprep.subr.bf16.mxu0 0
    %1418 = vmatpush1.bf16.msra.mxu0 0
    %1419 = vmatprep.subr.bf16.mxu0 0
    %1420 = vmatpush1.bf16.msra.mxu0 0
    %1421 = vmatprep.subr.bf16.mxu0 0
    %1422 = vmatpush1.bf16.msra.mxu0 0
    %1423 = vmatprep.subr.bf16.mxu0 0
    %1424 = vmatpush1.bf16.msra.mxu0 0
    %1425 = vmatprep.subr.bf16.mxu0 0
    %1426 = vmatpush1.bf16.msra.mxu0 0
    %1427 = vmatprep.subr.bf16.mxu0 0
    %1428 = vmatpush1.bf16.msra.mxu0 0
    %1429 = vmatprep.subr.bf16.mxu0 0
    %1430 = vmatpush1.bf16.msra.mxu0 0
    %1431 = vmatprep.subr.bf16.mxu0 0
    %1432 = vmatpush1.bf16.msra.mxu0 0
    %1433 = vmatprep.subr.bf16.mxu0 0
    %1434 = vmatpush1.bf16.msra.mxu0 0
    %1435 = vmatprep.subr.bf16.mxu0 0
    %1436 = vmatpush1.bf16.msra.mxu0 0
    %1437 = vmatprep.subr.bf16.mxu0 0
    %1438 = vmatpush1.bf16.msra.mxu0 0
    %1439 = vmatprep.mubr.bf16.mxu0 0
    %1440 = vmatmul.mubr.bf16.gmra.mrb[0].mxu0 %v1360
    %v1441 = vpop.f32.mrb[0].mxu0
    %v1442 = vadd.f32 0.0, %v1441
    %v1443 = vpop.f32.mrb[0].mxu0
    %v1444 = vpop.f32.mrb[0].mxu0
    %v1445 = vadd.f32 0.0, %v1444
    %v1446 = vpop.f32.mrb[0].mxu0
    %1447 = vmatprep.mubr.bf16.mxu0 0
    %1448 = vmatmul.mubr.bf16.gmra.mrb[0].mxu0 %v1363
    %v1449 = vpop.f32.mrb[0].mxu0
    %v1450 = vadd.f32 0.0, %v1449
    %v1451 = vpop.f32.mrb[0].mxu0
    %v1452 = vpop.f32.mrb[0].mxu0
    %v1453 = vadd.f32 0.0, %v1452
    %v1454 = vpop.f32.mrb[0].mxu0
    %1455 = vmatprep.mubr.bf16.mxu0 0
    %1456 = vmatmul.mubr.bf16.gmra.mrb[0].mxu0 %v1366
    %v1457 = vpop.f32.mrb[0].mxu0
    %v1458 = vadd.f32 0.0, %v1457
    %v1459 = vpop.f32.mrb[0].mxu0
    %v1460 = vpop.f32.mrb[0].mxu0
    %v1461 = vadd.f32 0.0, %v1460
    %v1462 = vpop.f32.mrb[0].mxu0
    %1463 = vmatprep.mubr.bf16.mxu0 0
    %1464 = vmatmul.mubr.bf16.gmra.mrb[0].mxu0 %v1369
    %v1465 = vpop.f32.mrb[0].mxu0
    %v1466 = vadd.f32 0.0, %v1465
    %v1467 = vpop.f32.mrb[0].mxu0
    %v1468 = vpop.f32.mrb[0].mxu0
    %v1469 = vadd.f32 0.0, %v1468
    %v1470 = vpop.f32.mrb[0].mxu0
    %1471 = vmatprep.mubr.bf16.mxu0 0
    %1472 = vmatmul.mubr.bf16.gmra.mrb[0].mxu0 %v1372
    %v1473 = vpop.f32.mrb[0].mxu0
    %v1474 = vadd.f32 0.0, %v1473
    %v1475 = vpop.f32.mrb[0].mxu0
    %v1476 = vpop.f32.mrb[0].mxu0
    %v1477 = vadd.f32 0.0, %v1476
    %v1478 = vpop.f32.mrb[0].mxu0
    %1479 = vmatprep.mubr.bf16.mxu0 0
    %1480 = vmatmul.mubr.bf16.gmra.mrb[0].mxu0 %v1375
    %v1481 = vpop.f32.mrb[0].mxu0
    %v1482 = vadd.f32 0.0, %v1481
    %v1483 = vpop.f32.mrb[0].mxu0
    %v1484 = vpop.f32.mrb[0].mxu0
    %v1485 = vadd.f32 0.0, %v1484
    %v1486 = vpop.f32.mrb[0].mxu0
    %1487 = vmatprep.mubr.bf16.mxu0 0
    %1488 = vmatmul.mubr.bf16.gmra.mrb[0].mxu0 %v1378
    %v1489 = vpop.f32.mrb[0].mxu0
    %v1490 = vadd.f32 0.0, %v1489
    %v1491 = vpop.f32.mrb[0].mxu0
    %v1492 = vpop.f32.mrb[0].mxu0
    %v1493 = vadd.f32 0.0, %v1492
    %v1494 = vpop.f32.mrb[0].mxu0
    %1495 = vmatprep.mubr.bf16.mxu0 0
    %1496 = vmatmul.mubr.bf16.gmra.mrb[0].mxu0 %v1381
    %v1497 = vpop.f32.mrb[0].mxu0
    %v1498 = vadd.f32 0.0, %v1497
    %v1499 = vpop.f32.mrb[0].mxu0
    %v1500 = vpop.f32.mrb[0].mxu0
    %v1501 = vadd.f32 0.0, %v1500
    %v1502 = vpop.f32.mrb[0].mxu0
    %1503 = vmatprep.mubr.bf16.mxu0 0
    %1504 = vmatmul.mubr.bf16.gmra.mrb[0].mxu0 %v1384
    %v1505 = vpop.f32.mrb[0].mxu0
    %v1506 = vadd.f32 0.0, %v1505
    %v1507 = vpop.f32.mrb[0].mxu0
    %v1508 = vpop.f32.mrb[0].mxu0
    %v1509 = vadd.f32 0.0, %v1508
    %v1510 = vpop.f32.mrb[0].mxu0
    %1511 = vmatprep.mubr.bf16.mxu0 0
    %1512 = vmatmul.mubr.bf16.gmra.mrb[0].mxu0 %v1387
    %v1513 = vpop.f32.mrb[0].mxu0
    %v1514 = vadd.f32 0.0, %v1513
    %v1515 = vpop.f32.mrb[0].mxu0
    %v1516 = vpop.f32.mrb[0].mxu0
    %v1517 = vadd.f32 0.0, %v1516
    %v1518 = vpop.f32.mrb[0].mxu0
    %1519 = vmatprep.mubr.bf16.mxu0 0
    %1520 = vmatmul.mubr.bf16.gmra.mrb[0].mxu0 %v1390
    %v1521 = vpop.f32.mrb[0].mxu0
    %v1522 = vadd.f32 0.0, %v1521
    %v1523 = vpop.f32.mrb[0].mxu0
    %v1524 = vpop.f32.mrb[0].mxu0
    %v1525 = vadd.f32 0.0, %v1524
    %v1526 = vpop.f32.mrb[0].mxu0
    %1527 = vmatprep.mubr.bf16.mxu0 0
    %1528 = vmatmul.mubr.bf16.gmra.mrb[0].mxu0 %v1393
    %v1529 = vpop.f32.mrb[0].mxu0
    %v1530 = vadd.f32 0.0, %v1529
    %v1531 = vpop.f32.mrb[0].mxu0
    %v1532 = vpop.f32.mrb[0].mxu0
    %v1533 = vadd.f32 0.0, %v1532
    %v1534 = vpop.f32.mrb[0].mxu0
    %1535 = vmatprep.mubr.bf16.mxu0 0
    %1536 = vmatmul.mubr.bf16.gmra.mrb[0].mxu0 %v1396
    %v1537 = vpop.f32.mrb[0].mxu0
    %v1538 = vadd.f32 0.0, %v1537
    %v1539 = vpop.f32.mrb[0].mxu0
    %v1540 = vpop.f32.mrb[0].mxu0
    %v1541 = vadd.f32 0.0, %v1540
    %v1542 = vpop.f32.mrb[0].mxu0
    %1543 = vmatprep.mubr.bf16.mxu0 0
    %1544 = vmatmul.mubr.bf16.gmra.mrb[0].mxu0 %v1399
    %v1545 = vpop.f32.mrb[0].mxu0
    %v1546 = vadd.f32 0.0, %v1545
    %v1547 = vpop.f32.mrb[0].mxu0
    %v1548 = vpop.f32.mrb[0].mxu0
    %v1549 = vadd.f32 0.0, %v1548
    %v1550 = vpop.f32.mrb[0].mxu0
    %1551 = vmatprep.mubr.bf16.mxu0 0
    %1552 = vmatmul.mubr.bf16.gmra.mrb[0].mxu0 %v1402
    %v1553 = vpop.f32.mrb[0].mxu0
    %v1554 = vadd.f32 0.0, %v1553
    %v1555 = vpop.f32.mrb[0].mxu0
    %v1556 = vpop.f32.mrb[0].mxu0
    %v1557 = vadd.f32 0.0, %v1556
    %v1558 = vpop.f32.mrb[0].mxu0
    %1559 = vmatprep.mubr.bf16.mxu0 0
    %1560 = vmatmul.mubr.bf16.gmra.mrb[0].mxu0 %v1405
    %v1561 = vpop.f32.mrb[0].mxu0
    %v1562 = vadd.f32 0.0, %v1561
    %v1563 = vpop.f32.mrb[0].mxu0
    %v1564 = vpop.f32.mrb[0].mxu0
    %v1565 = vadd.f32 0.0, %v1564
    %v1566 = vpop.f32.mrb[0].mxu0
    %1567 = vdwg.mxu0
    %v1568 = vlaneseq
    %v1569 = vshrl.u32 %v1568, 7
    %v1570 = vsub.s32 0, %v1569
    %v1571 = vrot.slane %v480, %v1570
    %1573 = vbcast.lane.b32.xlu0 %v1571, 256
    %v1574 = vpop.permute.xlu0 %1573
    %s1576 = sor.u32 256, 8
    %1577 = vbcast.lane.b32.xlu0 %v1571, %s1576
    %v1578 = vpop.permute.xlu0 %1577
    %v1579 = vlaneseq
    %v1580 = vshrl.u32 %v1579, 7
    %v1581 = vsub.s32 1, %v1580
    %v1582 = vrot.slane %v480, %v1581
    %1584 = vbcast.lane.b32.xlu0 %v1582, 256
    %v1585 = vpop.permute.xlu0 %1584
    %s1587 = sor.u32 256, 8
    %1588 = vbcast.lane.b32.xlu0 %v1582, %s1587
    %v1589 = vpop.permute.xlu0 %1588
    %v1590 = vlaneseq
    %v1591 = vshrl.u32 %v1590, 7
    %v1592 = vsub.s32 2, %v1591
    %v1593 = vrot.slane %v480, %v1592
    %1595 = vbcast.lane.b32.xlu0 %v1593, 256
    %v1596 = vpop.permute.xlu0 %1595
    %s1598 = sor.u32 256, 8
    %1599 = vbcast.lane.b32.xlu0 %v1593, %s1598
    %v1600 = vpop.permute.xlu0 %1599
    %v1601 = vlaneseq
    %v1602 = vshrl.u32 %v1601, 7
    %v1603 = vsub.s32 3, %v1602
    %v1604 = vrot.slane %v480, %v1603
    %1606 = vbcast.lane.b32.xlu0 %v1604, 256
    %v1607 = vpop.permute.xlu0 %1606
    %s1609 = sor.u32 256, 8
    %1610 = vbcast.lane.b32.xlu0 %v1604, %s1609
    %v1611 = vpop.permute.xlu0 %1610
    %v1612 = vlaneseq
    %v1613 = vshrl.u32 %v1612, 7
    %v1614 = vsub.s32 4, %v1613
    %v1615 = vrot.slane %v480, %v1614
    %1617 = vbcast.lane.b32.xlu0 %v1615, 256
    %v1618 = vpop.permute.xlu0 %1617
    %s1620 = sor.u32 256, 8
    %1621 = vbcast.lane.b32.xlu0 %v1615, %s1620
    %v1622 = vpop.permute.xlu0 %1621
    %v1623 = vlaneseq
    %v1624 = vshrl.u32 %v1623, 7
    %v1625 = vsub.s32 5, %v1624
    %v1626 = vrot.slane %v480, %v1625
    %1628 = vbcast.lane.b32.xlu0 %v1626, 256
    %v1629 = vpop.permute.xlu0 %1628
    %s1631 = sor.u32 256, 8
    %1632 = vbcast.lane.b32.xlu0 %v1626, %s1631
    %v1633 = vpop.permute.xlu0 %1632
    %v1634 = vlaneseq
    %v1635 = vshrl.u32 %v1634, 7
    %v1636 = vsub.s32 6, %v1635
    %v1637 = vrot.slane %v480, %v1636
    %1639 = vbcast.lane.b32.xlu0 %v1637, 256
    %v1640 = vpop.permute.xlu0 %1639
    %s1642 = sor.u32 256, 8
    %1643 = vbcast.lane.b32.xlu0 %v1637, %s1642
    %v1644 = vpop.permute.xlu0 %1643
    %v1645 = vlaneseq
    %v1646 = vshrl.u32 %v1645, 7
    %v1647 = vsub.s32 7, %v1646
    %v1648 = vrot.slane %v480, %v1647
    %1650 = vbcast.lane.b32.xlu0 %v1648, 256
    %v1651 = vpop.permute.xlu0 %1650
    %s1653 = sor.u32 256, 8
    %1654 = vbcast.lane.b32.xlu0 %v1648, %s1653
    %v1655 = vpop.permute.xlu0 %1654
    %v1656 = vlaneseq
    %v1657 = vshrl.u32 %v1656, 7
    %v1658 = vsub.s32 0, %v1657
    %v1659 = vrot.slane %v481, %v1658
    %1661 = vbcast.lane.b32.xlu0 %v1659, 256
    %v1662 = vpop.permute.xlu0 %1661
    %s1664 = sor.u32 256, 8
    %1665 = vbcast.lane.b32.xlu0 %v1659, %s1664
    %v1666 = vpop.permute.xlu0 %1665
    %v1667 = vlaneseq
    %v1668 = vshrl.u32 %v1667, 7
    %v1669 = vsub.s32 1, %v1668
    %v1670 = vrot.slane %v481, %v1669
    %1672 = vbcast.lane.b32.xlu0 %v1670, 256
    %v1673 = vpop.permute.xlu0 %1672
    %s1675 = sor.u32 256, 8
    %1676 = vbcast.lane.b32.xlu0 %v1670, %s1675
    %v1677 = vpop.permute.xlu0 %1676
    %v1678 = vlaneseq
    %v1679 = vshrl.u32 %v1678, 7
    %v1680 = vsub.s32 2, %v1679
    %v1681 = vrot.slane %v481, %v1680
    %1683 = vbcast.lane.b32.xlu0 %v1681, 256
    %v1684 = vpop.permute.xlu0 %1683
    %s1686 = sor.u32 256, 8
    %1687 = vbcast.lane.b32.xlu0 %v1681, %s1686
    %v1688 = vpop.permute.xlu0 %1687
    %v1689 = vlaneseq
    %v1690 = vshrl.u32 %v1689, 7
    %v1691 = vsub.s32 3, %v1690
    %v1692 = vrot.slane %v481, %v1691
    %1694 = vbcast.lane.b32.xlu0 %v1692, 256
    %v1695 = vpop.permute.xlu0 %1694
    %s1697 = sor.u32 256, 8
    %1698 = vbcast.lane.b32.xlu0 %v1692, %s1697
    %v1699 = vpop.permute.xlu0 %1698
    %v1700 = vlaneseq
    %v1701 = vshrl.u32 %v1700, 7
    %v1702 = vsub.s32 4, %v1701
    %v1703 = vrot.slane %v481, %v1702
    %1705 = vbcast.lane.b32.xlu0 %v1703, 256
    %v1706 = vpop.permute.xlu0 %1705
    %s1708 = sor.u32 256, 8
    %1709 = vbcast.lane.b32.xlu0 %v1703, %s1708
    %v1710 = vpop.permute.xlu0 %1709
    %v1711 = vlaneseq
    %v1712 = vshrl.u32 %v1711, 7
    %v1713 = vsub.s32 5, %v1712
    %v1714 = vrot.slane %v481, %v1713
    %1716 = vbcast.lane.b32.xlu0 %v1714, 256
    %v1717 = vpop.permute.xlu0 %1716
    %s1719 = sor.u32 256, 8
    %1720 = vbcast.lane.b32.xlu0 %v1714, %s1719
    %v1721 = vpop.permute.xlu0 %1720
    %v1722 = vlaneseq
    %v1723 = vshrl.u32 %v1722, 7
    %v1724 = vsub.s32 6, %v1723
    %v1725 = vrot.slane %v481, %v1724
    %1727 = vbcast.lane.b32.xlu0 %v1725, 256
    %v1728 = vpop.permute.xlu0 %1727
    %s1730 = sor.u32 256, 8
    %1731 = vbcast.lane.b32.xlu0 %v1725, %s1730
    %v1732 = vpop.permute.xlu0 %1731
    %v1733 = vlaneseq
    %v1734 = vshrl.u32 %v1733, 7
    %v1735 = vsub.s32 7, %v1734
    %v1736 = vrot.slane %v481, %v1735
    %1738 = vbcast.lane.b32.xlu0 %v1736, 256
    %v1739 = vpop.permute.xlu0 %1738
    %s1741 = sor.u32 256, 8
    %1742 = vbcast.lane.b32.xlu0 %v1736, %s1741
    %v1743 = vpop.permute.xlu0 %1742
    %vm1744 = vcmp.gt.f32.partialorder %v1574, 0.5
    %vm1745 = vcmp.gt.f32.partialorder %v1578, 0.5
    %vm1746 = vcmp.gt.f32.partialorder %v1585, 0.5
    %vm1747 = vcmp.gt.f32.partialorder %v1589, 0.5
    %vm1748 = vcmp.gt.f32.partialorder %v1596, 0.5
    %vm1749 = vcmp.gt.f32.partialorder %v1600, 0.5
    %vm1750 = vcmp.gt.f32.partialorder %v1607, 0.5
    %vm1751 = vcmp.gt.f32.partialorder %v1611, 0.5
    %vm1752 = vcmp.gt.f32.partialorder %v1618, 0.5
    %vm1753 = vcmp.gt.f32.partialorder %v1622, 0.5
    %vm1754 = vcmp.gt.f32.partialorder %v1629, 0.5
    %vm1755 = vcmp.gt.f32.partialorder %v1633, 0.5
    %vm1756 = vcmp.gt.f32.partialorder %v1640, 0.5
    %vm1757 = vcmp.gt.f32.partialorder %v1644, 0.5
    %vm1758 = vcmp.gt.f32.partialorder %v1651, 0.5
    %vm1759 = vcmp.gt.f32.partialorder %v1655, 0.5
    %vm1760 = vcmp.gt.f32.partialorder %v1662, 0.5
    %vm1761 = vcmp.gt.f32.partialorder %v1666, 0.5
    %vm1762 = vcmp.gt.f32.partialorder %v1673, 0.5
    %vm1763 = vcmp.gt.f32.partialorder %v1677, 0.5
    %vm1764 = vcmp.gt.f32.partialorder %v1684, 0.5
    %vm1765 = vcmp.gt.f32.partialorder %v1688, 0.5
    %vm1766 = vcmp.gt.f32.partialorder %v1695, 0.5
    %vm1767 = vcmp.gt.f32.partialorder %v1699, 0.5
    %vm1768 = vcmp.gt.f32.partialorder %v1706, 0.5
    %vm1769 = vcmp.gt.f32.partialorder %v1710, 0.5
    %vm1770 = vcmp.gt.f32.partialorder %v1717, 0.5
    %vm1771 = vcmp.gt.f32.partialorder %v1721, 0.5
    %vm1772 = vcmp.gt.f32.partialorder %v1728, 0.5
    %vm1773 = vcmp.gt.f32.partialorder %v1732, 0.5
    %vm1774 = vcmp.gt.f32.partialorder %v1739, 0.5
    %vm1775 = vcmp.gt.f32.partialorder %v1743, 0.5
    %v1776 = vsel %vm1744, 1, 0
    %v1777 = vsel %vm1745, 1, 0
    %v1778 = vsel %vm1746, 1, 0
    %v1779 = vsel %vm1747, 1, 0
    %v1780 = vsel %vm1748, 1, 0
    %v1781 = vsel %vm1749, 1, 0
    %v1782 = vsel %vm1750, 1, 0
    %v1783 = vsel %vm1751, 1, 0
    %v1784 = vsel %vm1752, 1, 0
    %v1785 = vsel %vm1753, 1, 0
    %v1786 = vsel %vm1754, 1, 0
    %v1787 = vsel %vm1755, 1, 0
    %v1788 = vsel %vm1756, 1, 0
    %v1789 = vsel %vm1757, 1, 0
    %v1790 = vsel %vm1758, 1, 0
    %v1791 = vsel %vm1759, 1, 0
    %v1792 = vsel %vm1760, 1, 0
    %v1793 = vsel %vm1761, 1, 0
    %v1794 = vsel %vm1762, 1, 0
    %v1795 = vsel %vm1763, 1, 0
    %v1796 = vsel %vm1764, 1, 0
    %v1797 = vsel %vm1765, 1, 0
    %v1798 = vsel %vm1766, 1, 0
    %v1799 = vsel %vm1767, 1, 0
    %v1800 = vsel %vm1768, 1, 0
    %v1801 = vsel %vm1769, 1, 0
    %v1802 = vsel %vm1770, 1, 0
    %v1803 = vsel %vm1771, 1, 0
    %v1804 = vsel %vm1772, 1, 0
    %v1805 = vsel %vm1773, 1, 0
    %v1806 = vsel %vm1774, 1, 0
    %v1807 = vsel %vm1775, 1, 0
    %vm1808 = vcmp.eq.s32.totalorder %v1776, 1
    %vm1809 = vcmp.eq.s32.totalorder %v1777, 1
    %vm1810 = vcmp.eq.s32.totalorder %v1778, 1
    %vm1811 = vcmp.eq.s32.totalorder %v1779, 1
    %vm1812 = vcmp.eq.s32.totalorder %v1780, 1
    %vm1813 = vcmp.eq.s32.totalorder %v1781, 1
    %vm1814 = vcmp.eq.s32.totalorder %v1782, 1
    %vm1815 = vcmp.eq.s32.totalorder %v1783, 1
    %vm1816 = vcmp.eq.s32.totalorder %v1784, 1
    %vm1817 = vcmp.eq.s32.totalorder %v1785, 1
    %vm1818 = vcmp.eq.s32.totalorder %v1786, 1
    %vm1819 = vcmp.eq.s32.totalorder %v1787, 1
    %vm1820 = vcmp.eq.s32.totalorder %v1788, 1
    %vm1821 = vcmp.eq.s32.totalorder %v1789, 1
    %vm1822 = vcmp.eq.s32.totalorder %v1790, 1
    %vm1823 = vcmp.eq.s32.totalorder %v1791, 1
    %vm1824 = vcmp.eq.s32.totalorder %v1792, 1
    %vm1825 = vcmp.eq.s32.totalorder %v1793, 1
    %vm1826 = vcmp.eq.s32.totalorder %v1794, 1
    %vm1827 = vcmp.eq.s32.totalorder %v1795, 1
    %vm1828 = vcmp.eq.s32.totalorder %v1796, 1
    %vm1829 = vcmp.eq.s32.totalorder %v1797, 1
    %vm1830 = vcmp.eq.s32.totalorder %v1798, 1
    %vm1831 = vcmp.eq.s32.totalorder %v1799, 1
    %vm1832 = vcmp.eq.s32.totalorder %v1800, 1
    %vm1833 = vcmp.eq.s32.totalorder %v1801, 1
    %vm1834 = vcmp.eq.s32.totalorder %v1802, 1
    %vm1835 = vcmp.eq.s32.totalorder %v1803, 1
    %vm1836 = vcmp.eq.s32.totalorder %v1804, 1
    %vm1837 = vcmp.eq.s32.totalorder %v1805, 1
    %vm1838 = vcmp.eq.s32.totalorder %v1806, 1
    %vm1839 = vcmp.eq.s32.totalorder %v1807, 1
    %v1840 = vsel %vm1808, -1e+12, %v1442
    %v1841 = vsel %vm1809, -1e+12, %v1445
    %v1842 = vsel %vm1810, -1e+12, %v1450
    %v1843 = vsel %vm1811, -1e+12, %v1453
    %v1844 = vsel %vm1812, -1e+12, %v1458
    %v1845 = vsel %vm1813, -1e+12, %v1461
    %v1846 = vsel %vm1814, -1e+12, %v1466
    %v1847 = vsel %vm1815, -1e+12, %v1469
    %v1848 = vsel %vm1816, -1e+12, %v1474
    %v1849 = vsel %vm1817, -1e+12, %v1477
    %v1850 = vsel %vm1818, -1e+12, %v1482
    %v1851 = vsel %vm1819, -1e+12, %v1485
    %v1852 = vsel %vm1820, -1e+12, %v1490
    %v1853 = vsel %vm1821, -1e+12, %v1493
    %v1854 = vsel %vm1822, -1e+12, %v1498
    %v1855 = vsel %vm1823, -1e+12, %v1501
    %v1856 = vsel %vm1824, -1e+12, %v1506
    %v1857 = vsel %vm1825, -1e+12, %v1509
    %v1858 = vsel %vm1826, -1e+12, %v1514
    %v1859 = vsel %vm1827, -1e+12, %v1517
    %v1860 = vsel %vm1828, -1e+12, %v1522
    %v1861 = vsel %vm1829, -1e+12, %v1525
    %v1862 = vsel %vm1830, -1e+12, %v1530
    %v1863 = vsel %vm1831, -1e+12, %v1533
    %v1864 = vsel %vm1832, -1e+12, %v1538
    %v1865 = vsel %vm1833, -1e+12, %v1541
    %v1866 = vsel %vm1834, -1e+12, %v1546
    %v1867 = vsel %vm1835, -1e+12, %v1549
    %v1868 = vsel %vm1836, -1e+12, %v1554
    %v1869 = vsel %vm1837, -1e+12, %v1557
    %v1870 = vsel %vm1838, -1e+12, %v1562
    %v1871 = vsel %vm1839, -1e+12, %v1565
    %vm1872 = vcmask 15360
    %v1873 = vsel %vm1872, %v1840, -inf
    %v1874 = vsel %vm1872, %v1841, -inf
    %v1875 = vmax.f32 %v1873, %v1874
    %v1876 = vrot.slane %v1875, 4
    %v1877 = vmax.f32 %v1875, %v1876
    %v1878 = vrot.slane %v1877, 2
    %v1879 = vmax.f32 %v1877, %v1878
    %v1880 = vrot.slane %v1879, 1
    %v1881 = vmax.f32 %v1879, %v1880
    %v1882 = vsel %vm1872, %v1842, -inf
    %v1883 = vsel %vm1872, %v1843, -inf
    %v1884 = vmax.f32 %v1882, %v1883
    %v1885 = vrot.slane %v1884, 4
    %v1886 = vmax.f32 %v1884, %v1885
    %v1887 = vrot.slane %v1886, 2
    %v1888 = vmax.f32 %v1886, %v1887
    %v1889 = vrot.slane %v1888, 1
    %v1890 = vmax.f32 %v1888, %v1889
    %v1891 = vsel %vm1872, %v1844, -inf
    %v1892 = vsel %vm1872, %v1845, -inf
    %v1893 = vmax.f32 %v1891, %v1892
    %v1894 = vrot.slane %v1893, 4
    %v1895 = vmax.f32 %v1893, %v1894
    %v1896 = vrot.slane %v1895, 2
    %v1897 = vmax.f32 %v1895, %v1896
    %v1898 = vrot.slane %v1897, 1
    %v1899 = vmax.f32 %v1897, %v1898
    %v1900 = vsel %vm1872, %v1846, -inf
    %v1901 = vsel %vm1872, %v1847, -inf
    %v1902 = vmax.f32 %v1900, %v1901
    %v1903 = vrot.slane %v1902, 4
    %v1904 = vmax.f32 %v1902, %v1903
    %v1905 = vrot.slane %v1904, 2
    %v1906 = vmax.f32 %v1904, %v1905
    %v1907 = vrot.slane %v1906, 1
    %v1908 = vmax.f32 %v1906, %v1907
    %v1909 = vsel %vm1872, %v1848, -inf
    %v1910 = vsel %vm1872, %v1849, -inf
    %v1911 = vmax.f32 %v1909, %v1910
    %v1912 = vrot.slane %v1911, 4
    %v1913 = vmax.f32 %v1911, %v1912
    %v1914 = vrot.slane %v1913, 2
    %v1915 = vmax.f32 %v1913, %v1914
    %v1916 = vrot.slane %v1915, 1
    %v1917 = vmax.f32 %v1915, %v1916
    %v1918 = vsel %vm1872, %v1850, -inf
    %v1919 = vsel %vm1872, %v1851, -inf
    %v1920 = vmax.f32 %v1918, %v1919
    %v1921 = vrot.slane %v1920, 4
    %v1922 = vmax.f32 %v1920, %v1921
    %v1923 = vrot.slane %v1922, 2
    %v1924 = vmax.f32 %v1922, %v1923
    %v1925 = vrot.slane %v1924, 1
    %v1926 = vmax.f32 %v1924, %v1925
    %v1927 = vsel %vm1872, %v1852, -inf
    %v1928 = vsel %vm1872, %v1853, -inf
    %v1929 = vmax.f32 %v1927, %v1928
    %v1930 = vrot.slane %v1929, 4
    %v1931 = vmax.f32 %v1929, %v1930
    %v1932 = vrot.slane %v1931, 2
    %v1933 = vmax.f32 %v1931, %v1932
    %v1934 = vrot.slane %v1933, 1
    %v1935 = vmax.f32 %v1933, %v1934
    %v1936 = vsel %vm1872, %v1854, -inf
    %v1937 = vsel %vm1872, %v1855, -inf
    %v1938 = vmax.f32 %v1936, %v1937
    %v1939 = vrot.slane %v1938, 4
    %v1940 = vmax.f32 %v1938, %v1939
    %v1941 = vrot.slane %v1940, 2
    %v1942 = vmax.f32 %v1940, %v1941
    %v1943 = vrot.slane %v1942, 1
    %v1944 = vmax.f32 %v1942, %v1943
    %v1945 = vsel %vm1872, %v1856, -inf
    %v1946 = vsel %vm1872, %v1857, -inf
    %v1947 = vmax.f32 %v1945, %v1946
    %v1948 = vrot.slane %v1947, 4
    %v1949 = vmax.f32 %v1947, %v1948
    %v1950 = vrot.slane %v1949, 2
    %v1951 = vmax.f32 %v1949, %v1950
    %v1952 = vrot.slane %v1951, 1
    %v1953 = vmax.f32 %v1951, %v1952
    %v1954 = vsel %vm1872, %v1858, -inf
    %v1955 = vsel %vm1872, %v1859, -inf
    %v1956 = vmax.f32 %v1954, %v1955
    %v1957 = vrot.slane %v1956, 4
    %v1958 = vmax.f32 %v1956, %v1957
    %v1959 = vrot.slane %v1958, 2
    %v1960 = vmax.f32 %v1958, %v1959
    %v1961 = vrot.slane %v1960, 1
    %v1962 = vmax.f32 %v1960, %v1961
    %v1963 = vsel %vm1872, %v1860, -inf
    %v1964 = vsel %vm1872, %v1861, -inf
    %v1965 = vmax.f32 %v1963, %v1964
    %v1966 = vrot.slane %v1965, 4
    %v1967 = vmax.f32 %v1965, %v1966
    %v1968 = vrot.slane %v1967, 2
    %v1969 = vmax.f32 %v1967, %v1968
    %v1970 = vrot.slane %v1969, 1
    %v1971 = vmax.f32 %v1969, %v1970
    %v1972 = vsel %vm1872, %v1862, -inf
    %v1973 = vsel %vm1872, %v1863, -inf
    %v1974 = vmax.f32 %v1972, %v1973
    %v1975 = vrot.slane %v1974, 4
    %v1976 = vmax.f32 %v1974, %v1975
    %v1977 = vrot.slane %v1976, 2
    %v1978 = vmax.f32 %v1976, %v1977
    %v1979 = vrot.slane %v1978, 1
    %v1980 = vmax.f32 %v1978, %v1979
    %v1981 = vsel %vm1872, %v1864, -inf
    %v1982 = vsel %vm1872, %v1865, -inf
    %v1983 = vmax.f32 %v1981, %v1982
    %v1984 = vrot.slane %v1983, 4
    %v1985 = vmax.f32 %v1983, %v1984
    %v1986 = vrot.slane %v1985, 2
    %v1987 = vmax.f32 %v1985, %v1986
    %v1988 = vrot.slane %v1987, 1
    %v1989 = vmax.f32 %v1987, %v1988
    %v1990 = vsel %vm1872, %v1866, -inf
    %v1991 = vsel %vm1872, %v1867, -inf
    %v1992 = vmax.f32 %v1990, %v1991
    %v1993 = vrot.slane %v1992, 4
    %v1994 = vmax.f32 %v1992, %v1993
    %v1995 = vrot.slane %v1994, 2
    %v1996 = vmax.f32 %v1994, %v1995
    %v1997 = vrot.slane %v1996, 1
    %v1998 = vmax.f32 %v1996, %v1997
    %v1999 = vsel %vm1872, %v1868, -inf
    %v2000 = vsel %vm1872, %v1869, -inf
    %v2001 = vmax.f32 %v1999, %v2000
    %v2002 = vrot.slane %v2001, 4
    %v2003 = vmax.f32 %v2001, %v2002
    %v2004 = vrot.slane %v2003, 2
    %v2005 = vmax.f32 %v2003, %v2004
    %v2006 = vrot.slane %v2005, 1
    %v2007 = vmax.f32 %v2005, %v2006
    %v2008 = vsel %vm1872, %v1870, -inf
    %v2009 = vsel %vm1872, %v1871, -inf
    %v2010 = vmax.f32 %v2008, %v2009
    %v2011 = vrot.slane %v2010, 4
    %v2012 = vmax.f32 %v2010, %v2011
    %v2013 = vrot.slane %v2012, 2
    %v2014 = vmax.f32 %v2012, %v2013
    %v2015 = vrot.slane %v2014, 1
    %v2016 = vmax.f32 %v2014, %v2015
    %v2017 = vsub.f32 %v1840, %v1881
    %v2018 = vsub.f32 %v1841, %v1881
    %v2019 = vsub.f32 %v1842, %v1890
    %v2020 = vsub.f32 %v1843, %v1890
    %v2021 = vsub.f32 %v1844, %v1899
    %v2022 = vsub.f32 %v1845, %v1899
    %v2023 = vsub.f32 %v1846, %v1908
    %v2024 = vsub.f32 %v1847, %v1908
    %v2025 = vsub.f32 %v1848, %v1917
    %v2026 = vsub.f32 %v1849, %v1917
    %v2027 = vsub.f32 %v1850, %v1926
    %v2028 = vsub.f32 %v1851, %v1926
    %v2029 = vsub.f32 %v1852, %v1935
    %v2030 = vsub.f32 %v1853, %v1935
    %v2031 = vsub.f32 %v1854, %v1944
    %v2032 = vsub.f32 %v1855, %v1944
    %v2033 = vsub.f32 %v1856, %v1953
    %v2034 = vsub.f32 %v1857, %v1953
    %v2035 = vsub.f32 %v1858, %v1962
    %v2036 = vsub.f32 %v1859, %v1962
    %v2037 = vsub.f32 %v1860, %v1971
    %v2038 = vsub.f32 %v1861, %v1971
    %v2039 = vsub.f32 %v1862, %v1980
    %v2040 = vsub.f32 %v1863, %v1980
    %v2041 = vsub.f32 %v1864, %v1989
    %v2042 = vsub.f32 %v1865, %v1989
    %v2043 = vsub.f32 %v1866, %v1998
    %v2044 = vsub.f32 %v1867, %v1998
    %v2045 = vsub.f32 %v1868, %v2007
    %v2046 = vsub.f32 %v1869, %v2007
    %v2047 = vsub.f32 %v1870, %v2016
    %v2048 = vsub.f32 %v1871, %v2016
    %v2049 = vmul.f32 %v2017, 1.442695
    %v2050 = vpow.pop %v2049
    %v2051 = vmul.f32 %v2018, 1.442695
    %v2052 = vpow.pop %v2051
    %v2053 = vmul.f32 %v2019, 1.442695
    %v2054 = vpow.pop %v2053
    %v2055 = vmul.f32 %v2020, 1.442695
    %v2056 = vpow.pop %v2055
    %v2057 = vmul.f32 %v2021, 1.442695
    %v2058 = vpow.pop %v2057
    %v2059 = vmul.f32 %v2022, 1.442695
    %v2060 = vpow.pop %v2059
    %v2061 = vmul.f32 %v2023, 1.442695
    %v2062 = vpow.pop %v2061
    %v2063 = vmul.f32 %v2024, 1.442695
    %v2064 = vpow.pop %v2063
    %v2065 = vmul.f32 %v2025, 1.442695
    %v2066 = vpow.pop %v2065
    %v2067 = vmul.f32 %v2026, 1.442695
    %v2068 = vpow.pop %v2067
    %v2069 = vmul.f32 %v2027, 1.442695
    %v2070 = vpow.pop %v2069
    %v2071 = vmul.f32 %v2028, 1.442695
    %v2072 = vpow.pop %v2071
    %v2073 = vmul.f32 %v2029, 1.442695
    %v2074 = vpow.pop %v2073
    %v2075 = vmul.f32 %v2030, 1.442695
    %v2076 = vpow.pop %v2075
    %v2077 = vmul.f32 %v2031, 1.442695
    %v2078 = vpow.pop %v2077
    %v2079 = vmul.f32 %v2032, 1.442695
    %v2080 = vpow.pop %v2079
    %v2081 = vmul.f32 %v2033, 1.442695
    %v2082 = vpow.pop %v2081
    %v2083 = vmul.f32 %v2034, 1.442695
    %v2084 = vpow.pop %v2083
    %v2085 = vmul.f32 %v2035, 1.442695
    %v2086 = vpow.pop %v2085
    %v2087 = vmul.f32 %v2036, 1.442695
    %v2088 = vpow.pop %v2087
    %v2089 = vmul.f32 %v2037, 1.442695
    %v2090 = vpow.pop %v2089
    %v2091 = vmul.f32 %v2038, 1.442695
    %v2092 = vpow.pop %v2091
    %v2093 = vmul.f32 %v2039, 1.442695
    %v2094 = vpow.pop %v2093
    %v2095 = vmul.f32 %v2040, 1.442695
    %v2096 = vpow.pop %v2095
    %v2097 = vmul.f32 %v2041, 1.442695
    %v2098 = vpow.pop %v2097
    %v2099 = vmul.f32 %v2042, 1.442695
    %v2100 = vpow.pop %v2099
    %v2101 = vmul.f32 %v2043, 1.442695
    %v2102 = vpow.pop %v2101
    %v2103 = vmul.f32 %v2044, 1.442695
    %v2104 = vpow.pop %v2103
    %v2105 = vmul.f32 %v2045, 1.442695
    %v2106 = vpow.pop %v2105
    %v2107 = vmul.f32 %v2046, 1.442695
    %v2108 = vpow.pop %v2107
    %v2109 = vmul.f32 %v2047, 1.442695
    %v2110 = vpow.pop %v2109
    %v2111 = vmul.f32 %v2048, 1.442695
    %v2112 = vpow.pop %v2111
    %v2113 = vsel %vm1872, %v2050, 0.0
    %v2114 = vsel %vm1872, %v2052, 0.0
    %v2115 = vadd.f32 %v2113, %v2114
    %v2116 = vrot.slane %v2115, 4
    %v2117 = vadd.f32 %v2115, %v2116
    %v2118 = vrot.slane %v2117, 2
    %v2119 = vadd.f32 %v2117, %v2118
    %v2120 = vrot.slane %v2119, 1
    %v2121 = vadd.f32 %v2119, %v2120
    %v2122 = vsel %vm1872, %v2054, 0.0
    %v2123 = vsel %vm1872, %v2056, 0.0
    %v2124 = vadd.f32 %v2122, %v2123
    %v2125 = vrot.slane %v2124, 4
    %v2126 = vadd.f32 %v2124, %v2125
    %v2127 = vrot.slane %v2126, 2
    %v2128 = vadd.f32 %v2126, %v2127
    %v2129 = vrot.slane %v2128, 1
    %v2130 = vadd.f32 %v2128, %v2129
    %v2131 = vsel %vm1872, %v2058, 0.0
    %v2132 = vsel %vm1872, %v2060, 0.0
    %v2133 = vadd.f32 %v2131, %v2132
    %v2134 = vrot.slane %v2133, 4
    %v2135 = vadd.f32 %v2133, %v2134
    %v2136 = vrot.slane %v2135, 2
    %v2137 = vadd.f32 %v2135, %v2136
    %v2138 = vrot.slane %v2137, 1
    %v2139 = vadd.f32 %v2137, %v2138
    %v2140 = vsel %vm1872, %v2062, 0.0
    %v2141 = vsel %vm1872, %v2064, 0.0
    %v2142 = vadd.f32 %v2140, %v2141
    %v2143 = vrot.slane %v2142, 4
    %v2144 = vadd.f32 %v2142, %v2143
    %v2145 = vrot.slane %v2144, 2
    %v2146 = vadd.f32 %v2144, %v2145
    %v2147 = vrot.slane %v2146, 1
    %v2148 = vadd.f32 %v2146, %v2147
    %v2149 = vsel %vm1872, %v2066, 0.0
    %v2150 = vsel %vm1872, %v2068, 0.0
    %v2151 = vadd.f32 %v2149, %v2150
    %v2152 = vrot.slane %v2151, 4
    %v2153 = vadd.f32 %v2151, %v2152
    %v2154 = vrot.slane %v2153, 2
    %v2155 = vadd.f32 %v2153, %v2154
    %v2156 = vrot.slane %v2155, 1
    %v2157 = vadd.f32 %v2155, %v2156
    %v2158 = vsel %vm1872, %v2070, 0.0
    %v2159 = vsel %vm1872, %v2072, 0.0
    %v2160 = vadd.f32 %v2158, %v2159
    %v2161 = vrot.slane %v2160, 4
    %v2162 = vadd.f32 %v2160, %v2161
    %v2163 = vrot.slane %v2162, 2
    %v2164 = vadd.f32 %v2162, %v2163
    %v2165 = vrot.slane %v2164, 1
    %v2166 = vadd.f32 %v2164, %v2165
    %v2167 = vsel %vm1872, %v2074, 0.0
    %v2168 = vsel %vm1872, %v2076, 0.0
    %v2169 = vadd.f32 %v2167, %v2168
    %v2170 = vrot.slane %v2169, 4
    %v2171 = vadd.f32 %v2169, %v2170
    %v2172 = vrot.slane %v2171, 2
    %v2173 = vadd.f32 %v2171, %v2172
    %v2174 = vrot.slane %v2173, 1
    %v2175 = vadd.f32 %v2173, %v2174
    %v2176 = vsel %vm1872, %v2078, 0.0
    %v2177 = vsel %vm1872, %v2080, 0.0
    %v2178 = vadd.f32 %v2176, %v2177
    %v2179 = vrot.slane %v2178, 4
    %v2180 = vadd.f32 %v2178, %v2179
    %v2181 = vrot.slane %v2180, 2
    %v2182 = vadd.f32 %v2180, %v2181
    %v2183 = vrot.slane %v2182, 1
    %v2184 = vadd.f32 %v2182, %v2183
    %v2185 = vsel %vm1872, %v2082, 0.0
    %v2186 = vsel %vm1872, %v2084, 0.0
    %v2187 = vadd.f32 %v2185, %v2186
    %v2188 = vrot.slane %v2187, 4
    %v2189 = vadd.f32 %v2187, %v2188
    %v2190 = vrot.slane %v2189, 2
    %v2191 = vadd.f32 %v2189, %v2190
    %v2192 = vrot.slane %v2191, 1
    %v2193 = vadd.f32 %v2191, %v2192
    %v2194 = vsel %vm1872, %v2086, 0.0
    %v2195 = vsel %vm1872, %v2088, 0.0
    %v2196 = vadd.f32 %v2194, %v2195
    %v2197 = vrot.slane %v2196, 4
    %v2198 = vadd.f32 %v2196, %v2197
    %v2199 = vrot.slane %v2198, 2
    %v2200 = vadd.f32 %v2198, %v2199
    %v2201 = vrot.slane %v2200, 1
    %v2202 = vadd.f32 %v2200, %v2201
    %v2203 = vsel %vm1872, %v2090, 0.0
    %v2204 = vsel %vm1872, %v2092, 0.0
    %v2205 = vadd.f32 %v2203, %v2204
    %v2206 = vrot.slane %v2205, 4
    %v2207 = vadd.f32 %v2205, %v2206
    %v2208 = vrot.slane %v2207, 2
    %v2209 = vadd.f32 %v2207, %v2208
    %v2210 = vrot.slane %v2209, 1
    %v2211 = vadd.f32 %v2209, %v2210
    %v2212 = vsel %vm1872, %v2094, 0.0
    %v2213 = vsel %vm1872, %v2096, 0.0
    %v2214 = vadd.f32 %v2212, %v2213
    %v2215 = vrot.slane %v2214, 4
    %v2216 = vadd.f32 %v2214, %v2215
    %v2217 = vrot.slane %v2216, 2
    %v2218 = vadd.f32 %v2216, %v2217
    %v2219 = vrot.slane %v2218, 1
    %v2220 = vadd.f32 %v2218, %v2219
    %v2221 = vsel %vm1872, %v2098, 0.0
    %v2222 = vsel %vm1872, %v2100, 0.0
    %v2223 = vadd.f32 %v2221, %v2222
    %v2224 = vrot.slane %v2223, 4
    %v2225 = vadd.f32 %v2223, %v2224
    %v2226 = vrot.slane %v2225, 2
    %v2227 = vadd.f32 %v2225, %v2226
    %v2228 = vrot.slane %v2227, 1
    %v2229 = vadd.f32 %v2227, %v2228
    %v2230 = vsel %vm1872, %v2102, 0.0
    %v2231 = vsel %vm1872, %v2104, 0.0
    %v2232 = vadd.f32 %v2230, %v2231
    %v2233 = vrot.slane %v2232, 4
    %v2234 = vadd.f32 %v2232, %v2233
    %v2235 = vrot.slane %v2234, 2
    %v2236 = vadd.f32 %v2234, %v2235
    %v2237 = vrot.slane %v2236, 1
    %v2238 = vadd.f32 %v2236, %v2237
    %v2239 = vsel %vm1872, %v2106, 0.0
    %v2240 = vsel %vm1872, %v2108, 0.0
    %v2241 = vadd.f32 %v2239, %v2240
    %v2242 = vrot.slane %v2241, 4
    %v2243 = vadd.f32 %v2241, %v2242
    %v2244 = vrot.slane %v2243, 2
    %v2245 = vadd.f32 %v2243, %v2244
    %v2246 = vrot.slane %v2245, 1
    %v2247 = vadd.f32 %v2245, %v2246
    %v2248 = vsel %vm1872, %v2110, 0.0
    %v2249 = vsel %vm1872, %v2112, 0.0
    %v2250 = vadd.f32 %v2248, %v2249
    %v2251 = vrot.slane %v2250, 4
    %v2252 = vadd.f32 %v2250, %v2251
    %v2253 = vrot.slane %v2252, 2
    %v2254 = vadd.f32 %v2252, %v2253
    %v2255 = vrot.slane %v2254, 1
    %v2256 = vadd.f32 %v2254, %v2255
    %v2257 = vrcp.pop %v2121
    %v2258 = vrcp.pop %v2130
    %v2259 = vrcp.pop %v2139
    %v2260 = vrcp.pop %v2148
    %v2261 = vrcp.pop %v2157
    %v2262 = vrcp.pop %v2166
    %v2263 = vrcp.pop %v2175
    %v2264 = vrcp.pop %v2184
    %v2265 = vrcp.pop %v2193
    %v2266 = vrcp.pop %v2202
    %v2267 = vrcp.pop %v2211
    %v2268 = vrcp.pop %v2220
    %v2269 = vrcp.pop %v2229
    %v2270 = vrcp.pop %v2238
    %v2271 = vrcp.pop %v2247
    %v2272 = vrcp.pop %v2256
    %v2273 = vmul.f32 %v2050, %v2257
    %v2274 = vmul.f32 %v2052, %v2257
    %v2275 = vmul.f32 %v2054, %v2258
    %v2276 = vmul.f32 %v2056, %v2258
    %v2277 = vmul.f32 %v2058, %v2259
    %v2278 = vmul.f32 %v2060, %v2259
    %v2279 = vmul.f32 %v2062, %v2260
    %v2280 = vmul.f32 %v2064, %v2260
    %v2281 = vmul.f32 %v2066, %v2261
    %v2282 = vmul.f32 %v2068, %v2261
    %v2283 = vmul.f32 %v2070, %v2262
    %v2284 = vmul.f32 %v2072, %v2262
    %v2285 = vmul.f32 %v2074, %v2263
    %v2286 = vmul.f32 %v2076, %v2263
    %v2287 = vmul.f32 %v2078, %v2264
    %v2288 = vmul.f32 %v2080, %v2264
    %v2289 = vmul.f32 %v2082, %v2265
    %v2290 = vmul.f32 %v2084, %v2265
    %v2291 = vmul.f32 %v2086, %v2266
    %v2292 = vmul.f32 %v2088, %v2266
    %v2293 = vmul.f32 %v2090, %v2267
    %v2294 = vmul.f32 %v2092, %v2267
    %v2295 = vmul.f32 %v2094, %v2268
    %v2296 = vmul.f32 %v2096, %v2268
    %v2297 = vmul.f32 %v2098, %v2269
    %v2298 = vmul.f32 %v2100, %v2269
    %v2299 = vmul.f32 %v2102, %v2270
    %v2300 = vmul.f32 %v2104, %v2270
    %v2301 = vmul.f32 %v2106, %v2271
    %v2302 = vmul.f32 %v2108, %v2271
    %v2303 = vmul.f32 %v2110, %v2272
    %v2304 = vmul.f32 %v2112, %v2272
    %v2305 = vunpack.c.l.bf16 %v416
    %v2306 = vunpack.c.l.bf16 %v417
    %v2307 = vunpack.c.l.bf16 %v418
    %v2308 = vunpack.c.l.bf16 %v419
    %v2309 = vunpack.c.l.bf16 %v420
    %v2310 = vunpack.c.l.bf16 %v421
    %v2311 = vunpack.c.l.bf16 %v422
    %v2312 = vunpack.c.l.bf16 %v423
    %v2313 = vunpack.c.l.bf16 %v424
    %v2314 = vunpack.c.l.bf16 %v425
    %v2315 = vunpack.c.l.bf16 %v426
    %v2316 = vunpack.c.l.bf16 %v427
    %v2317 = vunpack.c.l.bf16 %v428
    %v2318 = vunpack.c.l.bf16 %v429
    %v2319 = vunpack.c.l.bf16 %v430
    %v2320 = vunpack.c.l.bf16 %v431
    %v2321 = vunpack.c.l.bf16 %v432
    %v2322 = vunpack.c.l.bf16 %v433
    %v2323 = vunpack.c.l.bf16 %v434
    %v2324 = vunpack.c.l.bf16 %v435
    %v2325 = vunpack.c.l.bf16 %v436
    %v2326 = vunpack.c.l.bf16 %v437
    %v2327 = vunpack.c.l.bf16 %v438
    %v2328 = vunpack.c.l.bf16 %v439
    %v2329 = vunpack.c.l.bf16 %v440
    %v2330 = vunpack.c.l.bf16 %v441
    %v2331 = vunpack.c.l.bf16 %v442
    %v2332 = vunpack.c.l.bf16 %v443
    %v2333 = vunpack.c.l.bf16 %v444
    %v2334 = vunpack.c.l.bf16 %v445
    %v2335 = vunpack.c.l.bf16 %v446
    %v2336 = vunpack.c.l.bf16 %v447
    %2338 = vset.pattern.permute.xlu0 0
    %2339 = vperm.xlu0 %2338, %v2273
    %v2340 = vpop.permute.xlu0 %2339
    %2343 = vset.pattern.permute.xlu0 0
    %2344 = vperm.xlu0 %2343, %v2274
    %v2345 = vpop.permute.xlu0 %2344
    %2348 = vset.pattern.permute.xlu0 0
    %2349 = vperm.xlu0 %2348, %v2275
    %v2350 = vpop.permute.xlu0 %2349
    %2353 = vset.pattern.permute.xlu0 0
    %2354 = vperm.xlu0 %2353, %v2276
    %v2355 = vpop.permute.xlu0 %2354
    %2358 = vset.pattern.permute.xlu0 0
    %2359 = vperm.xlu0 %2358, %v2277
    %v2360 = vpop.permute.xlu0 %2359
    %2363 = vset.pattern.permute.xlu0 0
    %2364 = vperm.xlu0 %2363, %v2278
    %v2365 = vpop.permute.xlu0 %2364
    %2368 = vset.pattern.permute.xlu0 0
    %2369 = vperm.xlu0 %2368, %v2279
    %v2370 = vpop.permute.xlu0 %2369
    %2373 = vset.pattern.permute.xlu0 0
    %2374 = vperm.xlu0 %2373, %v2280
    %v2375 = vpop.permute.xlu0 %2374
    %2378 = vset.pattern.permute.xlu0 0
    %2379 = vperm.xlu0 %2378, %v2281
    %v2380 = vpop.permute.xlu0 %2379
    %2383 = vset.pattern.permute.xlu0 0
    %2384 = vperm.xlu0 %2383, %v2282
    %v2385 = vpop.permute.xlu0 %2384
    %2388 = vset.pattern.permute.xlu0 0
    %2389 = vperm.xlu0 %2388, %v2283
    %v2390 = vpop.permute.xlu0 %2389
    %2393 = vset.pattern.permute.xlu0 0
    %2394 = vperm.xlu0 %2393, %v2284
    %v2395 = vpop.permute.xlu0 %2394
    %2398 = vset.pattern.permute.xlu0 0
    %2399 = vperm.xlu0 %2398, %v2285
    %v2400 = vpop.permute.xlu0 %2399
    %2403 = vset.pattern.permute.xlu0 0
    %2404 = vperm.xlu0 %2403, %v2286
    %v2405 = vpop.permute.xlu0 %2404
    %2408 = vset.pattern.permute.xlu0 0
    %2409 = vperm.xlu0 %2408, %v2287
    %v2410 = vpop.permute.xlu0 %2409
    %2413 = vset.pattern.permute.xlu0 0
    %2414 = vperm.xlu0 %2413, %v2288
    %v2415 = vpop.permute.xlu0 %2414
    %2418 = vset.pattern.permute.xlu0 0
    %2419 = vperm.xlu0 %2418, %v2289
    %v2420 = vpop.permute.xlu0 %2419
    %2423 = vset.pattern.permute.xlu0 0
    %2424 = vperm.xlu0 %2423, %v2290
    %v2425 = vpop.permute.xlu0 %2424
    %2428 = vset.pattern.permute.xlu0 0
    %2429 = vperm.xlu0 %2428, %v2291
    %v2430 = vpop.permute.xlu0 %2429
    %2433 = vset.pattern.permute.xlu0 0
    %2434 = vperm.xlu0 %2433, %v2292
    %v2435 = vpop.permute.xlu0 %2434
    %2438 = vset.pattern.permute.xlu0 0
    %2439 = vperm.xlu0 %2438, %v2293
    %v2440 = vpop.permute.xlu0 %2439
    %2443 = vset.pattern.permute.xlu0 0
    %2444 = vperm.xlu0 %2443, %v2294
    %v2445 = vpop.permute.xlu0 %2444
    %2448 = vset.pattern.permute.xlu0 0
    %2449 = vperm.xlu0 %2448, %v2295
    %v2450 = vpop.permute.xlu0 %2449
    %2453 = vset.pattern.permute.xlu0 0
    %2454 = vperm.xlu0 %2453, %v2296
    %v2455 = vpop.permute.xlu0 %2454
    %2458 = vset.pattern.permute.xlu0 0
    %2459 = vperm.xlu0 %2458, %v2297
    %v2460 = vpop.permute.xlu0 %2459
    %2463 = vset.pattern.permute.xlu0 0
    %2464 = vperm.xlu0 %2463, %v2298
    %v2465 = vpop.permute.xlu0 %2464
    %2468 = vset.pattern.permute.xlu0 0
    %2469 = vperm.xlu0 %2468, %v2299
    %v2470 = vpop.permute.xlu0 %2469
    %2473 = vset.pattern.permute.xlu0 0
    %2474 = vperm.xlu0 %2473, %v2300
    %v2475 = vpop.permute.xlu0 %2474
    %2478 = vset.pattern.permute.xlu0 0
    %2479 = vperm.xlu0 %2478, %v2301
    %v2480 = vpop.permute.xlu0 %2479
    %2483 = vset.pattern.permute.xlu0 0
    %2484 = vperm.xlu0 %2483, %v2302
    %v2485 = vpop.permute.xlu0 %2484
    %2488 = vset.pattern.permute.xlu0 0
    %2489 = vperm.xlu0 %2488, %v2303
    %v2490 = vpop.permute.xlu0 %2489
    %2493 = vset.pattern.permute.xlu0 0
    %2494 = vperm.xlu0 %2493, %v2304
    %v2495 = vpop.permute.xlu0 %2494
    %v2497 = vmul.f32 %v2340, %v2305
    %v2498 = vmul.f32 %v2345, %v2306
    %v2499 = vmul.f32 %v2350, %v2307
    %v2500 = vmul.f32 %v2355, %v2308
    %v2501 = vmul.f32 %v2360, %v2309
    %v2502 = vmul.f32 %v2365, %v2310
    %v2503 = vmul.f32 %v2370, %v2311
    %v2504 = vmul.f32 %v2375, %v2312
    %v2505 = vmul.f32 %v2380, %v2313
    %v2506 = vmul.f32 %v2385, %v2314
    %v2507 = vmul.f32 %v2390, %v2315
    %v2508 = vmul.f32 %v2395, %v2316
    %v2509 = vmul.f32 %v2400, %v2317
    %v2510 = vmul.f32 %v2405, %v2318
    %v2511 = vmul.f32 %v2410, %v2319
    %v2512 = vmul.f32 %v2415, %v2320
    %v2513 = vmul.f32 %v2420, %v2321
    %v2514 = vmul.f32 %v2425, %v2322
    %v2515 = vmul.f32 %v2430, %v2323
    %v2516 = vmul.f32 %v2435, %v2324
    %v2517 = vmul.f32 %v2440, %v2325
    %v2518 = vmul.f32 %v2445, %v2326
    %v2519 = vmul.f32 %v2450, %v2327
    %v2520 = vmul.f32 %v2455, %v2328
    %v2521 = vmul.f32 %v2460, %v2329
    %v2522 = vmul.f32 %v2465, %v2330
    %v2523 = vmul.f32 %v2470, %v2331
    %v2524 = vmul.f32 %v2475, %v2332
    %v2525 = vmul.f32 %v2480, %v2333
    %v2526 = vmul.f32 %v2485, %v2334
    %v2527 = vmul.f32 %v2490, %v2335
    %v2528 = vmul.f32 %v2495, %v2336
    %v2529 = vsel %vm513, %v2497, 0.0
    %v2530 = vsel %vm513, %v2498, 0.0
    %v2531 = vadd.f32 %v2529, %v2530
    %v2532 = vrot.slane %v2531, 4
    %v2533 = vadd.f32 %v2531, %v2532
    %v2534 = vrot.slane %v2533, 2
    %v2535 = vadd.f32 %v2533, %v2534
    %v2536 = vrot.slane %v2535, 1
    %v2537 = vadd.f32 %v2535, %v2536
    %v2538 = vsel %vm513, %v2499, 0.0
    %v2539 = vsel %vm513, %v2500, 0.0
    %v2540 = vadd.f32 %v2538, %v2539
    %v2541 = vrot.slane %v2540, 4
    %v2542 = vadd.f32 %v2540, %v2541
    %v2543 = vrot.slane %v2542, 2
    %v2544 = vadd.f32 %v2542, %v2543
    %v2545 = vrot.slane %v2544, 1
    %v2546 = vadd.f32 %v2544, %v2545
    %v2547 = vsel %vm513, %v2501, 0.0
    %v2548 = vsel %vm513, %v2502, 0.0
    %v2549 = vadd.f32 %v2547, %v2548
    %v2550 = vrot.slane %v2549, 4
    %v2551 = vadd.f32 %v2549, %v2550
    %v2552 = vrot.slane %v2551, 2
    %v2553 = vadd.f32 %v2551, %v2552
    %v2554 = vrot.slane %v2553, 1
    %v2555 = vadd.f32 %v2553, %v2554
    %v2556 = vsel %vm513, %v2503, 0.0
    %v2557 = vsel %vm513, %v2504, 0.0
    %v2558 = vadd.f32 %v2556, %v2557
    %v2559 = vrot.slane %v2558, 4
    %v2560 = vadd.f32 %v2558, %v2559
    %v2561 = vrot.slane %v2560, 2
    %v2562 = vadd.f32 %v2560, %v2561
    %v2563 = vrot.slane %v2562, 1
    %v2564 = vadd.f32 %v2562, %v2563
    %v2565 = vsel %vm513, %v2505, 0.0
    %v2566 = vsel %vm513, %v2506, 0.0
    %v2567 = vadd.f32 %v2565, %v2566
    %v2568 = vrot.slane %v2567, 4
    %v2569 = vadd.f32 %v2567, %v2568
    %v2570 = vrot.slane %v2569, 2
    %v2571 = vadd.f32 %v2569, %v2570
    %v2572 = vrot.slane %v2571, 1
    %v2573 = vadd.f32 %v2571, %v2572
    %v2574 = vsel %vm513, %v2507, 0.0
    %v2575 = vsel %vm513, %v2508, 0.0
    %v2576 = vadd.f32 %v2574, %v2575
    %v2577 = vrot.slane %v2576, 4
    %v2578 = vadd.f32 %v2576, %v2577
    %v2579 = vrot.slane %v2578, 2
    %v2580 = vadd.f32 %v2578, %v2579
    %v2581 = vrot.slane %v2580, 1
    %v2582 = vadd.f32 %v2580, %v2581
    %v2583 = vsel %vm513, %v2509, 0.0
    %v2584 = vsel %vm513, %v2510, 0.0
    %v2585 = vadd.f32 %v2583, %v2584
    %v2586 = vrot.slane %v2585, 4
    %v2587 = vadd.f32 %v2585, %v2586
    %v2588 = vrot.slane %v2587, 2
    %v2589 = vadd.f32 %v2587, %v2588
    %v2590 = vrot.slane %v2589, 1
    %v2591 = vadd.f32 %v2589, %v2590
    %v2592 = vsel %vm513, %v2511, 0.0
    %v2593 = vsel %vm513, %v2512, 0.0
    %v2594 = vadd.f32 %v2592, %v2593
    %v2595 = vrot.slane %v2594, 4
    %v2596 = vadd.f32 %v2594, %v2595
    %v2597 = vrot.slane %v2596, 2
    %v2598 = vadd.f32 %v2596, %v2597
    %v2599 = vrot.slane %v2598, 1
    %v2600 = vadd.f32 %v2598, %v2599
    %v2601 = vsel %vm513, %v2513, 0.0
    %v2602 = vsel %vm513, %v2514, 0.0
    %v2603 = vadd.f32 %v2601, %v2602
    %v2604 = vrot.slane %v2603, 4
    %v2605 = vadd.f32 %v2603, %v2604
    %v2606 = vrot.slane %v2605, 2
    %v2607 = vadd.f32 %v2605, %v2606
    %v2608 = vrot.slane %v2607, 1
    %v2609 = vadd.f32 %v2607, %v2608
    %v2610 = vsel %vm513, %v2515, 0.0
    %v2611 = vsel %vm513, %v2516, 0.0
    %v2612 = vadd.f32 %v2610, %v2611
    %v2613 = vrot.slane %v2612, 4
    %v2614 = vadd.f32 %v2612, %v2613
    %v2615 = vrot.slane %v2614, 2
    %v2616 = vadd.f32 %v2614, %v2615
    %v2617 = vrot.slane %v2616, 1
    %v2618 = vadd.f32 %v2616, %v2617
    %v2619 = vsel %vm513, %v2517, 0.0
    %v2620 = vsel %vm513, %v2518, 0.0
    %v2621 = vadd.f32 %v2619, %v2620
    %v2622 = vrot.slane %v2621, 4
    %v2623 = vadd.f32 %v2621, %v2622
    %v2624 = vrot.slane %v2623, 2
    %v2625 = vadd.f32 %v2623, %v2624
    %v2626 = vrot.slane %v2625, 1
    %v2627 = vadd.f32 %v2625, %v2626
    %v2628 = vsel %vm513, %v2519, 0.0
    %v2629 = vsel %vm513, %v2520, 0.0
    %v2630 = vadd.f32 %v2628, %v2629
    %v2631 = vrot.slane %v2630, 4
    %v2632 = vadd.f32 %v2630, %v2631
    %v2633 = vrot.slane %v2632, 2
    %v2634 = vadd.f32 %v2632, %v2633
    %v2635 = vrot.slane %v2634, 1
    %v2636 = vadd.f32 %v2634, %v2635
    %v2637 = vsel %vm513, %v2521, 0.0
    %v2638 = vsel %vm513, %v2522, 0.0
    %v2639 = vadd.f32 %v2637, %v2638
    %v2640 = vrot.slane %v2639, 4
    %v2641 = vadd.f32 %v2639, %v2640
    %v2642 = vrot.slane %v2641, 2
    %v2643 = vadd.f32 %v2641, %v2642
    %v2644 = vrot.slane %v2643, 1
    %v2645 = vadd.f32 %v2643, %v2644
    %v2646 = vsel %vm513, %v2523, 0.0
    %v2647 = vsel %vm513, %v2524, 0.0
    %v2648 = vadd.f32 %v2646, %v2647
    %v2649 = vrot.slane %v2648, 4
    %v2650 = vadd.f32 %v2648, %v2649
    %v2651 = vrot.slane %v2650, 2
    %v2652 = vadd.f32 %v2650, %v2651
    %v2653 = vrot.slane %v2652, 1
    %v2654 = vadd.f32 %v2652, %v2653
    %v2655 = vsel %vm513, %v2525, 0.0
    %v2656 = vsel %vm513, %v2526, 0.0
    %v2657 = vadd.f32 %v2655, %v2656
    %v2658 = vrot.slane %v2657, 4
    %v2659 = vadd.f32 %v2657, %v2658
    %v2660 = vrot.slane %v2659, 2
    %v2661 = vadd.f32 %v2659, %v2660
    %v2662 = vrot.slane %v2661, 1
    %v2663 = vadd.f32 %v2661, %v2662
    %v2664 = vsel %vm513, %v2527, 0.0
    %v2665 = vsel %vm513, %v2528, 0.0
    %v2666 = vadd.f32 %v2664, %v2665
    %v2667 = vrot.slane %v2666, 4
    %v2668 = vadd.f32 %v2666, %v2667
    %v2669 = vrot.slane %v2668, 2
    %v2670 = vadd.f32 %v2668, %v2669
    %v2671 = vrot.slane %v2670, 1
    %v2672 = vadd.f32 %v2670, %v2671
    %2673 = vset.pattern.permute.xlu0 1
    %2674 = vperm.xlu0 %2673, %v2273
    %v2675 = vpop.permute.xlu0 %2674
    %2677 = vset.pattern.permute.xlu0 1
    %2678 = vperm.xlu0 %2677, %v2274
    %v2679 = vpop.permute.xlu0 %2678
    %2681 = vset.pattern.permute.xlu0 1
    %2682 = vperm.xlu0 %2681, %v2275
    %v2683 = vpop.permute.xlu0 %2682
    %2685 = vset.pattern.permute.xlu0 1
    %2686 = vperm.xlu0 %2685, %v2276
    %v2687 = vpop.permute.xlu0 %2686
    %2689 = vset.pattern.permute.xlu0 1
    %2690 = vperm.xlu0 %2689, %v2277
    %v2691 = vpop.permute.xlu0 %2690
    %2693 = vset.pattern.permute.xlu0 1
    %2694 = vperm.xlu0 %2693, %v2278
    %v2695 = vpop.permute.xlu0 %2694
    %2697 = vset.pattern.permute.xlu0 1
    %2698 = vperm.xlu0 %2697, %v2279
    %v2699 = vpop.permute.xlu0 %2698
    %2701 = vset.pattern.permute.xlu0 1
    %2702 = vperm.xlu0 %2701, %v2280
    %v2703 = vpop.permute.xlu0 %2702
    %2705 = vset.pattern.permute.xlu0 1
    %2706 = vperm.xlu0 %2705, %v2281
    %v2707 = vpop.permute.xlu0 %2706
    %2709 = vset.pattern.permute.xlu0 1
    %2710 = vperm.xlu0 %2709, %v2282
    %v2711 = vpop.permute.xlu0 %2710
    %2713 = vset.pattern.permute.xlu0 1
    %2714 = vperm.xlu0 %2713, %v2283
    %v2715 = vpop.permute.xlu0 %2714
    %2717 = vset.pattern.permute.xlu0 1
    %2718 = vperm.xlu0 %2717, %v2284
    %v2719 = vpop.permute.xlu0 %2718
    %2721 = vset.pattern.permute.xlu0 1
    %2722 = vperm.xlu0 %2721, %v2285
    %v2723 = vpop.permute.xlu0 %2722
    %2725 = vset.pattern.permute.xlu0 1
    %2726 = vperm.xlu0 %2725, %v2286
    %v2727 = vpop.permute.xlu0 %2726
    %2729 = vset.pattern.permute.xlu0 1
    %2730 = vperm.xlu0 %2729, %v2287
    %v2731 = vpop.permute.xlu0 %2730
    %2733 = vset.pattern.permute.xlu0 1
    %2734 = vperm.xlu0 %2733, %v2288
    %v2735 = vpop.permute.xlu0 %2734
    %2737 = vset.pattern.permute.xlu0 1
    %2738 = vperm.xlu0 %2737, %v2289
    %v2739 = vpop.permute.xlu0 %2738
    %2741 = vset.pattern.permute.xlu0 1
    %2742 = vperm.xlu0 %2741, %v2290
    %v2743 = vpop.permute.xlu0 %2742
    %2745 = vset.pattern.permute.xlu0 1
    %2746 = vperm.xlu0 %2745, %v2291
    %v2747 = vpop.permute.xlu0 %2746
    %2749 = vset.pattern.permute.xlu0 1
    %2750 = vperm.xlu0 %2749, %v2292
    %v2751 = vpop.permute.xlu0 %2750
    %2753 = vset.pattern.permute.xlu0 1
    %2754 = vperm.xlu0 %2753, %v2293
    %v2755 = vpop.permute.xlu0 %2754
    %2757 = vset.pattern.permute.xlu0 1
    %2758 = vperm.xlu0 %2757, %v2294
    %v2759 = vpop.permute.xlu0 %2758
    %2761 = vset.pattern.permute.xlu0 1
    %2762 = vperm.xlu0 %2761, %v2295
    %v2763 = vpop.permute.xlu0 %2762
    %2765 = vset.pattern.permute.xlu0 1
    %2766 = vperm.xlu0 %2765, %v2296
    %v2767 = vpop.permute.xlu0 %2766
    %2769 = vset.pattern.permute.xlu0 1
    %2770 = vperm.xlu0 %2769, %v2297
    %v2771 = vpop.permute.xlu0 %2770
    %2773 = vset.pattern.permute.xlu0 1
    %2774 = vperm.xlu0 %2773, %v2298
    %v2775 = vpop.permute.xlu0 %2774
    %2777 = vset.pattern.permute.xlu0 1
    %2778 = vperm.xlu0 %2777, %v2299
    %v2779 = vpop.permute.xlu0 %2778
    %2781 = vset.pattern.permute.xlu0 1
    %2782 = vperm.xlu0 %2781, %v2300
    %v2783 = vpop.permute.xlu0 %2782
    %2785 = vset.pattern.permute.xlu0 1
    %2786 = vperm.xlu0 %2785, %v2301
    %v2787 = vpop.permute.xlu0 %2786
    %2789 = vset.pattern.permute.xlu0 1
    %2790 = vperm.xlu0 %2789, %v2302
    %v2791 = vpop.permute.xlu0 %2790
    %2793 = vset.pattern.permute.xlu0 1
    %2794 = vperm.xlu0 %2793, %v2303
    %v2795 = vpop.permute.xlu0 %2794
    %2797 = vset.pattern.permute.xlu0 1
    %2798 = vperm.xlu0 %2797, %v2304
    %v2799 = vpop.permute.xlu0 %2798
    %v2801 = vmul.f32 %v2675, %v2305
    %v2802 = vmul.f32 %v2679, %v2306
    %v2803 = vmul.f32 %v2683, %v2307
    %v2804 = vmul.f32 %v2687, %v2308
    %v2805 = vmul.f32 %v2691, %v2309
    %v2806 = vmul.f32 %v2695, %v2310
    %v2807 = vmul.f32 %v2699, %v2311
    %v2808 = vmul.f32 %v2703, %v2312
    %v2809 = vmul.f32 %v2707, %v2313
    %v2810 = vmul.f32 %v2711, %v2314
    %v2811 = vmul.f32 %v2715, %v2315
    %v2812 = vmul.f32 %v2719, %v2316
    %v2813 = vmul.f32 %v2723, %v2317
    %v2814 = vmul.f32 %v2727, %v2318
    %v2815 = vmul.f32 %v2731, %v2319
    %v2816 = vmul.f32 %v2735, %v2320
    %v2817 = vmul.f32 %v2739, %v2321
    %v2818 = vmul.f32 %v2743, %v2322
    %v2819 = vmul.f32 %v2747, %v2323
    %v2820 = vmul.f32 %v2751, %v2324
    %v2821 = vmul.f32 %v2755, %v2325
    %v2822 = vmul.f32 %v2759, %v2326
    %v2823 = vmul.f32 %v2763, %v2327
    %v2824 = vmul.f32 %v2767, %v2328
    %v2825 = vmul.f32 %v2771, %v2329
    %v2826 = vmul.f32 %v2775, %v2330
    %v2827 = vmul.f32 %v2779, %v2331
    %v2828 = vmul.f32 %v2783, %v2332
    %v2829 = vmul.f32 %v2787, %v2333
    %v2830 = vmul.f32 %v2791, %v2334
    %v2831 = vmul.f32 %v2795, %v2335
    %v2832 = vmul.f32 %v2799, %v2336
    %v2833 = vsel %vm513, %v2801, 0.0
    %v2834 = vsel %vm513, %v2802, 0.0
    %v2835 = vadd.f32 %v2833, %v2834
    %v2836 = vrot.slane %v2835, 4
    %v2837 = vadd.f32 %v2835, %v2836
    %v2838 = vrot.slane %v2837, 2
    %v2839 = vadd.f32 %v2837, %v2838
    %v2840 = vrot.slane %v2839, 1
    %v2841 = vadd.f32 %v2839, %v2840
    %v2842 = vsel %vm513, %v2803, 0.0
    %v2843 = vsel %vm513, %v2804, 0.0
    %v2844 = vadd.f32 %v2842, %v2843
    %v2845 = vrot.slane %v2844, 4
    %v2846 = vadd.f32 %v2844, %v2845
    %v2847 = vrot.slane %v2846, 2
    %v2848 = vadd.f32 %v2846, %v2847
    %v2849 = vrot.slane %v2848, 1
    %v2850 = vadd.f32 %v2848, %v2849
    %v2851 = vsel %vm513, %v2805, 0.0
    %v2852 = vsel %vm513, %v2806, 0.0
    %v2853 = vadd.f32 %v2851, %v2852
    %v2854 = vrot.slane %v2853, 4
    %v2855 = vadd.f32 %v2853, %v2854
    %v2856 = vrot.slane %v2855, 2
    %v2857 = vadd.f32 %v2855, %v2856
    %v2858 = vrot.slane %v2857, 1
    %v2859 = vadd.f32 %v2857, %v2858
    %v2860 = vsel %vm513, %v2807, 0.0
    %v2861 = vsel %vm513, %v2808, 0.0
    %v2862 = vadd.f32 %v2860, %v2861
    %v2863 = vrot.slane %v2862, 4
    %v2864 = vadd.f32 %v2862, %v2863
    %v2865 = vrot.slane %v2864, 2
    %v2866 = vadd.f32 %v2864, %v2865
    %v2867 = vrot.slane %v2866, 1
    %v2868 = vadd.f32 %v2866, %v2867
    %v2869 = vsel %vm513, %v2809, 0.0
    %v2870 = vsel %vm513, %v2810, 0.0
    %v2871 = vadd.f32 %v2869, %v2870
    %v2872 = vrot.slane %v2871, 4
    %v2873 = vadd.f32 %v2871, %v2872
    %v2874 = vrot.slane %v2873, 2
    %v2875 = vadd.f32 %v2873, %v2874
    %v2876 = vrot.slane %v2875, 1
    %v2877 = vadd.f32 %v2875, %v2876
    %v2878 = vsel %vm513, %v2811, 0.0
    %v2879 = vsel %vm513, %v2812, 0.0
    %v2880 = vadd.f32 %v2878, %v2879
    %v2881 = vrot.slane %v2880, 4
    %v2882 = vadd.f32 %v2880, %v2881
    %v2883 = vrot.slane %v2882, 2
    %v2884 = vadd.f32 %v2882, %v2883
    %v2885 = vrot.slane %v2884, 1
    %v2886 = vadd.f32 %v2884, %v2885
    %v2887 = vsel %vm513, %v2813, 0.0
    %v2888 = vsel %vm513, %v2814, 0.0
    %v2889 = vadd.f32 %v2887, %v2888
    %v2890 = vrot.slane %v2889, 4
    %v2891 = vadd.f32 %v2889, %v2890
    %v2892 = vrot.slane %v2891, 2
    %v2893 = vadd.f32 %v2891, %v2892
    %v2894 = vrot.slane %v2893, 1
    %v2895 = vadd.f32 %v2893, %v2894
    %v2896 = vsel %vm513, %v2815, 0.0
    %v2897 = vsel %vm513, %v2816, 0.0
    %v2898 = vadd.f32 %v2896, %v2897
    %v2899 = vrot.slane %v2898, 4
    %v2900 = vadd.f32 %v2898, %v2899
    %v2901 = vrot.slane %v2900, 2
    %v2902 = vadd.f32 %v2900, %v2901
    %v2903 = vrot.slane %v2902, 1
    %v2904 = vadd.f32 %v2902, %v2903
    %v2905 = vsel %vm513, %v2817, 0.0
    %v2906 = vsel %vm513, %v2818, 0.0
    %v2907 = vadd.f32 %v2905, %v2906
    %v2908 = vrot.slane %v2907, 4
    %v2909 = vadd.f32 %v2907, %v2908
    %v2910 = vrot.slane %v2909, 2
    %v2911 = vadd.f32 %v2909, %v2910
    %v2912 = vrot.slane %v2911, 1
    %v2913 = vadd.f32 %v2911, %v2912
    %v2914 = vsel %vm513, %v2819, 0.0
    %v2915 = vsel %vm513, %v2820, 0.0
    %v2916 = vadd.f32 %v2914, %v2915
    %v2917 = vrot.slane %v2916, 4
    %v2918 = vadd.f32 %v2916, %v2917
    %v2919 = vrot.slane %v2918, 2
    %v2920 = vadd.f32 %v2918, %v2919
    %v2921 = vrot.slane %v2920, 1
    %v2922 = vadd.f32 %v2920, %v2921
    %v2923 = vsel %vm513, %v2821, 0.0
    %v2924 = vsel %vm513, %v2822, 0.0
    %v2925 = vadd.f32 %v2923, %v2924
    %v2926 = vrot.slane %v2925, 4
    %v2927 = vadd.f32 %v2925, %v2926
    %v2928 = vrot.slane %v2927, 2
    %v2929 = vadd.f32 %v2927, %v2928
    %v2930 = vrot.slane %v2929, 1
    %v2931 = vadd.f32 %v2929, %v2930
    %v2932 = vsel %vm513, %v2823, 0.0
    %v2933 = vsel %vm513, %v2824, 0.0
    %v2934 = vadd.f32 %v2932, %v2933
    %v2935 = vrot.slane %v2934, 4
    %v2936 = vadd.f32 %v2934, %v2935
    %v2937 = vrot.slane %v2936, 2
    %v2938 = vadd.f32 %v2936, %v2937
    %v2939 = vrot.slane %v2938, 1
    %v2940 = vadd.f32 %v2938, %v2939
    %v2941 = vsel %vm513, %v2825, 0.0
    %v2942 = vsel %vm513, %v2826, 0.0
    %v2943 = vadd.f32 %v2941, %v2942
    %v2944 = vrot.slane %v2943, 4
    %v2945 = vadd.f32 %v2943, %v2944
    %v2946 = vrot.slane %v2945, 2
    %v2947 = vadd.f32 %v2945, %v2946
    %v2948 = vrot.slane %v2947, 1
    %v2949 = vadd.f32 %v2947, %v2948
    %v2950 = vsel %vm513, %v2827, 0.0
    %v2951 = vsel %vm513, %v2828, 0.0
    %v2952 = vadd.f32 %v2950, %v2951
    %v2953 = vrot.slane %v2952, 4
    %v2954 = vadd.f32 %v2952, %v2953
    %v2955 = vrot.slane %v2954, 2
    %v2956 = vadd.f32 %v2954, %v2955
    %v2957 = vrot.slane %v2956, 1
    %v2958 = vadd.f32 %v2956, %v2957
    %v2959 = vsel %vm513, %v2829, 0.0
    %v2960 = vsel %vm513, %v2830, 0.0
    %v2961 = vadd.f32 %v2959, %v2960
    %v2962 = vrot.slane %v2961, 4
    %v2963 = vadd.f32 %v2961, %v2962
    %v2964 = vrot.slane %v2963, 2
    %v2965 = vadd.f32 %v2963, %v2964
    %v2966 = vrot.slane %v2965, 1
    %v2967 = vadd.f32 %v2965, %v2966
    %v2968 = vsel %vm513, %v2831, 0.0
    %v2969 = vsel %vm513, %v2832, 0.0
    %v2970 = vadd.f32 %v2968, %v2969
    %v2971 = vrot.slane %v2970, 4
    %v2972 = vadd.f32 %v2970, %v2971
    %v2973 = vrot.slane %v2972, 2
    %v2974 = vadd.f32 %v2972, %v2973
    %v2975 = vrot.slane %v2974, 1
    %v2976 = vadd.f32 %v2974, %v2975
    %v2977 = vpack.c.bf16 %v2537, %v2537
    %v2978 = vpack.c.bf16 %v2546, %v2546
    %v2979 = vpack.c.bf16 %v2555, %v2555
    %v2980 = vpack.c.bf16 %v2564, %v2564
    %v2981 = vpack.c.bf16 %v2573, %v2573
    %v2982 = vpack.c.bf16 %v2582, %v2582
    %v2983 = vpack.c.bf16 %v2591, %v2591
    %v2984 = vpack.c.bf16 %v2600, %v2600
    %v2985 = vpack.c.bf16 %v2609, %v2609
    %v2986 = vpack.c.bf16 %v2618, %v2618
    %v2987 = vpack.c.bf16 %v2627, %v2627
    %v2988 = vpack.c.bf16 %v2636, %v2636
    %v2989 = vpack.c.bf16 %v2645, %v2645
    %v2990 = vpack.c.bf16 %v2654, %v2654
    %v2991 = vpack.c.bf16 %v2663, %v2663
    %v2992 = vpack.c.bf16 %v2672, %v2672
    %v2993 = vld [vmem:[#allocation26] sm:$0xf]
    %v2994 = vld [vmem:[#allocation26 + $0x4] sm:$0xf]
    %v2995 = vld [vmem:[#allocation26 + $0x8] sm:$0xf]
    %v2996 = vld [vmem:[#allocation26 + $0xc] sm:$0xf]
    %v3013 = vunpack.c.l.b16 %v2977
    %v3014 = vunpack.c.l.b16 %v2978
    %v3015 = vunpack.c.l.b16 %v2979
    %v3016 = vunpack.c.l.b16 %v2980
    %v3017 = vunpack.c.l.b16 %v2981
    %v3018 = vunpack.c.l.b16 %v2982
    %v3019 = vunpack.c.l.b16 %v2983
    %v3020 = vunpack.c.l.b16 %v2984
    %v3021 = vunpack.c.l.b16 %v2985
    %v3022 = vunpack.c.l.b16 %v2986
    %v3023 = vunpack.c.l.b16 %v2987
    %v3024 = vunpack.c.l.b16 %v2988
    %v3025 = vunpack.c.l.b16 %v2989
    %v3026 = vunpack.c.l.b16 %v2990
    %v3027 = vunpack.c.l.b16 %v2991
    %v3028 = vunpack.c.l.b16 %v2992
    %vm3029 = vcmask 1041409
    %v3030 = vsel %vm3029, %v3014, %v3013
    %vm3031 = vcmask 1042434
    %v3032 = vsel %vm3031, %v3015, %v3030
    %vm3033 = vcmask 1043459
    %v3034 = vsel %vm3033, %v3016, %v3032
    %vm3035 = vcmask 1044484
    %v3036 = vsel %vm3035, %v3017, %v3034
    %vm3037 = vcmask 1045509
    %v3038 = vsel %vm3037, %v3018, %v3036
    %vm3039 = vcmask 1046534
    %v3040 = vsel %vm3039, %v3019, %v3038
    %vm3041 = vcmask 1047559
    %v3042 = vsel %vm3041, %v3020, %v3040
    %v3043 = vsel %vm3029, %v3022, %v3021
    %v3044 = vsel %vm3031, %v3023, %v3043
    %v3045 = vsel %vm3033, %v3024, %v3044
    %v3046 = vsel %vm3035, %v3025, %v3045
    %v3047 = vsel %vm3037, %v3026, %v3046
    %v3048 = vsel %vm3039, %v3027, %v3047
    %v3049 = vsel %vm3041, %v3028, %v3048
    %v3050 = vpack.c.b16 %v3049, %v3042
    %v3055 = vunpack.c.l.b16 %v2993
    %v3056 = vunpack.c.l.b16 %v2994
    %v3057 = vunpack.c.l.b16 %v2995
    %v3058 = vunpack.c.l.b16 %v2996
    %v3059 = vpack.c.b16 %v3056, %v3055
    %v3060 = vpack.c.b16 %v3058, %v3057
    %v3064 = vsel %vm513, %v3050, 0
    %3066 = vmatprep.subr.bf16.mxu0 0
    %3067 = vmatpush1.bf16.msra.mxu0 %v3059
    %3068 = vmatprep.subr.bf16.mxu0 0
    %3069 = vmatpush1.bf16.msra.mxu0 %v3060
    %3070 = vmatprep.subr.bf16.mxu0 0
    %3071 = vmatpush1.bf16.msra.mxu0 0
    %3072 = vmatprep.subr.bf16.mxu0 0
    %3073 = vmatpush1.bf16.msra.mxu0 0
    %3074 = vmatprep.subr.bf16.mxu0 0
    %3075 = vmatpush1.bf16.msra.mxu0 0
    %3076 = vmatprep.subr.bf16.mxu0 0
    %3077 = vmatpush1.bf16.msra.mxu0 0
    %3078 = vmatprep.subr.bf16.mxu0 0
    %3079 = vmatpush1.bf16.msra.mxu0 0
    %3080 = vmatprep.subr.bf16.mxu0 0
    %3081 = vmatpush1.bf16.msra.mxu0 0
    %3082 = vmatprep.subr.bf16.mxu0 0
    %3083 = vmatpush1.bf16.msra.mxu0 0
    %3084 = vmatprep.subr.bf16.mxu0 0
    %3085 = vmatpush1.bf16.msra.mxu0 0
    %3086 = vmatprep.subr.bf16.mxu0 0
    %3087 = vmatpush1.bf16.msra.mxu0 0
    %3088 = vmatprep.subr.bf16.mxu0 0
    %3089 = vmatpush1.bf16.msra.mxu0 0
    %3090 = vmatprep.subr.bf16.mxu0 0
    %3091 = vmatpush1.bf16.msra.mxu0 0
    %3092 = vmatprep.subr.bf16.mxu0 0
    %3093 = vmatpush1.bf16.msra.mxu0 0
    %3094 = vmatprep.subr.bf16.mxu0 0
    %3095 = vmatpush1.bf16.msra.mxu0 0
    %3096 = vmatprep.subr.bf16.mxu0 0
    %3097 = vmatpush1.bf16.msra.mxu0 0
    %3098 = vmatprep.mubr.bf16.mxu0 0
    %3099 = vmatmul.mubr.bf16.gmra.mrb[0].mxu0 %v3064
    %v3100 = vpop.f32.mrb[0].mxu0
    %v3101 = vadd.f32 0.0, %v3100
    %v3102 = vpop.f32.mrb[0].mxu0
    %v3103 = vpop.f32.mrb[0].mxu0
    %v3104 = vadd.f32 0.0, %v3103
    %v3105 = vpop.f32.mrb[0].mxu0
    %3106 = vdwg.mxu0
    %3109 = vrot.lane.b32.xlu0 %v3101, 64
    %v3110 = vpop.permute.xlu0 %3109
    %3111 = vrot.lane.b32.xlu0 %v3104, 64
    %v3112 = vpop.permute.xlu0 %3111
    %v3115 = vadd.f32 %v746, %v3110
    %v3116 = vadd.f32 %v749, %v3112
    %v3117 = vld [vmem:[#allocation38] sm:$0x1]
    %v3119 = vlaneseq
    %v3120 = vshrl.u32 %v3119, 7
    %v3121 = vsub.s32 0, %v3120
    %v3122 = vrot.slane %v3117, %v3121
    %3123 = vrot.lane.b32.xlu0 %v3122, 64
    %v3124 = vpop.permute.xlu0 %3123
    %v3126 = vadd.f32 %v3115, %v3124
    %v3127 = vadd.f32 %v3116, %v3124
    %v3128 = vld [vmem:[#allocation36] sm:$0x1]
    %v3130 = vlaneseq
    %v3131 = vshrl.u32 %v3130, 7
    %v3132 = vsub.s32 0, %v3131
    %v3133 = vrot.slane %v3128, %v3132
    %3134 = vrot.lane.b32.xlu0 %v3133, 96
    %v3135 = vpop.permute.xlu0 %3134
    %v3137 = vadd.f32 %v3115, %v3135
    %v3138 = vadd.f32 %v3116, %v3135
    %v3139 = vld [vmem:[#allocation39] sm:$0x1]
    %v3142 = vcombine.high %v3126, %v3126
    %v3144 = vunpack.c.l.s4 1966171168
    %v3145 = vunpack.c.0.s8 %v3144
    %v3146 = vlaneseq
    %v3147 = vshrl.u32 %v3146, 7
    %v3148 = vsub.s32 %v3145, %v3147
    %v3149 = vrot.slane %v3126, %v3148
    %v3151 = vunpack.c.l.s4 1966171168
    %v3152 = vunpack.c.0.s8 %v3151
    %v3153 = vlaneseq
    %v3154 = vshrl.u32 %v3153, 7
    %v3155 = vsub.s32 %v3152, %v3154
    %v3156 = vrot.slane %v3142, %v3155
    %v3157 = vcombine.high %v3149, %v3149
    %v3158 = vcombine.high %v3156, %v3156
    %v3160 = vunpack.c.l.s4 1966171168
    %v3161 = vunpack.c.0.s8 %v3160
    %v3162 = vlaneseq
    %v3163 = vshrl.u32 %v3162, 7
    %v3164 = vsub.s32 %v3161, %v3163
    %v3165 = vrot.slane %v3149, %v3164
    %v3167 = vunpack.c.l.s4 1966171168
    %v3168 = vunpack.c.0.s8 %v3167
    %v3169 = vlaneseq
    %v3170 = vshrl.u32 %v3169, 7
    %v3171 = vsub.s32 %v3168, %v3170
    %v3172 = vrot.slane %v3156, %v3171
    %v3174 = vunpack.c.l.s4 1966171168
    %v3175 = vunpack.c.0.s8 %v3174
    %v3176 = vlaneseq
    %v3177 = vshrl.u32 %v3176, 7
    %v3178 = vsub.s32 %v3175, %v3177
    %v3179 = vrot.slane %v3157, %v3178
    %v3181 = vunpack.c.l.s4 1966171168
    %v3182 = vunpack.c.0.s8 %v3181
    %v3183 = vlaneseq
    %v3184 = vshrl.u32 %v3183, 7
    %v3185 = vsub.s32 %v3182, %v3184
    %v3186 = vrot.slane %v3158, %v3185
    %v3187 = vcombine.high %v3165, %v3165
    %v3188 = vcombine.high %v3172, %v3172
    %v3189 = vcombine.high %v3179, %v3179
    %v3190 = vcombine.high %v3186, %v3186
    %v3191 = vcombine.high %v3127, %v3127
    %v3193 = vunpack.c.l.s4 1966171168
    %v3194 = vunpack.c.0.s8 %v3193
    %v3195 = vlaneseq
    %v3196 = vshrl.u32 %v3195, 7
    %v3197 = vsub.s32 %v3194, %v3196
    %v3198 = vrot.slane %v3127, %v3197
    %v3200 = vunpack.c.l.s4 1966171168
    %v3201 = vunpack.c.0.s8 %v3200
    %v3202 = vlaneseq
    %v3203 = vshrl.u32 %v3202, 7
    %v3204 = vsub.s32 %v3201, %v3203
    %v3205 = vrot.slane %v3191, %v3204
    %v3206 = vcombine.high %v3198, %v3198
    %v3207 = vcombine.high %v3205, %v3205
    %v3209 = vunpack.c.l.s4 1966171168
    %v3210 = vunpack.c.0.s8 %v3209
    %v3211 = vlaneseq
    %v3212 = vshrl.u32 %v3211, 7
    %v3213 = vsub.s32 %v3210, %v3212
    %v3214 = vrot.slane %v3198, %v3213
    %v3216 = vunpack.c.l.s4 1966171168
    %v3217 = vunpack.c.0.s8 %v3216
    %v3218 = vlaneseq
    %v3219 = vshrl.u32 %v3218, 7
    %v3220 = vsub.s32 %v3217, %v3219
    %v3221 = vrot.slane %v3205, %v3220
    %v3223 = vunpack.c.l.s4 1966171168
    %v3224 = vunpack.c.0.s8 %v3223
    %v3225 = vlaneseq
    %v3226 = vshrl.u32 %v3225, 7
    %v3227 = vsub.s32 %v3224, %v3226
    %v3228 = vrot.slane %v3206, %v3227
    %v3230 = vunpack.c.l.s4 1966171168
    %v3231 = vunpack.c.0.s8 %v3230
    %v3232 = vlaneseq
    %v3233 = vshrl.u32 %v3232, 7
    %v3234 = vsub.s32 %v3231, %v3233
    %v3235 = vrot.slane %v3207, %v3234
    %v3236 = vcombine.high %v3214, %v3214
    %v3237 = vcombine.high %v3221, %v3221
    %v3238 = vcombine.high %v3228, %v3228
    %v3239 = vcombine.high %v3235, %v3235
    %v3240 = vlaneseq
    %v3241 = vshrl.u32 %v3240, 7
    %v3242 = vsub.s32 0, %v3241
    %v3243 = vrot.slane %v3165, %v3242
    %v3244 = vlaneseq
    %v3245 = vshrl.u32 %v3244, 7
    %v3246 = vsub.s32 0, %v3245
    %v3247 = vrot.slane %v3179, %v3246
    %v3248 = vlaneseq
    %v3249 = vshrl.u32 %v3248, 7
    %v3250 = vsub.s32 0, %v3249
    %v3251 = vrot.slane %v3187, %v3250
    %v3252 = vlaneseq
    %v3253 = vshrl.u32 %v3252, 7
    %v3254 = vsub.s32 0, %v3253
    %v3255 = vrot.slane %v3189, %v3254
    %v3256 = vlaneseq
    %v3257 = vshrl.u32 %v3256, 7
    %v3258 = vsub.s32 0, %v3257
    %v3259 = vrot.slane %v3172, %v3258
    %v3260 = vlaneseq
    %v3261 = vshrl.u32 %v3260, 7
    %v3262 = vsub.s32 0, %v3261
    %v3263 = vrot.slane %v3186, %v3262
    %v3264 = vlaneseq
    %v3265 = vshrl.u32 %v3264, 7
    %v3266 = vsub.s32 0, %v3265
    %v3267 = vrot.slane %v3188, %v3266
    %v3268 = vlaneseq
    %v3269 = vshrl.u32 %v3268, 7
    %v3270 = vsub.s32 0, %v3269
    %v3271 = vrot.slane %v3190, %v3270
    %v3272 = vlaneseq
    %v3273 = vshrl.u32 %v3272, 7
    %v3274 = vsub.s32 0, %v3273
    %v3275 = vrot.slane %v3214, %v3274
    %v3276 = vlaneseq
    %v3277 = vshrl.u32 %v3276, 7
    %v3278 = vsub.s32 0, %v3277
    %v3279 = vrot.slane %v3228, %v3278
    %v3280 = vlaneseq
    %v3281 = vshrl.u32 %v3280, 7
    %v3282 = vsub.s32 0, %v3281
    %v3283 = vrot.slane %v3236, %v3282
    %v3284 = vlaneseq
    %v3285 = vshrl.u32 %v3284, 7
    %v3286 = vsub.s32 0, %v3285
    %v3287 = vrot.slane %v3238, %v3286
    %v3288 = vlaneseq
    %v3289 = vshrl.u32 %v3288, 7
    %v3290 = vsub.s32 0, %v3289
    %v3291 = vrot.slane %v3221, %v3290
    %v3292 = vlaneseq
    %v3293 = vshrl.u32 %v3292, 7
    %v3294 = vsub.s32 0, %v3293
    %v3295 = vrot.slane %v3235, %v3294
    %v3296 = vlaneseq
    %v3297 = vshrl.u32 %v3296, 7
    %v3298 = vsub.s32 0, %v3297
    %v3299 = vrot.slane %v3237, %v3298
    %v3300 = vlaneseq
    %v3301 = vshrl.u32 %v3300, 7
    %v3302 = vsub.s32 0, %v3301
    %v3303 = vrot.slane %v3239, %v3302
    %3304 = vrot.lane.b32.xlu0 %v3243, 64
    %v3305 = vpop.permute.xlu0 %3304
    %3306 = vrot.lane.b32.xlu0 %v3247, 64
    %v3307 = vpop.permute.xlu0 %3306
    %3308 = vrot.lane.b32.xlu0 %v3251, 64
    %v3309 = vpop.permute.xlu0 %3308
    %3310 = vrot.lane.b32.xlu0 %v3255, 64
    %v3311 = vpop.permute.xlu0 %3310
    %3312 = vrot.lane.b32.xlu0 %v3259, 64
    %v3313 = vpop.permute.xlu0 %3312
    %3314 = vrot.lane.b32.xlu0 %v3263, 64
    %v3315 = vpop.permute.xlu0 %3314
    %3316 = vrot.lane.b32.xlu0 %v3267, 64
    %v3317 = vpop.permute.xlu0 %3316
    %3318 = vrot.lane.b32.xlu0 %v3271, 64
    %v3319 = vpop.permute.xlu0 %3318
    %3320 = vrot.lane.b32.xlu0 %v3275, 64
    %v3321 = vpop.permute.xlu0 %3320
    %3322 = vrot.lane.b32.xlu0 %v3279, 64
    %v3323 = vpop.permute.xlu0 %3322
    %3324 = vrot.lane.b32.xlu0 %v3283, 64
    %v3325 = vpop.permute.xlu0 %3324
    %3326 = vrot.lane.b32.xlu0 %v3287, 64
    %v3327 = vpop.permute.xlu0 %3326
    %3328 = vrot.lane.b32.xlu0 %v3291, 64
    %v3329 = vpop.permute.xlu0 %3328
    %3330 = vrot.lane.b32.xlu0 %v3295, 64
    %v3331 = vpop.permute.xlu0 %3330
    %3332 = vrot.lane.b32.xlu0 %v3299, 64
    %v3333 = vpop.permute.xlu0 %3332
    %3334 = vrot.lane.b32.xlu0 %v3303, 64
    %v3335 = vpop.permute.xlu0 %3334
    %v3352 = vadd.f32 %v488, %v3305
    %v3353 = vadd.f32 %v488, %v3307
    %v3354 = vadd.f32 %v488, %v3309
    %v3355 = vadd.f32 %v488, %v3311
    %v3356 = vadd.f32 %v488, %v3313
    %v3357 = vadd.f32 %v488, %v3315
    %v3358 = vadd.f32 %v488, %v3317
    %v3359 = vadd.f32 %v488, %v3319
    %v3360 = vadd.f32 %v488, %v3321
    %v3361 = vadd.f32 %v488, %v3323
    %v3362 = vadd.f32 %v488, %v3325
    %v3363 = vadd.f32 %v488, %v3327
    %v3364 = vadd.f32 %v488, %v3329
    %v3365 = vadd.f32 %v488, %v3331
    %v3366 = vadd.f32 %v488, %v3333
    %v3367 = vadd.f32 %v488, %v3335
    %v3368 = vtanh.pop %v3352
    %v3369 = vtanh.pop %v3353
    %v3370 = vtanh.pop %v3354
    %v3371 = vtanh.pop %v3355
    %v3372 = vtanh.pop %v3356
    %v3373 = vtanh.pop %v3357
    %v3374 = vtanh.pop %v3358
    %v3375 = vtanh.pop %v3359
    %v3376 = vtanh.pop %v3360
    %v3377 = vtanh.pop %v3361
    %v3378 = vtanh.pop %v3362
    %v3379 = vtanh.pop %v3363
    %v3380 = vtanh.pop %v3364
    %v3381 = vtanh.pop %v3365
    %v3382 = vtanh.pop %v3366
    %v3383 = vtanh.pop %v3367
    %v3385 = vlaneseq
    %v3386 = vshrl.u32 %v3385, 7
    %v3387 = vsub.s32 0, %v3386
    %v3388 = vrot.slane %v3139, %v3387
    %v3390 = vmul.f32 %v3368, %v3388
    %v3391 = vmul.f32 %v3369, %v3388
    %v3392 = vmul.f32 %v3370, %v3388
    %v3393 = vmul.f32 %v3371, %v3388
    %v3394 = vmul.f32 %v3372, %v3388
    %v3395 = vmul.f32 %v3373, %v3388
    %v3396 = vmul.f32 %v3374, %v3388
    %v3397 = vmul.f32 %v3375, %v3388
    %v3398 = vmul.f32 %v3376, %v3388
    %v3399 = vmul.f32 %v3377, %v3388
    %v3400 = vmul.f32 %v3378, %v3388
    %v3401 = vmul.f32 %v3379, %v3388
    %v3402 = vmul.f32 %v3380, %v3388
    %v3403 = vmul.f32 %v3381, %v3388
    %v3404 = vmul.f32 %v3382, %v3388
    %v3405 = vmul.f32 %v3383, %v3388
    %v3406 = vsel %vm513, %v3390, 0.0
    %3407 = vadd.xlane.f32.xlu0 %v3406
    %v3408 = vpop.xlane.xlu0 %3407
    %v3409 = vsel %vm513, %v3391, 0.0
    %3410 = vadd.xlane.f32.xlu0 %v3409
    %v3411 = vpop.xlane.xlu0 %3410
    %v3412 = vsel %vm513, %v3392, 0.0
    %3413 = vadd.xlane.f32.xlu0 %v3412
    %v3414 = vpop.xlane.xlu0 %3413
    %v3415 = vsel %vm513, %v3393, 0.0
    %3416 = vadd.xlane.f32.xlu0 %v3415
    %v3417 = vpop.xlane.xlu0 %3416
    %v3418 = vsel %vm513, %v3394, 0.0
    %3419 = vadd.xlane.f32.xlu0 %v3418
    %v3420 = vpop.xlane.xlu0 %3419
    %v3421 = vsel %vm513, %v3395, 0.0
    %3422 = vadd.xlane.f32.xlu0 %v3421
    %v3423 = vpop.xlane.xlu0 %3422
    %v3424 = vsel %vm513, %v3396, 0.0
    %3425 = vadd.xlane.f32.xlu0 %v3424
    %v3426 = vpop.xlane.xlu0 %3425
    %v3427 = vsel %vm513, %v3397, 0.0
    %3428 = vadd.xlane.f32.xlu0 %v3427
    %v3429 = vpop.xlane.xlu0 %3428
    %v3430 = vsel %vm513, %v3398, 0.0
    %3431 = vadd.xlane.f32.xlu0 %v3430
    %v3432 = vpop.xlane.xlu0 %3431
    %v3433 = vsel %vm513, %v3399, 0.0
    %3434 = vadd.xlane.f32.xlu0 %v3433
    %v3435 = vpop.xlane.xlu0 %3434
    %v3436 = vsel %vm513, %v3400, 0.0
    %3437 = vadd.xlane.f32.xlu0 %v3436
    %v3438 = vpop.xlane.xlu0 %3437
    %v3439 = vsel %vm513, %v3401, 0.0
    %3440 = vadd.xlane.f32.xlu0 %v3439
    %v3441 = vpop.xlane.xlu0 %3440
    %v3442 = vsel %vm513, %v3402, 0.0
    %3443 = vadd.xlane.f32.xlu0 %v3442
    %v3444 = vpop.xlane.xlu0 %3443
    %v3445 = vsel %vm513, %v3403, 0.0
    %3446 = vadd.xlane.f32.xlu0 %v3445
    %v3447 = vpop.xlane.xlu0 %3446
    %v3448 = vsel %vm513, %v3404, 0.0
    %3449 = vadd.xlane.f32.xlu0 %v3448
    %v3450 = vpop.xlane.xlu0 %3449
    %v3451 = vsel %vm513, %v3405, 0.0
    %3452 = vadd.xlane.f32.xlu0 %v3451
    %v3453 = vpop.xlane.xlu0 %3452
    %vm3454 = vcmp.gt.f32.partialorder %v482, 0.5
    %vm3455 = vcmp.gt.f32.partialorder %v483, 0.5
    %v3472 = vlaneseq
    %v3473 = vand.u32 %v3472, 127
    %v3474 = vlaneseq
    %v3475 = vshrl.u32 %v3474, 7
    %v3476 = vsub.s32 %v3473, %v3475
    %v3477 = vrot.slane %v3408, %v3476
    %v3478 = vlaneseq
    %v3479 = vshrl.u32 %v3478, 7
    %v3480 = vsub.s32 %v3473, %v3479
    %v3481 = vrot.slane %v3411, %v3480
    %v3482 = vlaneseq
    %v3483 = vshrl.u32 %v3482, 7
    %v3484 = vsub.s32 %v3473, %v3483
    %v3485 = vrot.slane %v3414, %v3484
    %v3486 = vlaneseq
    %v3487 = vshrl.u32 %v3486, 7
    %v3488 = vsub.s32 %v3473, %v3487
    %v3489 = vrot.slane %v3417, %v3488
    %v3490 = vlaneseq
    %v3491 = vshrl.u32 %v3490, 7
    %v3492 = vsub.s32 %v3473, %v3491
    %v3493 = vrot.slane %v3420, %v3492
    %v3494 = vlaneseq
    %v3495 = vshrl.u32 %v3494, 7
    %v3496 = vsub.s32 %v3473, %v3495
    %v3497 = vrot.slane %v3423, %v3496
    %v3498 = vlaneseq
    %v3499 = vshrl.u32 %v3498, 7
    %v3500 = vsub.s32 %v3473, %v3499
    %v3501 = vrot.slane %v3426, %v3500
    %v3502 = vlaneseq
    %v3503 = vshrl.u32 %v3502, 7
    %v3504 = vsub.s32 %v3473, %v3503
    %v3505 = vrot.slane %v3429, %v3504
    %v3506 = vlaneseq
    %v3507 = vshrl.u32 %v3506, 7
    %v3508 = vsub.s32 %v3473, %v3507
    %v3509 = vrot.slane %v3432, %v3508
    %v3510 = vlaneseq
    %v3511 = vshrl.u32 %v3510, 7
    %v3512 = vsub.s32 %v3473, %v3511
    %v3513 = vrot.slane %v3435, %v3512
    %v3514 = vlaneseq
    %v3515 = vshrl.u32 %v3514, 7
    %v3516 = vsub.s32 %v3473, %v3515
    %v3517 = vrot.slane %v3438, %v3516
    %v3518 = vlaneseq
    %v3519 = vshrl.u32 %v3518, 7
    %v3520 = vsub.s32 %v3473, %v3519
    %v3521 = vrot.slane %v3441, %v3520
    %v3522 = vlaneseq
    %v3523 = vshrl.u32 %v3522, 7
    %v3524 = vsub.s32 %v3473, %v3523
    %v3525 = vrot.slane %v3444, %v3524
    %v3526 = vlaneseq
    %v3527 = vshrl.u32 %v3526, 7
    %v3528 = vsub.s32 %v3473, %v3527
    %v3529 = vrot.slane %v3447, %v3528
    %v3530 = vlaneseq
    %v3531 = vshrl.u32 %v3530, 7
    %v3532 = vsub.s32 %v3473, %v3531
    %v3533 = vrot.slane %v3450, %v3532
    %v3534 = vlaneseq
    %v3535 = vshrl.u32 %v3534, 7
    %v3536 = vsub.s32 %v3473, %v3535
    %v3537 = vrot.slane %v3453, %v3536
    %v3538 = vsel %vm3029, %v3481, %v3477
    %v3539 = vsel %vm3031, %v3485, %v3538
    %v3540 = vsel %vm3033, %v3489, %v3539
    %v3541 = vsel %vm3035, %v3493, %v3540
    %v3542 = vsel %vm3037, %v3497, %v3541
    %v3543 = vsel %vm3039, %v3501, %v3542
    %v3544 = vsel %vm3041, %v3505, %v3543
    %v3545 = vsel %vm3029, %v3513, %v3509
    %v3546 = vsel %vm3031, %v3517, %v3545
    %v3547 = vsel %vm3033, %v3521, %v3546
    %v3548 = vsel %vm3035, %v3525, %v3547
    %v3549 = vsel %vm3037, %v3529, %v3548
    %v3550 = vsel %vm3039, %v3533, %v3549
    %v3551 = vsel %vm3041, %v3537, %v3550
    %v3554 = vsel %vm3454, -1e+12, %v3544
    %v3555 = vsel %vm3455, -1e+12, %v3551
    %v3556 = vld [vmem:[#allocation29] sm:$0xf]
    %v3557 = vld [vmem:[#allocation29 + $0x4] sm:$0xf]
    %v3558 = vld [vmem:[#allocation29 + $0x8] sm:$0xf]
    %v3559 = vld [vmem:[#allocation29 + $0xc] sm:$0xf]
    %v3592 = vunpack.c.l.b16 %v448
    %v3593 = vunpack.c.l.b16 %v449
    %v3594 = vunpack.c.l.b16 %v450
    %v3595 = vunpack.c.l.b16 %v451
    %v3596 = vunpack.c.l.b16 %v452
    %v3597 = vunpack.c.l.b16 %v453
    %v3598 = vunpack.c.l.b16 %v454
    %v3599 = vunpack.c.l.b16 %v455
    %v3600 = vunpack.c.l.b16 %v456
    %v3601 = vunpack.c.l.b16 %v457
    %v3602 = vunpack.c.l.b16 %v458
    %v3603 = vunpack.c.l.b16 %v459
    %v3604 = vunpack.c.l.b16 %v460
    %v3605 = vunpack.c.l.b16 %v461
    %v3606 = vunpack.c.l.b16 %v462
    %v3607 = vunpack.c.l.b16 %v463
    %v3608 = vunpack.c.l.b16 %v464
    %v3609 = vunpack.c.l.b16 %v465
    %v3610 = vunpack.c.l.b16 %v466
    %v3611 = vunpack.c.l.b16 %v467
    %v3612 = vunpack.c.l.b16 %v468
    %v3613 = vunpack.c.l.b16 %v469
    %v3614 = vunpack.c.l.b16 %v470
    %v3615 = vunpack.c.l.b16 %v471
    %v3616 = vunpack.c.l.b16 %v472
    %v3617 = vunpack.c.l.b16 %v473
    %v3618 = vunpack.c.l.b16 %v474
    %v3619 = vunpack.c.l.b16 %v475
    %v3620 = vunpack.c.l.b16 %v476
    %v3621 = vunpack.c.l.b16 %v477
    %v3622 = vunpack.c.l.b16 %v478
    %v3623 = vunpack.c.l.b16 %v479
    %v3624 = vpack.c.b16 %v3593, %v3592
    %v3625 = vpack.c.b16 %v3595, %v3594
    %v3626 = vpack.c.b16 %v3597, %v3596
    %v3627 = vpack.c.b16 %v3599, %v3598
    %v3628 = vpack.c.b16 %v3601, %v3600
    %v3629 = vpack.c.b16 %v3603, %v3602
    %v3630 = vpack.c.b16 %v3605, %v3604
    %v3631 = vpack.c.b16 %v3607, %v3606
    %v3632 = vpack.c.b16 %v3609, %v3608
    %v3633 = vpack.c.b16 %v3611, %v3610
    %v3634 = vpack.c.b16 %v3613, %v3612
    %v3635 = vpack.c.b16 %v3615, %v3614
    %v3636 = vpack.c.b16 %v3617, %v3616
    %v3637 = vpack.c.b16 %v3619, %v3618
    %v3638 = vpack.c.b16 %v3621, %v3620
    %v3639 = vpack.c.b16 %v3623, %v3622
    %v3644 = vunpack.c.l.b16 %v3556
    %v3645 = vunpack.c.l.b16 %v3557
    %v3646 = vunpack.c.l.b16 %v3558
    %v3647 = vunpack.c.l.b16 %v3559
    %v3648 = vpack.c.b16 %v3645, %v3644
    %v3649 = vpack.c.b16 %v3647, %v3646
    %v3653 = vsel %vm513, %v3624, 0
    %v3656 = vsel %vm513, %v3625, 0
    %v3659 = vsel %vm513, %v3626, 0
    %v3662 = vsel %vm513, %v3627, 0
    %v3665 = vsel %vm513, %v3628, 0
    %v3668 = vsel %vm513, %v3629, 0
    %v3671 = vsel %vm513, %v3630, 0
    %v3674 = vsel %vm513, %v3631, 0
    %v3677 = vsel %vm513, %v3632, 0
    %v3680 = vsel %vm513, %v3633, 0
    %v3683 = vsel %vm513, %v3634, 0
    %v3686 = vsel %vm513, %v3635, 0
    %v3689 = vsel %vm513, %v3636, 0
    %v3692 = vsel %vm513, %v3637, 0
    %v3695 = vsel %vm513, %v3638, 0
    %v3698 = vsel %vm513, %v3639, 0
    %3700 = vmatprep.subr.bf16.mxu0 0
    %3701 = vmatpush1.bf16.msra.mxu0 %v3648
    %3702 = vmatprep.subr.bf16.mxu0 0
    %3703 = vmatpush1.bf16.msra.mxu0 %v3649
    %3704 = vmatprep.subr.bf16.mxu0 0
    %3705 = vmatpush1.bf16.msra.mxu0 0
    %3706 = vmatprep.subr.bf16.mxu0 0
    %3707 = vmatpush1.bf16.msra.mxu0 0
    %3708 = vmatprep.subr.bf16.mxu0 0
    %3709 = vmatpush1.bf16.msra.mxu0 0
    %3710 = vmatprep.subr.bf16.mxu0 0
    %3711 = vmatpush1.bf16.msra.mxu0 0
    %3712 = vmatprep.subr.bf16.mxu0 0
    %3713 = vmatpush1.bf16.msra.mxu0 0
    %3714 = vmatprep.subr.bf16.mxu0 0
    %3715 = vmatpush1.bf16.msra.mxu0 0
    %3716 = vmatprep.subr.bf16.mxu0 0
    %3717 = vmatpush1.bf16.msra.mxu0 0
    %3718 = vmatprep.subr.bf16.mxu0 0
    %3719 = vmatpush1.bf16.msra.mxu0 0
    %3720 = vmatprep.subr.bf16.mxu0 0
    %3721 = vmatpush1.bf16.msra.mxu0 0
    %3722 = vmatprep.subr.bf16.mxu0 0
    %3723 = vmatpush1.bf16.msra.mxu0 0
    %3724 = vmatprep.subr.bf16.mxu0 0
    %3725 = vmatpush1.bf16.msra.mxu0 0
    %3726 = vmatprep.subr.bf16.mxu0 0
    %3727 = vmatpush1.bf16.msra.mxu0 0
    %3728 = vmatprep.subr.bf16.mxu0 0
    %3729 = vmatpush1.bf16.msra.mxu0 0
    %3730 = vmatprep.subr.bf16.mxu0 0
    %3731 = vmatpush1.bf16.msra.mxu0 0
    %3732 = vmatprep.mubr.bf16.mxu0 0
    %3733 = vmatmul.mubr.bf16.gmra.mrb[0].mxu0 %v3653
    %v3734 = vpop.f32.mrb[0].mxu0
    %v3735 = vadd.f32 0.0, %v3734
    %v3736 = vpop.f32.mrb[0].mxu0
    %v3737 = vpop.f32.mrb[0].mxu0
    %v3738 = vadd.f32 0.0, %v3737
    %v3739 = vpop.f32.mrb[0].mxu0
    %3740 = vmatprep.mubr.bf16.mxu0 0
    %3741 = vmatmul.mubr.bf16.gmra.mrb[0].mxu0 %v3656
    %v3742 = vpop.f32.mrb[0].mxu0
    %v3743 = vadd.f32 0.0, %v3742
    %v3744 = vpop.f32.mrb[0].mxu0
    %v3745 = vpop.f32.mrb[0].mxu0
    %v3746 = vadd.f32 0.0, %v3745
    %v3747 = vpop.f32.mrb[0].mxu0
    %3748 = vmatprep.mubr.bf16.mxu0 0
    %3749 = vmatmul.mubr.bf16.gmra.mrb[0].mxu0 %v3659
    %v3750 = vpop.f32.mrb[0].mxu0
    %v3751 = vadd.f32 0.0, %v3750
    %v3752 = vpop.f32.mrb[0].mxu0
    %v3753 = vpop.f32.mrb[0].mxu0
    %v3754 = vadd.f32 0.0, %v3753
    %v3755 = vpop.f32.mrb[0].mxu0
    %3756 = vmatprep.mubr.bf16.mxu0 0
    %3757 = vmatmul.mubr.bf16.gmra.mrb[0].mxu0 %v3662
    %v3758 = vpop.f32.mrb[0].mxu0
    %v3759 = vadd.f32 0.0, %v3758
    %v3760 = vpop.f32.mrb[0].mxu0
    %v3761 = vpop.f32.mrb[0].mxu0
    %v3762 = vadd.f32 0.0, %v3761
    %v3763 = vpop.f32.mrb[0].mxu0
    %3764 = vmatprep.mubr.bf16.mxu0 0
    %3765 = vmatmul.mubr.bf16.gmra.mrb[0].mxu0 %v3665
    %v3766 = vpop.f32.mrb[0].mxu0
    %v3767 = vadd.f32 0.0, %v3766
    %v3768 = vpop.f32.mrb[0].mxu0
    %v3769 = vpop.f32.mrb[0].mxu0
    %v3770 = vadd.f32 0.0, %v3769
    %v3771 = vpop.f32.mrb[0].mxu0
    %3772 = vmatprep.mubr.bf16.mxu0 0
    %3773 = vmatmul.mubr.bf16.gmra.mrb[0].mxu0 %v3668
    %v3774 = vpop.f32.mrb[0].mxu0
    %v3775 = vadd.f32 0.0, %v3774
    %v3776 = vpop.f32.mrb[0].mxu0
    %v3777 = vpop.f32.mrb[0].mxu0
    %v3778 = vadd.f32 0.0, %v3777
    %v3779 = vpop.f32.mrb[0].mxu0
    %3780 = vmatprep.mubr.bf16.mxu0 0
    %3781 = vmatmul.mubr.bf16.gmra.mrb[0].mxu0 %v3671
    %v3782 = vpop.f32.mrb[0].mxu0
    %v3783 = vadd.f32 0.0, %v3782
    %v3784 = vpop.f32.mrb[0].mxu0
    %v3785 = vpop.f32.mrb[0].mxu0
    %v3786 = vadd.f32 0.0, %v3785
    %v3787 = vpop.f32.mrb[0].mxu0
    %3788 = vmatprep.mubr.bf16.mxu0 0
    %3789 = vmatmul.mubr.bf16.gmra.mrb[0].mxu0 %v3674
    %v3790 = vpop.f32.mrb[0].mxu0
    %v3791 = vadd.f32 0.0, %v3790
    %v3792 = vpop.f32.mrb[0].mxu0
    %v3793 = vpop.f32.mrb[0].mxu0
    %v3794 = vadd.f32 0.0, %v3793
    %v3795 = vpop.f32.mrb[0].mxu0
    %3796 = vmatprep.mubr.bf16.mxu0 0
    %3797 = vmatmul.mubr.bf16.gmra.mrb[0].mxu0 %v3677
    %v3798 = vpop.f32.mrb[0].mxu0
    %v3799 = vadd.f32 0.0, %v3798
    %v3800 = vpop.f32.mrb[0].mxu0
    %v3801 = vpop.f32.mrb[0].mxu0
    %v3802 = vadd.f32 0.0, %v3801
    %v3803 = vpop.f32.mrb[0].mxu0
    %3804 = vmatprep.mubr.bf16.mxu0 0
    %3805 = vmatmul.mubr.bf16.gmra.mrb[0].mxu0 %v3680
    %v3806 = vpop.f32.mrb[0].mxu0
    %v3807 = vadd.f32 0.0, %v3806
    %v3808 = vpop.f32.mrb[0].mxu0
    %v3809 = vpop.f32.mrb[0].mxu0
    %v3810 = vadd.f32 0.0, %v3809
    %v3811 = vpop.f32.mrb[0].mxu0
    %3812 = vmatprep.mubr.bf16.mxu0 0
    %3813 = vmatmul.mubr.bf16.gmra.mrb[0].mxu0 %v3683
    %v3814 = vpop.f32.mrb[0].mxu0
    %v3815 = vadd.f32 0.0, %v3814
    %v3816 = vpop.f32.mrb[0].mxu0
    %v3817 = vpop.f32.mrb[0].mxu0
    %v3818 = vadd.f32 0.0, %v3817
    %v3819 = vpop.f32.mrb[0].mxu0
    %3820 = vmatprep.mubr.bf16.mxu0 0
    %3821 = vmatmul.mubr.bf16.gmra.mrb[0].mxu0 %v3686
    %v3822 = vpop.f32.mrb[0].mxu0
    %v3823 = vadd.f32 0.0, %v3822
    %v3824 = vpop.f32.mrb[0].mxu0
    %v3825 = vpop.f32.mrb[0].mxu0
    %v3826 = vadd.f32 0.0, %v3825
    %v3827 = vpop.f32.mrb[0].mxu0
    %3828 = vmatprep.mubr.bf16.mxu0 0
    %3829 = vmatmul.mubr.bf16.gmra.mrb[0].mxu0 %v3689
    %v3830 = vpop.f32.mrb[0].mxu0
    %v3831 = vadd.f32 0.0, %v3830
    %v3832 = vpop.f32.mrb[0].mxu0
    %v3833 = vpop.f32.mrb[0].mxu0
    %v3834 = vadd.f32 0.0, %v3833
    %v3835 = vpop.f32.mrb[0].mxu0
    %3836 = vmatprep.mubr.bf16.mxu0 0
    %3837 = vmatmul.mubr.bf16.gmra.mrb[0].mxu0 %v3692
    %v3838 = vpop.f32.mrb[0].mxu0
    %v3839 = vadd.f32 0.0, %v3838
    %v3840 = vpop.f32.mrb[0].mxu0
    %v3841 = vpop.f32.mrb[0].mxu0
    %v3842 = vadd.f32 0.0, %v3841
    %v3843 = vpop.f32.mrb[0].mxu0
    %3844 = vmatprep.mubr.bf16.mxu0 0
    %3845 = vmatmul.mubr.bf16.gmra.mrb[0].mxu0 %v3695
    %v3846 = vpop.f32.mrb[0].mxu0
    %v3847 = vadd.f32 0.0, %v3846
    %v3848 = vpop.f32.mrb[0].mxu0
    %v3849 = vpop.f32.mrb[0].mxu0
    %v3850 = vadd.f32 0.0, %v3849
    %v3851 = vpop.f32.mrb[0].mxu0
    %3852 = vmatprep.mubr.bf16.mxu0 0
    %3853 = vmatmul.mubr.bf16.gmra.mrb[0].mxu0 %v3698
    %v3854 = vpop.f32.mrb[0].mxu0
    %v3855 = vadd.f32 0.0, %v3854
    %v3856 = vpop.f32.mrb[0].mxu0
    %v3857 = vpop.f32.mrb[0].mxu0
    %v3858 = vadd.f32 0.0, %v3857
    %v3859 = vpop.f32.mrb[0].mxu0
    %3860 = vdwg.mxu0
    %v3861 = vadd.f32 %v3735, %v3305
    %v3862 = vadd.f32 %v3738, %v3305
    %v3863 = vadd.f32 %v3743, %v3307
    %v3864 = vadd.f32 %v3746, %v3307
    %v3865 = vadd.f32 %v3751, %v3309
    %v3866 = vadd.f32 %v3754, %v3309
    %v3867 = vadd.f32 %v3759, %v3311
    %v3868 = vadd.f32 %v3762, %v3311
    %v3869 = vadd.f32 %v3767, %v3313
    %v3870 = vadd.f32 %v3770, %v3313
    %v3871 = vadd.f32 %v3775, %v3315
    %v3872 = vadd.f32 %v3778, %v3315
    %v3873 = vadd.f32 %v3783, %v3317
    %v3874 = vadd.f32 %v3786, %v3317
    %v3875 = vadd.f32 %v3791, %v3319
    %v3876 = vadd.f32 %v3794, %v3319
    %v3877 = vadd.f32 %v3799, %v3321
    %v3878 = vadd.f32 %v3802, %v3321
    %v3879 = vadd.f32 %v3807, %v3323
    %v3880 = vadd.f32 %v3810, %v3323
    %v3881 = vadd.f32 %v3815, %v3325
    %v3882 = vadd.f32 %v3818, %v3325
    %v3883 = vadd.f32 %v3823, %v3327
    %v3884 = vadd.f32 %v3826, %v3327
    %v3885 = vadd.f32 %v3831, %v3329
    %v3886 = vadd.f32 %v3834, %v3329
    %v3887 = vadd.f32 %v3839, %v3331
    %v3888 = vadd.f32 %v3842, %v3331
    %v3889 = vadd.f32 %v3847, %v3333
    %v3890 = vadd.f32 %v3850, %v3333
    %v3891 = vadd.f32 %v3855, %v3335
    %v3892 = vadd.f32 %v3858, %v3335
    %v3893 = vtanh.pop %v3861
    %v3894 = vtanh.pop %v3862
    %v3895 = vtanh.pop %v3863
    %v3896 = vtanh.pop %v3864
    %v3897 = vtanh.pop %v3865
    %v3898 = vtanh.pop %v3866
    %v3899 = vtanh.pop %v3867
    %v3900 = vtanh.pop %v3868
    %v3901 = vtanh.pop %v3869
    %v3902 = vtanh.pop %v3870
    %v3903 = vtanh.pop %v3871
    %v3904 = vtanh.pop %v3872
    %v3905 = vtanh.pop %v3873
    %v3906 = vtanh.pop %v3874
    %v3907 = vtanh.pop %v3875
    %v3908 = vtanh.pop %v3876
    %v3909 = vtanh.pop %v3877
    %v3910 = vtanh.pop %v3878
    %v3911 = vtanh.pop %v3879
    %v3912 = vtanh.pop %v3880
    %v3913 = vtanh.pop %v3881
    %v3914 = vtanh.pop %v3882
    %v3915 = vtanh.pop %v3883
    %v3916 = vtanh.pop %v3884
    %v3917 = vtanh.pop %v3885
    %v3918 = vtanh.pop %v3886
    %v3919 = vtanh.pop %v3887
    %v3920 = vtanh.pop %v3888
    %v3921 = vtanh.pop %v3889
    %v3922 = vtanh.pop %v3890
    %v3923 = vtanh.pop %v3891
    %v3924 = vtanh.pop %v3892
    %v3925 = vmul.f32 %v3893, %v3388
    %v3926 = vmul.f32 %v3894, %v3388
    %v3927 = vmul.f32 %v3895, %v3388
    %v3928 = vmul.f32 %v3896, %v3388
    %v3929 = vmul.f32 %v3897, %v3388
    %v3930 = vmul.f32 %v3898, %v3388
    %v3931 = vmul.f32 %v3899, %v3388
    %v3932 = vmul.f32 %v3900, %v3388
    %v3933 = vmul.f32 %v3901, %v3388
    %v3934 = vmul.f32 %v3902, %v3388
    %v3935 = vmul.f32 %v3903, %v3388
    %v3936 = vmul.f32 %v3904, %v3388
    %v3937 = vmul.f32 %v3905, %v3388
    %v3938 = vmul.f32 %v3906, %v3388
    %v3939 = vmul.f32 %v3907, %v3388
    %v3940 = vmul.f32 %v3908, %v3388
    %v3941 = vmul.f32 %v3909, %v3388
    %v3942 = vmul.f32 %v3910, %v3388
    %v3943 = vmul.f32 %v3911, %v3388
    %v3944 = vmul.f32 %v3912, %v3388
    %v3945 = vmul.f32 %v3913, %v3388
    %v3946 = vmul.f32 %v3914, %v3388
    %v3947 = vmul.f32 %v3915, %v3388
    %v3948 = vmul.f32 %v3916, %v3388
    %v3949 = vmul.f32 %v3917, %v3388
    %v3950 = vmul.f32 %v3918, %v3388
    %v3951 = vmul.f32 %v3919, %v3388
    %v3952 = vmul.f32 %v3920, %v3388
    %v3953 = vmul.f32 %v3921, %v3388
    %v3954 = vmul.f32 %v3922, %v3388
    %v3955 = vmul.f32 %v3923, %v3388
    %v3956 = vmul.f32 %v3924, %v3388
    %v3957 = vsel %vm513, %v3925, 0.0
    %3958 = vadd.xlane.f32.xlu0 %v3957
    %v3959 = vpop.xlane.xlu0 %3958
    %v3960 = vsel %vm513, %v3926, 0.0
    %3961 = vadd.xlane.f32.xlu0 %v3960
    %v3962 = vpop.xlane.xlu0 %3961
    %v3963 = vsel %vm513, %v3927, 0.0
    %3964 = vadd.xlane.f32.xlu0 %v3963
    %v3965 = vpop.xlane.xlu0 %3964
    %v3966 = vsel %vm513, %v3928, 0.0
    %3967 = vadd.xlane.f32.xlu0 %v3966
    %v3968 = vpop.xlane.xlu0 %3967
    %v3969 = vsel %vm513, %v3929, 0.0
    %3970 = vadd.xlane.f32.xlu0 %v3969
    %v3971 = vpop.xlane.xlu0 %3970
    %v3972 = vsel %vm513, %v3930, 0.0
    %3973 = vadd.xlane.f32.xlu0 %v3972
    %v3974 = vpop.xlane.xlu0 %3973
    %v3975 = vsel %vm513, %v3931, 0.0
    %3976 = vadd.xlane.f32.xlu0 %v3975
    %v3977 = vpop.xlane.xlu0 %3976
    %v3978 = vsel %vm513, %v3932, 0.0
    %3979 = vadd.xlane.f32.xlu0 %v3978
    %v3980 = vpop.xlane.xlu0 %3979
    %v3981 = vsel %vm513, %v3933, 0.0
    %3982 = vadd.xlane.f32.xlu0 %v3981
    %v3983 = vpop.xlane.xlu0 %3982
    %v3984 = vsel %vm513, %v3934, 0.0
    %3985 = vadd.xlane.f32.xlu0 %v3984
    %v3986 = vpop.xlane.xlu0 %3985
    %v3987 = vsel %vm513, %v3935, 0.0
    %3988 = vadd.xlane.f32.xlu0 %v3987
    %v3989 = vpop.xlane.xlu0 %3988
    %v3990 = vsel %vm513, %v3936, 0.0
    %3991 = vadd.xlane.f32.xlu0 %v3990
    %v3992 = vpop.xlane.xlu0 %3991
    %v3993 = vsel %vm513, %v3937, 0.0
    %3994 = vadd.xlane.f32.xlu0 %v3993
    %v3995 = vpop.xlane.xlu0 %3994
    %v3996 = vsel %vm513, %v3938, 0.0
    %3997 = vadd.xlane.f32.xlu0 %v3996
    %v3998 = vpop.xlane.xlu0 %3997
    %v3999 = vsel %vm513, %v3939, 0.0
    %4000 = vadd.xlane.f32.xlu0 %v3999
    %v4001 = vpop.xlane.xlu0 %4000
    %v4002 = vsel %vm513, %v3940, 0.0
    %4003 = vadd.xlane.f32.xlu0 %v4002
    %v4004 = vpop.xlane.xlu0 %4003
    %v4005 = vsel %vm513, %v3941, 0.0
    %4006 = vadd.xlane.f32.xlu0 %v4005
    %v4007 = vpop.xlane.xlu0 %4006
    %v4008 = vsel %vm513, %v3942, 0.0
    %4009 = vadd.xlane.f32.xlu0 %v4008
    %v4010 = vpop.xlane.xlu0 %4009
    %v4011 = vsel %vm513, %v3943, 0.0
    %4012 = vadd.xlane.f32.xlu0 %v4011
    %v4013 = vpop.xlane.xlu0 %4012
    %v4014 = vsel %vm513, %v3944, 0.0
    %4015 = vadd.xlane.f32.xlu0 %v4014
    %v4016 = vpop.xlane.xlu0 %4015
    %v4017 = vsel %vm513, %v3945, 0.0
    %4018 = vadd.xlane.f32.xlu0 %v4017
    %v4019 = vpop.xlane.xlu0 %4018
    %v4020 = vsel %vm513, %v3946, 0.0
    %4021 = vadd.xlane.f32.xlu0 %v4020
    %v4022 = vpop.xlane.xlu0 %4021
    %v4023 = vsel %vm513, %v3947, 0.0
    %4024 = vadd.xlane.f32.xlu0 %v4023
    %v4025 = vpop.xlane.xlu0 %4024
    %v4026 = vsel %vm513, %v3948, 0.0
    %4027 = vadd.xlane.f32.xlu0 %v4026
    %v4028 = vpop.xlane.xlu0 %4027
    %v4029 = vsel %vm513, %v3949, 0.0
    %4030 = vadd.xlane.f32.xlu0 %v4029
    %v4031 = vpop.xlane.xlu0 %4030
    %v4032 = vsel %vm513, %v3950, 0.0
    %4033 = vadd.xlane.f32.xlu0 %v4032
    %v4034 = vpop.xlane.xlu0 %4033
    %v4035 = vsel %vm513, %v3951, 0.0
    %4036 = vadd.xlane.f32.xlu0 %v4035
    %v4037 = vpop.xlane.xlu0 %4036
    %v4038 = vsel %vm513, %v3952, 0.0
    %4039 = vadd.xlane.f32.xlu0 %v4038
    %v4040 = vpop.xlane.xlu0 %4039
    %v4041 = vsel %vm513, %v3953, 0.0
    %4042 = vadd.xlane.f32.xlu0 %v4041
    %v4043 = vpop.xlane.xlu0 %4042
    %v4044 = vsel %vm513, %v3954, 0.0
    %4045 = vadd.xlane.f32.xlu0 %v4044
    %v4046 = vpop.xlane.xlu0 %4045
    %v4047 = vsel %vm513, %v3955, 0.0
    %4048 = vadd.xlane.f32.xlu0 %v4047
    %v4049 = vpop.xlane.xlu0 %4048
    %v4050 = vsel %vm513, %v3956, 0.0
    %4051 = vadd.xlane.f32.xlu0 %v4050
    %v4052 = vpop.xlane.xlu0 %4051
    %vm4053 = vcmp.gt.f32.partialorder %v484, 0.5
    %vm4054 = vcmp.gt.f32.partialorder %v485, 0.5
    %v4087 = vlaneseq
    %v4088 = vshrl.u32 %v4087, 7
    %v4089 = vsub.s32 %v3473, %v4088
    %v4090 = vrot.slane %v3959, %v4089
    %v4091 = vadd.s32 %v3473, 4294967288
    %v4092 = vlaneseq
    %v4093 = vshrl.u32 %v4092, 7
    %v4094 = vsub.s32 %v4091, %v4093
    %v4095 = vrot.slane %v3962, %v4094
    %vm4096 = vcmask 130112
    %v4097 = vsel %vm4096, %v4095, %v4090
    %v4098 = vlaneseq
    %v4099 = vshrl.u32 %v4098, 7
    %v4100 = vsub.s32 %v3473, %v4099
    %v4101 = vrot.slane %v3965, %v4100
    %v4102 = vlaneseq
    %v4103 = vshrl.u32 %v4102, 7
    %v4104 = vsub.s32 %v4091, %v4103
    %v4105 = vrot.slane %v3968, %v4104
    %v4106 = vsel %vm4096, %v4105, %v4101
    %v4107 = vlaneseq
    %v4108 = vshrl.u32 %v4107, 7
    %v4109 = vsub.s32 %v3473, %v4108
    %v4110 = vrot.slane %v3971, %v4109
    %v4111 = vlaneseq
    %v4112 = vshrl.u32 %v4111, 7
    %v4113 = vsub.s32 %v4091, %v4112
    %v4114 = vrot.slane %v3974, %v4113
    %v4115 = vsel %vm4096, %v4114, %v4110
    %v4116 = vlaneseq
    %v4117 = vshrl.u32 %v4116, 7
    %v4118 = vsub.s32 %v3473, %v4117
    %v4119 = vrot.slane %v3977, %v4118
    %v4120 = vlaneseq
    %v4121 = vshrl.u32 %v4120, 7
    %v4122 = vsub.s32 %v4091, %v4121
    %v4123 = vrot.slane %v3980, %v4122
    %v4124 = vsel %vm4096, %v4123, %v4119
    %v4125 = vlaneseq
    %v4126 = vshrl.u32 %v4125, 7
    %v4127 = vsub.s32 %v3473, %v4126
    %v4128 = vrot.slane %v3983, %v4127
    %v4129 = vlaneseq
    %v4130 = vshrl.u32 %v4129, 7
    %v4131 = vsub.s32 %v4091, %v4130
    %v4132 = vrot.slane %v3986, %v4131
    %v4133 = vsel %vm4096, %v4132, %v4128
    %v4134 = vlaneseq
    %v4135 = vshrl.u32 %v4134, 7
    %v4136 = vsub.s32 %v3473, %v4135
    %v4137 = vrot.slane %v3989, %v4136
    %v4138 = vlaneseq
    %v4139 = vshrl.u32 %v4138, 7
    %v4140 = vsub.s32 %v4091, %v4139
    %v4141 = vrot.slane %v3992, %v4140
    %v4142 = vsel %vm4096, %v4141, %v4137
    %v4143 = vlaneseq
    %v4144 = vshrl.u32 %v4143, 7
    %v4145 = vsub.s32 %v3473, %v4144
    %v4146 = vrot.slane %v3995, %v4145
    %v4147 = vlaneseq
    %v4148 = vshrl.u32 %v4147, 7
    %v4149 = vsub.s32 %v4091, %v4148
    %v4150 = vrot.slane %v3998, %v4149
    %v4151 = vsel %vm4096, %v4150, %v4146
    %v4152 = vlaneseq
    %v4153 = vshrl.u32 %v4152, 7
    %v4154 = vsub.s32 %v3473, %v4153
    %v4155 = vrot.slane %v4001, %v4154
    %v4156 = vlaneseq
    %v4157 = vshrl.u32 %v4156, 7
    %v4158 = vsub.s32 %v4091, %v4157
    %v4159 = vrot.slane %v4004, %v4158
    %v4160 = vsel %vm4096, %v4159, %v4155
    %v4161 = vlaneseq
    %v4162 = vshrl.u32 %v4161, 7
    %v4163 = vsub.s32 %v3473, %v4162
    %v4164 = vrot.slane %v4007, %v4163
    %v4165 = vlaneseq
    %v4166 = vshrl.u32 %v4165, 7
    %v4167 = vsub.s32 %v4091, %v4166
    %v4168 = vrot.slane %v4010, %v4167
    %v4169 = vsel %vm4096, %v4168, %v4164
    %v4170 = vlaneseq
    %v4171 = vshrl.u32 %v4170, 7
    %v4172 = vsub.s32 %v3473, %v4171
    %v4173 = vrot.slane %v4013, %v4172
    %v4174 = vlaneseq
    %v4175 = vshrl.u32 %v4174, 7
    %v4176 = vsub.s32 %v4091, %v4175
    %v4177 = vrot.slane %v4016, %v4176
    %v4178 = vsel %vm4096, %v4177, %v4173
    %v4179 = vlaneseq
    %v4180 = vshrl.u32 %v4179, 7
    %v4181 = vsub.s32 %v3473, %v4180
    %v4182 = vrot.slane %v4019, %v4181
    %v4183 = vlaneseq
    %v4184 = vshrl.u32 %v4183, 7
    %v4185 = vsub.s32 %v4091, %v4184
    %v4186 = vrot.slane %v4022, %v4185
    %v4187 = vsel %vm4096, %v4186, %v4182
    %v4188 = vlaneseq
    %v4189 = vshrl.u32 %v4188, 7
    %v4190 = vsub.s32 %v3473, %v4189
    %v4191 = vrot.slane %v4025, %v4190
    %v4192 = vlaneseq
    %v4193 = vshrl.u32 %v4192, 7
    %v4194 = vsub.s32 %v4091, %v4193
    %v4195 = vrot.slane %v4028, %v4194
    %v4196 = vsel %vm4096, %v4195, %v4191
    %v4197 = vlaneseq
    %v4198 = vshrl.u32 %v4197, 7
    %v4199 = vsub.s32 %v3473, %v4198
    %v4200 = vrot.slane %v4031, %v4199
    %v4201 = vlaneseq
    %v4202 = vshrl.u32 %v4201, 7
    %v4203 = vsub.s32 %v4091, %v4202
    %v4204 = vrot.slane %v4034, %v4203
    %v4205 = vsel %vm4096, %v4204, %v4200
    %v4206 = vlaneseq
    %v4207 = vshrl.u32 %v4206, 7
    %v4208 = vsub.s32 %v3473, %v4207
    %v4209 = vrot.slane %v4037, %v4208
    %v4210 = vlaneseq
    %v4211 = vshrl.u32 %v4210, 7
    %v4212 = vsub.s32 %v4091, %v4211
    %v4213 = vrot.slane %v4040, %v4212
    %v4214 = vsel %vm4096, %v4213, %v4209
    %v4215 = vlaneseq
    %v4216 = vshrl.u32 %v4215, 7
    %v4217 = vsub.s32 %v3473, %v4216
    %v4218 = vrot.slane %v4043, %v4217
    %v4219 = vlaneseq
    %v4220 = vshrl.u32 %v4219, 7
    %v4221 = vsub.s32 %v4091, %v4220
    %v4222 = vrot.slane %v4046, %v4221
    %v4223 = vsel %vm4096, %v4222, %v4218
    %v4224 = vlaneseq
    %v4225 = vshrl.u32 %v4224, 7
    %v4226 = vsub.s32 %v3473, %v4225
    %v4227 = vrot.slane %v4049, %v4226
    %v4228 = vlaneseq
    %v4229 = vshrl.u32 %v4228, 7
    %v4230 = vsub.s32 %v4091, %v4229
    %v4231 = vrot.slane %v4052, %v4230
    %v4232 = vsel %vm4096, %v4231, %v4227
    %v4233 = vsel %vm3029, %v4106, %v4097
    %v4234 = vsel %vm3031, %v4115, %v4233
    %v4235 = vsel %vm3033, %v4124, %v4234
    %v4236 = vsel %vm3035, %v4133, %v4235
    %v4237 = vsel %vm3037, %v4142, %v4236
    %v4238 = vsel %vm3039, %v4151, %v4237
    %v4239 = vsel %vm3041, %v4160, %v4238
    %v4240 = vsel %vm3029, %v4178, %v4169
    %v4241 = vsel %vm3031, %v4187, %v4240
    %v4242 = vsel %vm3033, %v4196, %v4241
    %v4243 = vsel %vm3035, %v4205, %v4242
    %v4244 = vsel %vm3037, %v4214, %v4243
    %v4245 = vsel %vm3039, %v4223, %v4244
    %v4246 = vsel %vm3041, %v4232, %v4245
    %v4249 = vsel %vm4053, -1e+12, %v4239
    %v4250 = vsel %vm4054, -1e+12, %v4246
    %v4251 = vpack.c.bf16 %v2841, %v2841
    %v4252 = vpack.c.bf16 %v2850, %v2850
    %v4253 = vpack.c.bf16 %v2859, %v2859
    %v4254 = vpack.c.bf16 %v2868, %v2868
    %v4255 = vpack.c.bf16 %v2877, %v2877
    %v4256 = vpack.c.bf16 %v2886, %v2886
    %v4257 = vpack.c.bf16 %v2895, %v2895
    %v4258 = vpack.c.bf16 %v2904, %v2904
    %v4259 = vpack.c.bf16 %v2913, %v2913
    %v4260 = vpack.c.bf16 %v2922, %v2922
    %v4261 = vpack.c.bf16 %v2931, %v2931
    %v4262 = vpack.c.bf16 %v2940, %v2940
    %v4263 = vpack.c.bf16 %v2949, %v2949
    %v4264 = vpack.c.bf16 %v2958, %v2958
    %v4265 = vpack.c.bf16 %v2967, %v2967
    %v4266 = vpack.c.bf16 %v2976, %v2976
    %v4267 = vld [vmem:[#allocation30] sm:$0xf]
    %v4268 = vld [vmem:[#allocation30 + $0x4] sm:$0xf]
    %v4269 = vld [vmem:[#allocation30 + $0x8] sm:$0xf]
    %v4270 = vld [vmem:[#allocation30 + $0xc] sm:$0xf]
    %v4287 = vunpack.c.l.b16 %v4251
    %v4288 = vunpack.c.l.b16 %v4252
    %v4289 = vunpack.c.l.b16 %v4253
    %v4290 = vunpack.c.l.b16 %v4254
    %v4291 = vunpack.c.l.b16 %v4255
    %v4292 = vunpack.c.l.b16 %v4256
    %v4293 = vunpack.c.l.b16 %v4257
    %v4294 = vunpack.c.l.b16 %v4258
    %v4295 = vunpack.c.l.b16 %v4259
    %v4296 = vunpack.c.l.b16 %v4260
    %v4297 = vunpack.c.l.b16 %v4261
    %v4298 = vunpack.c.l.b16 %v4262
    %v4299 = vunpack.c.l.b16 %v4263
    %v4300 = vunpack.c.l.b16 %v4264
    %v4301 = vunpack.c.l.b16 %v4265
    %v4302 = vunpack.c.l.b16 %v4266
    %v4303 = vsel %vm3029, %v4288, %v4287
    %v4304 = vsel %vm3031, %v4289, %v4303
    %v4305 = vsel %vm3033, %v4290, %v4304
    %v4306 = vsel %vm3035, %v4291, %v4305
    %v4307 = vsel %vm3037, %v4292, %v4306
    %v4308 = vsel %vm3039, %v4293, %v4307
    %v4309 = vsel %vm3041, %v4294, %v4308
    %v4310 = vsel %vm3029, %v4296, %v4295
    %v4311 = vsel %vm3031, %v4297, %v4310
    %v4312 = vsel %vm3033, %v4298, %v4311
    %v4313 = vsel %vm3035, %v4299, %v4312
    %v4314 = vsel %vm3037, %v4300, %v4313
    %v4315 = vsel %vm3039, %v4301, %v4314
    %v4316 = vsel %vm3041, %v4302, %v4315
    %v4317 = vpack.c.b16 %v4316, %v4309
    %v4322 = vunpack.c.l.b16 %v4267
    %v4323 = vunpack.c.l.b16 %v4268
    %v4324 = vunpack.c.l.b16 %v4269
    %v4325 = vunpack.c.l.b16 %v4270
    %v4326 = vpack.c.b16 %v4323, %v4322
    %v4327 = vpack.c.b16 %v4325, %v4324
    %v4331 = vsel %vm513, %v4317, 0
    %4333 = vmatprep.subr.bf16.mxu0 0
    %4334 = vmatpush1.bf16.msra.mxu0 %v4326
    %4335 = vmatprep.subr.bf16.mxu0 0
    %4336 = vmatpush1.bf16.msra.mxu0 %v4327
    %4337 = vmatprep.subr.bf16.mxu0 0
    %4338 = vmatpush1.bf16.msra.mxu0 0
    %4339 = vmatprep.subr.bf16.mxu0 0
    %4340 = vmatpush1.bf16.msra.mxu0 0
    %4341 = vmatprep.subr.bf16.mxu0 0
    %4342 = vmatpush1.bf16.msra.mxu0 0
    %4343 = vmatprep.subr.bf16.mxu0 0
    %4344 = vmatpush1.bf16.msra.mxu0 0
    %4345 = vmatprep.subr.bf16.mxu0 0
    %4346 = vmatpush1.bf16.msra.mxu0 0
    %4347 = vmatprep.subr.bf16.mxu0 0
    %4348 = vmatpush1.bf16.msra.mxu0 0
    %4349 = vmatprep.subr.bf16.mxu0 0
    %4350 = vmatpush1.bf16.msra.mxu0 0
    %4351 = vmatprep.subr.bf16.mxu0 0
    %4352 = vmatpush1.bf16.msra.mxu0 0
    %4353 = vmatprep.subr.bf16.mxu0 0
    %4354 = vmatpush1.bf16.msra.mxu0 0
    %4355 = vmatprep.subr.bf16.mxu0 0
    %4356 = vmatpush1.bf16.msra.mxu0 0
    %4357 = vmatprep.subr.bf16.mxu0 0
    %4358 = vmatpush1.bf16.msra.mxu0 0
    %4359 = vmatprep.subr.bf16.mxu0 0
    %4360 = vmatpush1.bf16.msra.mxu0 0
    %4361 = vmatprep.subr.bf16.mxu0 0
    %4362 = vmatpush1.bf16.msra.mxu0 0
    %4363 = vmatprep.subr.bf16.mxu0 0
    %4364 = vmatpush1.bf16.msra.mxu0 0
    %4365 = vmatprep.mubr.bf16.mxu0 0
    %4366 = vmatmul.mubr.bf16.gmra.mrb[0].mxu0 %v4331
    %v4367 = vpop.f32.mrb[0].mxu0
    %v4368 = vadd.f32 0.0, %v4367
    %v4369 = vpop.f32.mrb[0].mxu0
    %v4370 = vpop.f32.mrb[0].mxu0
    %v4371 = vadd.f32 0.0, %v4370
    %v4372 = vpop.f32.mrb[0].mxu0
    %4373 = vdwg.mxu0
    %v4376 = vcombine.high %v4368, %v4368
    %v4378 = vunpack.c.l.s4 1966171168
    %v4379 = vunpack.c.0.s8 %v4378
    %v4380 = vlaneseq
    %v4381 = vshrl.u32 %v4380, 7
    %v4382 = vsub.s32 %v4379, %v4381
    %v4383 = vrot.slane %v4368, %v4382
    %v4385 = vunpack.c.l.s4 1966171168
    %v4386 = vunpack.c.0.s8 %v4385
    %v4387 = vlaneseq
    %v4388 = vshrl.u32 %v4387, 7
    %v4389 = vsub.s32 %v4386, %v4388
    %v4390 = vrot.slane %v4376, %v4389
    %v4391 = vcombine.high %v4383, %v4383
    %v4392 = vcombine.high %v4390, %v4390
    %v4394 = vunpack.c.l.s4 1966171168
    %v4395 = vunpack.c.0.s8 %v4394
    %v4396 = vlaneseq
    %v4397 = vshrl.u32 %v4396, 7
    %v4398 = vsub.s32 %v4395, %v4397
    %v4399 = vrot.slane %v4383, %v4398
    %v4401 = vunpack.c.l.s4 1966171168
    %v4402 = vunpack.c.0.s8 %v4401
    %v4403 = vlaneseq
    %v4404 = vshrl.u32 %v4403, 7
    %v4405 = vsub.s32 %v4402, %v4404
    %v4406 = vrot.slane %v4390, %v4405
    %v4408 = vunpack.c.l.s4 1966171168
    %v4409 = vunpack.c.0.s8 %v4408
    %v4410 = vlaneseq
    %v4411 = vshrl.u32 %v4410, 7
    %v4412 = vsub.s32 %v4409, %v4411
    %v4413 = vrot.slane %v4391, %v4412
    %v4415 = vunpack.c.l.s4 1966171168
    %v4416 = vunpack.c.0.s8 %v4415
    %v4417 = vlaneseq
    %v4418 = vshrl.u32 %v4417, 7
    %v4419 = vsub.s32 %v4416, %v4418
    %v4420 = vrot.slane %v4392, %v4419
    %v4421 = vcombine.high %v4399, %v4399
    %v4422 = vcombine.high %v4406, %v4406
    %v4423 = vcombine.high %v4413, %v4413
    %v4424 = vcombine.high %v4420, %v4420
    %v4425 = vcombine.high %v4371, %v4371
    %v4427 = vunpack.c.l.s4 1966171168
    %v4428 = vunpack.c.0.s8 %v4427
    %v4429 = vlaneseq
    %v4430 = vshrl.u32 %v4429, 7
    %v4431 = vsub.s32 %v4428, %v4430
    %v4432 = vrot.slane %v4371, %v4431
    %v4434 = vunpack.c.l.s4 1966171168
    %v4435 = vunpack.c.0.s8 %v4434
    %v4436 = vlaneseq
    %v4437 = vshrl.u32 %v4436, 7
    %v4438 = vsub.s32 %v4435, %v4437
    %v4439 = vrot.slane %v4425, %v4438
    %v4440 = vcombine.high %v4432, %v4432
    %v4441 = vcombine.high %v4439, %v4439
    %v4443 = vunpack.c.l.s4 1966171168
    %v4444 = vunpack.c.0.s8 %v4443
    %v4445 = vlaneseq
    %v4446 = vshrl.u32 %v4445, 7
    %v4447 = vsub.s32 %v4444, %v4446
    %v4448 = vrot.slane %v4432, %v4447
    %v4450 = vunpack.c.l.s4 1966171168
    %v4451 = vunpack.c.0.s8 %v4450
    %v4452 = vlaneseq
    %v4453 = vshrl.u32 %v4452, 7
    %v4454 = vsub.s32 %v4451, %v4453
    %v4455 = vrot.slane %v4439, %v4454
    %v4457 = vunpack.c.l.s4 1966171168
    %v4458 = vunpack.c.0.s8 %v4457
    %v4459 = vlaneseq
    %v4460 = vshrl.u32 %v4459, 7
    %v4461 = vsub.s32 %v4458, %v4460
    %v4462 = vrot.slane %v4440, %v4461
    %v4464 = vunpack.c.l.s4 1966171168
    %v4465 = vunpack.c.0.s8 %v4464
    %v4466 = vlaneseq
    %v4467 = vshrl.u32 %v4466, 7
    %v4468 = vsub.s32 %v4465, %v4467
    %v4469 = vrot.slane %v4441, %v4468
    %v4470 = vcombine.high %v4448, %v4448
    %v4471 = vcombine.high %v4455, %v4455
    %v4472 = vcombine.high %v4462, %v4462
    %v4473 = vcombine.high %v4469, %v4469
    %v4474 = vlaneseq
    %v4475 = vshrl.u32 %v4474, 7
    %v4476 = vsub.s32 0, %v4475
    %v4477 = vrot.slane %v4399, %v4476
    %v4478 = vlaneseq
    %v4479 = vshrl.u32 %v4478, 7
    %v4480 = vsub.s32 0, %v4479
    %v4481 = vrot.slane %v4413, %v4480
    %v4482 = vlaneseq
    %v4483 = vshrl.u32 %v4482, 7
    %v4484 = vsub.s32 0, %v4483
    %v4485 = vrot.slane %v4421, %v4484
    %v4486 = vlaneseq
    %v4487 = vshrl.u32 %v4486, 7
    %v4488 = vsub.s32 0, %v4487
    %v4489 = vrot.slane %v4423, %v4488
    %v4490 = vlaneseq
    %v4491 = vshrl.u32 %v4490, 7
    %v4492 = vsub.s32 0, %v4491
    %v4493 = vrot.slane %v4406, %v4492
    %v4494 = vlaneseq
    %v4495 = vshrl.u32 %v4494, 7
    %v4496 = vsub.s32 0, %v4495
    %v4497 = vrot.slane %v4420, %v4496
    %v4498 = vlaneseq
    %v4499 = vshrl.u32 %v4498, 7
    %v4500 = vsub.s32 0, %v4499
    %v4501 = vrot.slane %v4422, %v4500
    %v4502 = vlaneseq
    %v4503 = vshrl.u32 %v4502, 7
    %v4504 = vsub.s32 0, %v4503
    %v4505 = vrot.slane %v4424, %v4504
    %v4506 = vlaneseq
    %v4507 = vshrl.u32 %v4506, 7
    %v4508 = vsub.s32 0, %v4507
    %v4509 = vrot.slane %v4448, %v4508
    %v4510 = vlaneseq
    %v4511 = vshrl.u32 %v4510, 7
    %v4512 = vsub.s32 0, %v4511
    %v4513 = vrot.slane %v4462, %v4512
    %v4514 = vlaneseq
    %v4515 = vshrl.u32 %v4514, 7
    %v4516 = vsub.s32 0, %v4515
    %v4517 = vrot.slane %v4470, %v4516
    %v4518 = vlaneseq
    %v4519 = vshrl.u32 %v4518, 7
    %v4520 = vsub.s32 0, %v4519
    %v4521 = vrot.slane %v4472, %v4520
    %v4522 = vlaneseq
    %v4523 = vshrl.u32 %v4522, 7
    %v4524 = vsub.s32 0, %v4523
    %v4525 = vrot.slane %v4455, %v4524
    %v4526 = vlaneseq
    %v4527 = vshrl.u32 %v4526, 7
    %v4528 = vsub.s32 0, %v4527
    %v4529 = vrot.slane %v4469, %v4528
    %v4530 = vlaneseq
    %v4531 = vshrl.u32 %v4530, 7
    %v4532 = vsub.s32 0, %v4531
    %v4533 = vrot.slane %v4471, %v4532
    %v4534 = vlaneseq
    %v4535 = vshrl.u32 %v4534, 7
    %v4536 = vsub.s32 0, %v4535
    %v4537 = vrot.slane %v4473, %v4536
    %v4554 = vadd.f32 %v4477, %v487
    %v4555 = vadd.f32 %v4481, %v487
    %v4556 = vadd.f32 %v4485, %v487
    %v4557 = vadd.f32 %v4489, %v487
    %v4558 = vadd.f32 %v4493, %v487
    %v4559 = vadd.f32 %v4497, %v487
    %v4560 = vadd.f32 %v4501, %v487
    %v4561 = vadd.f32 %v4505, %v487
    %v4562 = vadd.f32 %v4509, %v487
    %v4563 = vadd.f32 %v4513, %v487
    %v4564 = vadd.f32 %v4517, %v487
    %v4565 = vadd.f32 %v4521, %v487
    %v4566 = vadd.f32 %v4525, %v487
    %v4567 = vadd.f32 %v4529, %v487
    %v4568 = vadd.f32 %v4533, %v487
    %v4569 = vadd.f32 %v4537, %v487
    %v4570 = vtanh.pop %v4554
    %v4571 = vtanh.pop %v4555
    %v4572 = vtanh.pop %v4556
    %v4573 = vtanh.pop %v4557
    %v4574 = vtanh.pop %v4558
    %v4575 = vtanh.pop %v4559
    %v4576 = vtanh.pop %v4560
    %v4577 = vtanh.pop %v4561
    %v4578 = vtanh.pop %v4562
    %v4579 = vtanh.pop %v4563
    %v4580 = vtanh.pop %v4564
    %v4581 = vtanh.pop %v4565
    %v4582 = vtanh.pop %v4566
    %v4583 = vtanh.pop %v4567
    %v4584 = vtanh.pop %v4568
    %v4585 = vtanh.pop %v4569
    %v4586 = vld [vmem:[#allocation41] sm:$0x1]
    %v4588 = vlaneseq
    %v4589 = vshrl.u32 %v4588, 7
    %v4590 = vsub.s32 0, %v4589
    %v4591 = vrot.slane %v4586, %v4590
    %v4593 = vmul.f32 %v4570, %v4591
    %v4594 = vmul.f32 %v4571, %v4591
    %v4595 = vmul.f32 %v4572, %v4591
    %v4596 = vmul.f32 %v4573, %v4591
    %v4597 = vmul.f32 %v4574, %v4591
    %v4598 = vmul.f32 %v4575, %v4591
    %v4599 = vmul.f32 %v4576, %v4591
    %v4600 = vmul.f32 %v4577, %v4591
    %v4601 = vmul.f32 %v4578, %v4591
    %v4602 = vmul.f32 %v4579, %v4591
    %v4603 = vmul.f32 %v4580, %v4591
    %v4604 = vmul.f32 %v4581, %v4591
    %v4605 = vmul.f32 %v4582, %v4591
    %v4606 = vmul.f32 %v4583, %v4591
    %v4607 = vmul.f32 %v4584, %v4591
    %v4608 = vmul.f32 %v4585, %v4591
    %vm4609 = vcmask 259072
    %v4610 = vsel %vm4609, %v4593, 0.0
    %4611 = vadd.xlane.f32.xlu0 %v4610
    %v4612 = vpop.xlane.xlu0 %4611
    %v4613 = vsel %vm4609, %v4594, 0.0
    %4614 = vadd.xlane.f32.xlu0 %v4613
    %v4615 = vpop.xlane.xlu0 %4614
    %v4616 = vsel %vm4609, %v4595, 0.0
    %4617 = vadd.xlane.f32.xlu0 %v4616
    %v4618 = vpop.xlane.xlu0 %4617
    %v4619 = vsel %vm4609, %v4596, 0.0
    %4620 = vadd.xlane.f32.xlu0 %v4619
    %v4621 = vpop.xlane.xlu0 %4620
    %v4622 = vsel %vm4609, %v4597, 0.0
    %4623 = vadd.xlane.f32.xlu0 %v4622
    %v4624 = vpop.xlane.xlu0 %4623
    %v4625 = vsel %vm4609, %v4598, 0.0
    %4626 = vadd.xlane.f32.xlu0 %v4625
    %v4627 = vpop.xlane.xlu0 %4626
    %v4628 = vsel %vm4609, %v4599, 0.0
    %4629 = vadd.xlane.f32.xlu0 %v4628
    %v4630 = vpop.xlane.xlu0 %4629
    %v4631 = vsel %vm4609, %v4600, 0.0
    %4632 = vadd.xlane.f32.xlu0 %v4631
    %v4633 = vpop.xlane.xlu0 %4632
    %v4634 = vsel %vm4609, %v4601, 0.0
    %4635 = vadd.xlane.f32.xlu0 %v4634
    %v4636 = vpop.xlane.xlu0 %4635
    %v4637 = vsel %vm4609, %v4602, 0.0
    %4638 = vadd.xlane.f32.xlu0 %v4637
    %v4639 = vpop.xlane.xlu0 %4638
    %v4640 = vsel %vm4609, %v4603, 0.0
    %4641 = vadd.xlane.f32.xlu0 %v4640
    %v4642 = vpop.xlane.xlu0 %4641
    %v4643 = vsel %vm4609, %v4604, 0.0
    %4644 = vadd.xlane.f32.xlu0 %v4643
    %v4645 = vpop.xlane.xlu0 %4644
    %v4646 = vsel %vm4609, %v4605, 0.0
    %4647 = vadd.xlane.f32.xlu0 %v4646
    %v4648 = vpop.xlane.xlu0 %4647
    %v4649 = vsel %vm4609, %v4606, 0.0
    %4650 = vadd.xlane.f32.xlu0 %v4649
    %v4651 = vpop.xlane.xlu0 %4650
    %v4652 = vsel %vm4609, %v4607, 0.0
    %4653 = vadd.xlane.f32.xlu0 %v4652
    %v4654 = vpop.xlane.xlu0 %4653
    %v4655 = vsel %vm4609, %v4608, 0.0
    %4656 = vadd.xlane.f32.xlu0 %v4655
    %v4657 = vpop.xlane.xlu0 %4656
    %v4658 = vld [vmem:[#allocation2] sm:$0x1]
    %v4660 = vlaneseq
    %v4661 = vshrl.u32 %v4660, 7
    %v4662 = vsub.s32 0, %v4661
    %v4663 = vrot.slane %v4658, %v4662
    %4664 = vset.pattern.permute.xlu0 0
    %4665 = vperm.xlu0 %4664, %v4663
    %v4666 = vpop.permute.xlu0 %4665
    %v4668 = vadd.f32 %v4612, %v4666
    %v4669 = vadd.f32 %v4615, %v4666
    %v4670 = vadd.f32 %v4618, %v4666
    %v4671 = vadd.f32 %v4621, %v4666
    %v4672 = vadd.f32 %v4624, %v4666
    %v4673 = vadd.f32 %v4627, %v4666
    %v4674 = vadd.f32 %v4630, %v4666
    %v4675 = vadd.f32 %v4633, %v4666
    %v4676 = vadd.f32 %v4636, %v4666
    %v4677 = vadd.f32 %v4639, %v4666
    %v4678 = vadd.f32 %v4642, %v4666
    %v4679 = vadd.f32 %v4645, %v4666
    %v4680 = vadd.f32 %v4648, %v4666
    %v4681 = vadd.f32 %v4651, %v4666
    %v4682 = vadd.f32 %v4654, %v4666
    %v4683 = vadd.f32 %v4657, %v4666
    %v4700 = vlaneseq
    %v4701 = vshrl.u32 %v4700, 7
    %v4702 = vsub.s32 %v3473, %v4701
    %v4703 = vrot.slane %v4668, %v4702
    %v4704 = vlaneseq
    %v4705 = vshrl.u32 %v4704, 7
    %v4706 = vsub.s32 %v3473, %v4705
    %v4707 = vrot.slane %v4669, %v4706
    %v4708 = vlaneseq
    %v4709 = vshrl.u32 %v4708, 7
    %v4710 = vsub.s32 %v3473, %v4709
    %v4711 = vrot.slane %v4670, %v4710
    %v4712 = vlaneseq
    %v4713 = vshrl.u32 %v4712, 7
    %v4714 = vsub.s32 %v3473, %v4713
    %v4715 = vrot.slane %v4671, %v4714
    %v4716 = vlaneseq
    %v4717 = vshrl.u32 %v4716, 7
    %v4718 = vsub.s32 %v3473, %v4717
    %v4719 = vrot.slane %v4672, %v4718
    %v4720 = vlaneseq
    %v4721 = vshrl.u32 %v4720, 7
    %v4722 = vsub.s32 %v3473, %v4721
    %v4723 = vrot.slane %v4673, %v4722
    %v4724 = vlaneseq
    %v4725 = vshrl.u32 %v4724, 7
    %v4726 = vsub.s32 %v3473, %v4725
    %v4727 = vrot.slane %v4674, %v4726
    %v4728 = vlaneseq
    %v4729 = vshrl.u32 %v4728, 7
    %v4730 = vsub.s32 %v3473, %v4729
    %v4731 = vrot.slane %v4675, %v4730
    %v4732 = vlaneseq
    %v4733 = vshrl.u32 %v4732, 7
    %v4734 = vsub.s32 %v3473, %v4733
    %v4735 = vrot.slane %v4676, %v4734
    %v4736 = vlaneseq
    %v4737 = vshrl.u32 %v4736, 7
    %v4738 = vsub.s32 %v3473, %v4737
    %v4739 = vrot.slane %v4677, %v4738
    %v4740 = vlaneseq
    %v4741 = vshrl.u32 %v4740, 7
    %v4742 = vsub.s32 %v3473, %v4741
    %v4743 = vrot.slane %v4678, %v4742
    %v4744 = vlaneseq
    %v4745 = vshrl.u32 %v4744, 7
    %v4746 = vsub.s32 %v3473, %v4745
    %v4747 = vrot.slane %v4679, %v4746
    %v4748 = vlaneseq
    %v4749 = vshrl.u32 %v4748, 7
    %v4750 = vsub.s32 %v3473, %v4749
    %v4751 = vrot.slane %v4680, %v4750
    %v4752 = vlaneseq
    %v4753 = vshrl.u32 %v4752, 7
    %v4754 = vsub.s32 %v3473, %v4753
    %v4755 = vrot.slane %v4681, %v4754
    %v4756 = vlaneseq
    %v4757 = vshrl.u32 %v4756, 7
    %v4758 = vsub.s32 %v3473, %v4757
    %v4759 = vrot.slane %v4682, %v4758
    %v4760 = vlaneseq
    %v4761 = vshrl.u32 %v4760, 7
    %v4762 = vsub.s32 %v3473, %v4761
    %v4763 = vrot.slane %v4683, %v4762
    %v4764 = vsel %vm3029, %v4707, %v4703
    %v4765 = vsel %vm3031, %v4711, %v4764
    %v4766 = vsel %vm3033, %v4715, %v4765
    %v4767 = vsel %vm3035, %v4719, %v4766
    %v4768 = vsel %vm3037, %v4723, %v4767
    %v4769 = vsel %vm3039, %v4727, %v4768
    %v4770 = vsel %vm3041, %v4731, %v4769
    %v4771 = vsel %vm3029, %v4739, %v4735
    %v4772 = vsel %vm3031, %v4743, %v4771
    %v4773 = vsel %vm3033, %v4747, %v4772
    %v4774 = vsel %vm3035, %v4751, %v4773
    %v4775 = vsel %vm3037, %v4755, %v4774
    %v4776 = vsel %vm3039, %v4759, %v4775
    %v4777 = vsel %vm3041, %v4763, %v4776
    %vm4780 = vcmask 48128
    %v4781 = vsel %vm4780, %v4770, -inf
    %4782 = vmax.xlane.f32.xlu0 %v4781
    %v4783 = vpop.xlane.xlu0 %4782
    %v4784 = vsel %vm4780, %v4777, -inf
    %4785 = vmax.xlane.f32.xlu0 %v4784
    %v4786 = vpop.xlane.xlu0 %4785
    %v4789 = vlaneseq
    %v4790 = vshrl.u32 %v4789, 7
    %v4791 = vsub.s32 0, %v4790
    %v4792 = vrot.slane %v4783, %v4791
    %v4793 = vlaneseq
    %v4794 = vshrl.u32 %v4793, 7
    %v4795 = vsub.s32 1, %v4794
    %v4796 = vrot.slane %v4783, %v4795
    %v4797 = vlaneseq
    %v4798 = vshrl.u32 %v4797, 7
    %v4799 = vsub.s32 2, %v4798
    %v4800 = vrot.slane %v4783, %v4799
    %v4801 = vlaneseq
    %v4802 = vshrl.u32 %v4801, 7
    %v4803 = vsub.s32 3, %v4802
    %v4804 = vrot.slane %v4783, %v4803
    %v4805 = vlaneseq
    %v4806 = vshrl.u32 %v4805, 7
    %v4807 = vsub.s32 4, %v4806
    %v4808 = vrot.slane %v4783, %v4807
    %v4809 = vlaneseq
    %v4810 = vshrl.u32 %v4809, 7
    %v4811 = vsub.s32 5, %v4810
    %v4812 = vrot.slane %v4783, %v4811
    %v4813 = vlaneseq
    %v4814 = vshrl.u32 %v4813, 7
    %v4815 = vsub.s32 6, %v4814
    %v4816 = vrot.slane %v4783, %v4815
    %v4817 = vlaneseq
    %v4818 = vshrl.u32 %v4817, 7
    %v4819 = vsub.s32 7, %v4818
    %v4820 = vrot.slane %v4783, %v4819
    %v4821 = vlaneseq
    %v4822 = vshrl.u32 %v4821, 7
    %v4823 = vsub.s32 0, %v4822
    %v4824 = vrot.slane %v4786, %v4823
    %v4825 = vlaneseq
    %v4826 = vshrl.u32 %v4825, 7
    %v4827 = vsub.s32 1, %v4826
    %v4828 = vrot.slane %v4786, %v4827
    %v4829 = vlaneseq
    %v4830 = vshrl.u32 %v4829, 7
    %v4831 = vsub.s32 2, %v4830
    %v4832 = vrot.slane %v4786, %v4831
    %v4833 = vlaneseq
    %v4834 = vshrl.u32 %v4833, 7
    %v4835 = vsub.s32 3, %v4834
    %v4836 = vrot.slane %v4786, %v4835
    %v4837 = vlaneseq
    %v4838 = vshrl.u32 %v4837, 7
    %v4839 = vsub.s32 4, %v4838
    %v4840 = vrot.slane %v4786, %v4839
    %v4841 = vlaneseq
    %v4842 = vshrl.u32 %v4841, 7
    %v4843 = vsub.s32 5, %v4842
    %v4844 = vrot.slane %v4786, %v4843
    %v4845 = vlaneseq
    %v4846 = vshrl.u32 %v4845, 7
    %v4847 = vsub.s32 6, %v4846
    %v4848 = vrot.slane %v4786, %v4847
    %v4849 = vlaneseq
    %v4850 = vshrl.u32 %v4849, 7
    %v4851 = vsub.s32 7, %v4850
    %v4852 = vrot.slane %v4786, %v4851
    %v4869 = vsub.f32 %v4668, %v4792
    %v4870 = vsub.f32 %v4669, %v4796
    %v4871 = vsub.f32 %v4670, %v4800
    %v4872 = vsub.f32 %v4671, %v4804
    %v4873 = vsub.f32 %v4672, %v4808
    %v4874 = vsub.f32 %v4673, %v4812
    %v4875 = vsub.f32 %v4674, %v4816
    %v4876 = vsub.f32 %v4675, %v4820
    %v4877 = vsub.f32 %v4676, %v4824
    %v4878 = vsub.f32 %v4677, %v4828
    %v4879 = vsub.f32 %v4678, %v4832
    %v4880 = vsub.f32 %v4679, %v4836
    %v4881 = vsub.f32 %v4680, %v4840
    %v4882 = vsub.f32 %v4681, %v4844
    %v4883 = vsub.f32 %v4682, %v4848
    %v4884 = vsub.f32 %v4683, %v4852
    %v4885 = vmul.f32 %v4869, 1.442695
    %v4886 = vpow.pop %v4885
    %v4887 = vmul.f32 %v4870, 1.442695
    %v4888 = vpow.pop %v4887
    %v4889 = vmul.f32 %v4871, 1.442695
    %v4890 = vpow.pop %v4889
    %v4891 = vmul.f32 %v4872, 1.442695
    %v4892 = vpow.pop %v4891
    %v4893 = vmul.f32 %v4873, 1.442695
    %v4894 = vpow.pop %v4893
    %v4895 = vmul.f32 %v4874, 1.442695
    %v4896 = vpow.pop %v4895
    %v4897 = vmul.f32 %v4875, 1.442695
    %v4898 = vpow.pop %v4897
    %v4899 = vmul.f32 %v4876, 1.442695
    %v4900 = vpow.pop %v4899
    %v4901 = vmul.f32 %v4877, 1.442695
    %v4902 = vpow.pop %v4901
    %v4903 = vmul.f32 %v4878, 1.442695
    %v4904 = vpow.pop %v4903
    %v4905 = vmul.f32 %v4879, 1.442695
    %v4906 = vpow.pop %v4905
    %v4907 = vmul.f32 %v4880, 1.442695
    %v4908 = vpow.pop %v4907
    %v4909 = vmul.f32 %v4881, 1.442695
    %v4910 = vpow.pop %v4909
    %v4911 = vmul.f32 %v4882, 1.442695
    %v4912 = vpow.pop %v4911
    %v4913 = vmul.f32 %v4883, 1.442695
    %v4914 = vpow.pop %v4913
    %v4915 = vmul.f32 %v4884, 1.442695
    %v4916 = vpow.pop %v4915
    %4933 = vset.pattern.permute.xlu0 0
    %4934 = vperm.xlu0 %4933, %v4886
    %v4935 = vpop.permute.xlu0 %4934
    %4936 = vset.pattern.permute.xlu0 0
    %4937 = vperm.xlu0 %4936, %v4888
    %v4938 = vpop.permute.xlu0 %4937
    %4939 = vset.pattern.permute.xlu0 0
    %4940 = vperm.xlu0 %4939, %v4890
    %v4941 = vpop.permute.xlu0 %4940
    %4942 = vset.pattern.permute.xlu0 0
    %4943 = vperm.xlu0 %4942, %v4892
    %v4944 = vpop.permute.xlu0 %4943
    %4945 = vset.pattern.permute.xlu0 0
    %4946 = vperm.xlu0 %4945, %v4894
    %v4947 = vpop.permute.xlu0 %4946
    %4948 = vset.pattern.permute.xlu0 0
    %4949 = vperm.xlu0 %4948, %v4896
    %v4950 = vpop.permute.xlu0 %4949
    %4951 = vset.pattern.permute.xlu0 0
    %4952 = vperm.xlu0 %4951, %v4898
    %v4953 = vpop.permute.xlu0 %4952
    %4954 = vset.pattern.permute.xlu0 0
    %4955 = vperm.xlu0 %4954, %v4900
    %v4956 = vpop.permute.xlu0 %4955
    %4957 = vset.pattern.permute.xlu0 0
    %4958 = vperm.xlu0 %4957, %v4902
    %v4959 = vpop.permute.xlu0 %4958
    %4960 = vset.pattern.permute.xlu0 0
    %4961 = vperm.xlu0 %4960, %v4904
    %v4962 = vpop.permute.xlu0 %4961
    %4963 = vset.pattern.permute.xlu0 0
    %4964 = vperm.xlu0 %4963, %v4906
    %v4965 = vpop.permute.xlu0 %4964
    %4966 = vset.pattern.permute.xlu0 0
    %4967 = vperm.xlu0 %4966, %v4908
    %v4968 = vpop.permute.xlu0 %4967
    %4969 = vset.pattern.permute.xlu0 0
    %4970 = vperm.xlu0 %4969, %v4910
    %v4971 = vpop.permute.xlu0 %4970
    %4972 = vset.pattern.permute.xlu0 0
    %4973 = vperm.xlu0 %4972, %v4912
    %v4974 = vpop.permute.xlu0 %4973
    %4975 = vset.pattern.permute.xlu0 0
    %4976 = vperm.xlu0 %4975, %v4914
    %v4977 = vpop.permute.xlu0 %4976
    %4978 = vset.pattern.permute.xlu0 0
    %4979 = vperm.xlu0 %4978, %v4916
    %v4980 = vpop.permute.xlu0 %4979
    %v4981 = vlaneseq
    %v4982 = vshrl.u32 %v4981, 7
    %v4983 = vsub.s32 %v3473, %v4982
    %v4984 = vrot.slane %v4935, %v4983
    %v4985 = vlaneseq
    %v4986 = vshrl.u32 %v4985, 7
    %v4987 = vsub.s32 %v3473, %v4986
    %v4988 = vrot.slane %v4938, %v4987
    %v4989 = vlaneseq
    %v4990 = vshrl.u32 %v4989, 7
    %v4991 = vsub.s32 %v3473, %v4990
    %v4992 = vrot.slane %v4941, %v4991
    %v4993 = vlaneseq
    %v4994 = vshrl.u32 %v4993, 7
    %v4995 = vsub.s32 %v3473, %v4994
    %v4996 = vrot.slane %v4944, %v4995
    %v4997 = vlaneseq
    %v4998 = vshrl.u32 %v4997, 7
    %v4999 = vsub.s32 %v3473, %v4998
    %v5000 = vrot.slane %v4947, %v4999
    %v5001 = vlaneseq
    %v5002 = vshrl.u32 %v5001, 7
    %v5003 = vsub.s32 %v3473, %v5002
    %v5004 = vrot.slane %v4950, %v5003
    %v5005 = vlaneseq
    %v5006 = vshrl.u32 %v5005, 7
    %v5007 = vsub.s32 %v3473, %v5006
    %v5008 = vrot.slane %v4953, %v5007
    %v5009 = vlaneseq
    %v5010 = vshrl.u32 %v5009, 7
    %v5011 = vsub.s32 %v3473, %v5010
    %v5012 = vrot.slane %v4956, %v5011
    %v5013 = vlaneseq
    %v5014 = vshrl.u32 %v5013, 7
    %v5015 = vsub.s32 %v3473, %v5014
    %v5016 = vrot.slane %v4959, %v5015
    %v5017 = vlaneseq
    %v5018 = vshrl.u32 %v5017, 7
    %v5019 = vsub.s32 %v3473, %v5018
    %v5020 = vrot.slane %v4962, %v5019
    %v5021 = vlaneseq
    %v5022 = vshrl.u32 %v5021, 7
    %v5023 = vsub.s32 %v3473, %v5022
    %v5024 = vrot.slane %v4965, %v5023
    %v5025 = vlaneseq
    %v5026 = vshrl.u32 %v5025, 7
    %v5027 = vsub.s32 %v3473, %v5026
    %v5028 = vrot.slane %v4968, %v5027
    %v5029 = vlaneseq
    %v5030 = vshrl.u32 %v5029, 7
    %v5031 = vsub.s32 %v3473, %v5030
    %v5032 = vrot.slane %v4971, %v5031
    %v5033 = vlaneseq
    %v5034 = vshrl.u32 %v5033, 7
    %v5035 = vsub.s32 %v3473, %v5034
    %v5036 = vrot.slane %v4974, %v5035
    %v5037 = vlaneseq
    %v5038 = vshrl.u32 %v5037, 7
    %v5039 = vsub.s32 %v3473, %v5038
    %v5040 = vrot.slane %v4977, %v5039
    %v5041 = vlaneseq
    %v5042 = vshrl.u32 %v5041, 7
    %v5043 = vsub.s32 %v3473, %v5042
    %v5044 = vrot.slane %v4980, %v5043
    %v5045 = vsel %vm3029, %v4988, %v4984
    %v5046 = vsel %vm3031, %v4992, %v5045
    %v5047 = vsel %vm3033, %v4996, %v5046
    %v5048 = vsel %vm3035, %v5000, %v5047
    %v5049 = vsel %vm3037, %v5004, %v5048
    %v5050 = vsel %vm3039, %v5008, %v5049
    %v5051 = vsel %vm3041, %v5012, %v5050
    %v5052 = vsel %vm3029, %v5020, %v5016
    %v5053 = vsel %vm3031, %v5024, %v5052
    %v5054 = vsel %vm3033, %v5028, %v5053
    %v5055 = vsel %vm3035, %v5032, %v5054
    %v5056 = vsel %vm3037, %v5036, %v5055
    %v5057 = vsel %vm3039, %v5040, %v5056
    %v5058 = vsel %vm3041, %v5044, %v5057
    %v5061 = vsel %vm4780, %v5051, 0.0
    %5062 = vadd.xlane.f32.xlu0 %v5061
    %v5063 = vpop.xlane.xlu0 %5062
    %v5064 = vsel %vm4780, %v5058, 0.0
    %5065 = vadd.xlane.f32.xlu0 %v5064
    %v5066 = vpop.xlane.xlu0 %5065
    %v5067 = vrcp.pop %v5063
    %v5068 = vrcp.pop %v5066
    %v5071 = vlaneseq
    %v5072 = vshrl.u32 %v5071, 7
    %v5073 = vsub.s32 0, %v5072
    %v5074 = vrot.slane %v5067, %v5073
    %v5075 = vlaneseq
    %v5076 = vshrl.u32 %v5075, 7
    %v5077 = vsub.s32 1, %v5076
    %v5078 = vrot.slane %v5067, %v5077
    %v5079 = vlaneseq
    %v5080 = vshrl.u32 %v5079, 7
    %v5081 = vsub.s32 2, %v5080
    %v5082 = vrot.slane %v5067, %v5081
    %v5083 = vlaneseq
    %v5084 = vshrl.u32 %v5083, 7
    %v5085 = vsub.s32 3, %v5084
    %v5086 = vrot.slane %v5067, %v5085
    %v5087 = vlaneseq
    %v5088 = vshrl.u32 %v5087, 7
    %v5089 = vsub.s32 4, %v5088
    %v5090 = vrot.slane %v5067, %v5089
    %v5091 = vlaneseq
    %v5092 = vshrl.u32 %v5091, 7
    %v5093 = vsub.s32 5, %v5092
    %v5094 = vrot.slane %v5067, %v5093
    %v5095 = vlaneseq
    %v5096 = vshrl.u32 %v5095, 7
    %v5097 = vsub.s32 6, %v5096
    %v5098 = vrot.slane %v5067, %v5097
    %v5099 = vlaneseq
    %v5100 = vshrl.u32 %v5099, 7
    %v5101 = vsub.s32 7, %v5100
    %v5102 = vrot.slane %v5067, %v5101
    %v5103 = vlaneseq
    %v5104 = vshrl.u32 %v5103, 7
    %v5105 = vsub.s32 0, %v5104
    %v5106 = vrot.slane %v5068, %v5105
    %v5107 = vlaneseq
    %v5108 = vshrl.u32 %v5107, 7
    %v5109 = vsub.s32 1, %v5108
    %v5110 = vrot.slane %v5068, %v5109
    %v5111 = vlaneseq
    %v5112 = vshrl.u32 %v5111, 7
    %v5113 = vsub.s32 2, %v5112
    %v5114 = vrot.slane %v5068, %v5113
    %v5115 = vlaneseq
    %v5116 = vshrl.u32 %v5115, 7
    %v5117 = vsub.s32 3, %v5116
    %v5118 = vrot.slane %v5068, %v5117
    %v5119 = vlaneseq
    %v5120 = vshrl.u32 %v5119, 7
    %v5121 = vsub.s32 4, %v5120
    %v5122 = vrot.slane %v5068, %v5121
    %v5123 = vlaneseq
    %v5124 = vshrl.u32 %v5123, 7
    %v5125 = vsub.s32 5, %v5124
    %v5126 = vrot.slane %v5068, %v5125
    %v5127 = vlaneseq
    %v5128 = vshrl.u32 %v5127, 7
    %v5129 = vsub.s32 6, %v5128
    %v5130 = vrot.slane %v5068, %v5129
    %v5131 = vlaneseq
    %v5132 = vshrl.u32 %v5131, 7
    %v5133 = vsub.s32 7, %v5132
    %v5134 = vrot.slane %v5068, %v5133
    %v5151 = vmul.f32 %v4886, %v5074
    %v5152 = vmul.f32 %v4888, %v5078
    %v5153 = vmul.f32 %v4890, %v5082
    %v5154 = vmul.f32 %v4892, %v5086
    %v5155 = vmul.f32 %v4894, %v5090
    %v5156 = vmul.f32 %v4896, %v5094
    %v5157 = vmul.f32 %v4898, %v5098
    %v5158 = vmul.f32 %v4900, %v5102
    %v5159 = vmul.f32 %v4902, %v5106
    %v5160 = vmul.f32 %v4904, %v5110
    %v5161 = vmul.f32 %v4906, %v5114
    %v5162 = vmul.f32 %v4908, %v5118
    %v5163 = vmul.f32 %v4910, %v5122
    %v5164 = vmul.f32 %v4912, %v5126
    %v5165 = vmul.f32 %v4914, %v5130
    %v5166 = vmul.f32 %v4916, %v5134
    %5168 = vset.pattern.permute.xlu0 0
    %5169 = vperm.xlu0 %5168, %v5151
    %v5170 = vpop.permute.xlu0 %5169
    %5173 = vset.pattern.permute.xlu0 0
    %5174 = vperm.xlu0 %5173, %v5152
    %v5175 = vpop.permute.xlu0 %5174
    %5178 = vset.pattern.permute.xlu0 0
    %5179 = vperm.xlu0 %5178, %v5153
    %v5180 = vpop.permute.xlu0 %5179
    %5183 = vset.pattern.permute.xlu0 0
    %5184 = vperm.xlu0 %5183, %v5154
    %v5185 = vpop.permute.xlu0 %5184
    %5188 = vset.pattern.permute.xlu0 0
    %5189 = vperm.xlu0 %5188, %v5155
    %v5190 = vpop.permute.xlu0 %5189
    %5193 = vset.pattern.permute.xlu0 0
    %5194 = vperm.xlu0 %5193, %v5156
    %v5195 = vpop.permute.xlu0 %5194
    %5198 = vset.pattern.permute.xlu0 0
    %5199 = vperm.xlu0 %5198, %v5157
    %v5200 = vpop.permute.xlu0 %5199
    %5203 = vset.pattern.permute.xlu0 0
    %5204 = vperm.xlu0 %5203, %v5158
    %v5205 = vpop.permute.xlu0 %5204
    %5208 = vset.pattern.permute.xlu0 0
    %5209 = vperm.xlu0 %5208, %v5159
    %v5210 = vpop.permute.xlu0 %5209
    %5213 = vset.pattern.permute.xlu0 0
    %5214 = vperm.xlu0 %5213, %v5160
    %v5215 = vpop.permute.xlu0 %5214
    %5218 = vset.pattern.permute.xlu0 0
    %5219 = vperm.xlu0 %5218, %v5161
    %v5220 = vpop.permute.xlu0 %5219
    %5223 = vset.pattern.permute.xlu0 0
    %5224 = vperm.xlu0 %5223, %v5162
    %v5225 = vpop.permute.xlu0 %5224
    %5228 = vset.pattern.permute.xlu0 0
    %5229 = vperm.xlu0 %5228, %v5163
    %v5230 = vpop.permute.xlu0 %5229
    %5233 = vset.pattern.permute.xlu0 0
    %5234 = vperm.xlu0 %5233, %v5164
    %v5235 = vpop.permute.xlu0 %5234
    %5238 = vset.pattern.permute.xlu0 0
    %5239 = vperm.xlu0 %5238, %v5165
    %v5240 = vpop.permute.xlu0 %5239
    %5243 = vset.pattern.permute.xlu0 0
    %5244 = vperm.xlu0 %5243, %v5166
    %v5245 = vpop.permute.xlu0 %5244
    %v5247 = vmul.f32 %v5170, %v486
    %v5248 = vmul.f32 %v5175, %v486
    %v5249 = vmul.f32 %v5180, %v486
    %v5250 = vmul.f32 %v5185, %v486
    %v5251 = vmul.f32 %v5190, %v486
    %v5252 = vmul.f32 %v5195, %v486
    %v5253 = vmul.f32 %v5200, %v486
    %v5254 = vmul.f32 %v5205, %v486
    %v5255 = vmul.f32 %v5210, %v486
    %v5256 = vmul.f32 %v5215, %v486
    %v5257 = vmul.f32 %v5220, %v486
    %v5258 = vmul.f32 %v5225, %v486
    %v5259 = vmul.f32 %v5230, %v486
    %v5260 = vmul.f32 %v5235, %v486
    %v5261 = vmul.f32 %v5240, %v486
    %v5262 = vmul.f32 %v5245, %v486
    %v5263 = vsel %vm4609, %v5247, 0.0
    %v5264 = vrot.slane %v5263, 4
    %v5265 = vadd.f32 %v5263, %v5264
    %v5266 = vrot.slane %v5265, 2
    %v5267 = vadd.f32 %v5265, %v5266
    %v5268 = vrot.slane %v5267, 1
    %v5269 = vadd.f32 %v5267, %v5268
    %v5270 = vsel %vm4609, %v5248, 0.0
    %v5271 = vrot.slane %v5270, 4
    %v5272 = vadd.f32 %v5270, %v5271
    %v5273 = vrot.slane %v5272, 2
    %v5274 = vadd.f32 %v5272, %v5273
    %v5275 = vrot.slane %v5274, 1
    %v5276 = vadd.f32 %v5274, %v5275
    %v5277 = vsel %vm4609, %v5249, 0.0
    %v5278 = vrot.slane %v5277, 4
    %v5279 = vadd.f32 %v5277, %v5278
    %v5280 = vrot.slane %v5279, 2
    %v5281 = vadd.f32 %v5279, %v5280
    %v5282 = vrot.slane %v5281, 1
    %v5283 = vadd.f32 %v5281, %v5282
    %v5284 = vsel %vm4609, %v5250, 0.0
    %v5285 = vrot.slane %v5284, 4
    %v5286 = vadd.f32 %v5284, %v5285
    %v5287 = vrot.slane %v5286, 2
    %v5288 = vadd.f32 %v5286, %v5287
    %v5289 = vrot.slane %v5288, 1
    %v5290 = vadd.f32 %v5288, %v5289
    %v5291 = vsel %vm4609, %v5251, 0.0
    %v5292 = vrot.slane %v5291, 4
    %v5293 = vadd.f32 %v5291, %v5292
    %v5294 = vrot.slane %v5293, 2
    %v5295 = vadd.f32 %v5293, %v5294
    %v5296 = vrot.slane %v5295, 1
    %v5297 = vadd.f32 %v5295, %v5296
    %v5298 = vsel %vm4609, %v5252, 0.0
    %v5299 = vrot.slane %v5298, 4
    %v5300 = vadd.f32 %v5298, %v5299
    %v5301 = vrot.slane %v5300, 2
    %v5302 = vadd.f32 %v5300, %v5301
    %v5303 = vrot.slane %v5302, 1
    %v5304 = vadd.f32 %v5302, %v5303
    %v5305 = vsel %vm4609, %v5253, 0.0
    %v5306 = vrot.slane %v5305, 4
    %v5307 = vadd.f32 %v5305, %v5306
    %v5308 = vrot.slane %v5307, 2
    %v5309 = vadd.f32 %v5307, %v5308
    %v5310 = vrot.slane %v5309, 1
    %v5311 = vadd.f32 %v5309, %v5310
    %v5312 = vsel %vm4609, %v5254, 0.0
    %v5313 = vrot.slane %v5312, 4
    %v5314 = vadd.f32 %v5312, %v5313
    %v5315 = vrot.slane %v5314, 2
    %v5316 = vadd.f32 %v5314, %v5315
    %v5317 = vrot.slane %v5316, 1
    %v5318 = vadd.f32 %v5316, %v5317
    %v5319 = vsel %vm4609, %v5255, 0.0
    %v5320 = vrot.slane %v5319, 4
    %v5321 = vadd.f32 %v5319, %v5320
    %v5322 = vrot.slane %v5321, 2
    %v5323 = vadd.f32 %v5321, %v5322
    %v5324 = vrot.slane %v5323, 1
    %v5325 = vadd.f32 %v5323, %v5324
    %v5326 = vsel %vm4609, %v5256, 0.0
    %v5327 = vrot.slane %v5326, 4
    %v5328 = vadd.f32 %v5326, %v5327
    %v5329 = vrot.slane %v5328, 2
    %v5330 = vadd.f32 %v5328, %v5329
    %v5331 = vrot.slane %v5330, 1
    %v5332 = vadd.f32 %v5330, %v5331
    %v5333 = vsel %vm4609, %v5257, 0.0
    %v5334 = vrot.slane %v5333, 4
    %v5335 = vadd.f32 %v5333, %v5334
    %v5336 = vrot.slane %v5335, 2
    %v5337 = vadd.f32 %v5335, %v5336
    %v5338 = vrot.slane %v5337, 1
    %v5339 = vadd.f32 %v5337, %v5338
    %v5340 = vsel %vm4609, %v5258, 0.0
    %v5341 = vrot.slane %v5340, 4
    %v5342 = vadd.f32 %v5340, %v5341
    %v5343 = vrot.slane %v5342, 2
    %v5344 = vadd.f32 %v5342, %v5343
    %v5345 = vrot.slane %v5344, 1
    %v5346 = vadd.f32 %v5344, %v5345
    %v5347 = vsel %vm4609, %v5259, 0.0
    %v5348 = vrot.slane %v5347, 4
    %v5349 = vadd.f32 %v5347, %v5348
    %v5350 = vrot.slane %v5349, 2
    %v5351 = vadd.f32 %v5349, %v5350
    %v5352 = vrot.slane %v5351, 1
    %v5353 = vadd.f32 %v5351, %v5352
    %v5354 = vsel %vm4609, %v5260, 0.0
    %v5355 = vrot.slane %v5354, 4
    %v5356 = vadd.f32 %v5354, %v5355
    %v5357 = vrot.slane %v5356, 2
    %v5358 = vadd.f32 %v5356, %v5357
    %v5359 = vrot.slane %v5358, 1
    %v5360 = vadd.f32 %v5358, %v5359
    %v5361 = vsel %vm4609, %v5261, 0.0
    %v5362 = vrot.slane %v5361, 4
    %v5363 = vadd.f32 %v5361, %v5362
    %v5364 = vrot.slane %v5363, 2
    %v5365 = vadd.f32 %v5363, %v5364
    %v5366 = vrot.slane %v5365, 1
    %v5367 = vadd.f32 %v5365, %v5366
    %v5368 = vsel %vm4609, %v5262, 0.0
    %v5369 = vrot.slane %v5368, 4
    %v5370 = vadd.f32 %v5368, %v5369
    %v5371 = vrot.slane %v5370, 2
    %v5372 = vadd.f32 %v5370, %v5371
    %v5373 = vrot.slane %v5372, 1
    %v5374 = vadd.f32 %v5372, %v5373
    %vm5375 = vcmask 64512
    %5376 = vst.msk [vmem:[#allocation42] sm:$0xff] %vm5375, %v3554
    %5377 = vst.msk [vmem:[#allocation42 + $0x20] sm:$0xff] %vm5375, %v3555
    %vm5378 = vcmask 130048
    %5379 = vst.msk [vmem:[#allocation42 + $0x8] sm:$0xff] %vm5378, %v4249
    %5380 = vst.msk [vmem:[#allocation42 + $0x28] sm:$0xff] %vm5378, %v4250
    %5383 = vrot.lane.b32.xlu0 %v3137, 32
    %v5384 = vpop.permute.xlu0 %5383
    %5385 = vrot.lane.b32.xlu0 %v3138, 32
    %v5386 = vpop.permute.xlu0 %5385
    %vm5389 = vcmask 39936
    %5390 = vst.msk [vmem:[#allocation42 + $0x10] sm:$0xff] %vm5389, %v5384
    %5391 = vst.msk [vmem:[#allocation42 + $0x30] sm:$0xff] %vm5389, %v5386
    %5392 = vst.msk [vmem:[#allocation42 + $0x18] sm:$0xff] %vm4780, %v4770
    %5393 = vst.msk [vmem:[#allocation42 + $0x38] sm:$0xff] %vm4780, %v4777
    %v5410 = vsel %vm3029, %v5276, %v5269
    %v5411 = vsel %vm3031, %v5283, %v5410
    %v5412 = vsel %vm3033, %v5290, %v5411
    %v5413 = vsel %vm3035, %v5297, %v5412
    %v5414 = vsel %vm3037, %v5304, %v5413
    %v5415 = vsel %vm3039, %v5311, %v5414
    %v5416 = vsel %vm3041, %v5318, %v5415
    %v5417 = vsel %vm3029, %v5332, %v5325
    %v5418 = vsel %vm3031, %v5339, %v5417
    %v5419 = vsel %vm3033, %v5346, %v5418
    %v5420 = vsel %vm3035, %v5353, %v5419
    %v5421 = vsel %vm3037, %v5360, %v5420
    %v5422 = vsel %vm3039, %v5367, %v5421
    %v5423 = vsel %vm3041, %v5374, %v5422
    %v5426 = vadd.f32 %v689, %v5416
    %v5427 = vadd.f32 %v690, %v5423
    %5428 = vst.msk [vmem:[#allocation43] sm:$0xff] %vm513, %v5426
    %5429 = vst.msk [vmem:[#allocation43 + $0x10] sm:$0xff] %vm513, %v5427
    %v5446 = vsel %vm3029, %v2546, %v2537
    %v5447 = vsel %vm3031, %v2555, %v5446
    %v5448 = vsel %vm3033, %v2564, %v5447
    %v5449 = vsel %vm3035, %v2573, %v5448
    %v5450 = vsel %vm3037, %v2582, %v5449
    %v5451 = vsel %vm3039, %v2591, %v5450
    %v5452 = vsel %vm3041, %v2600, %v5451
    %v5453 = vsel %vm3029, %v2618, %v2609
    %v5454 = vsel %vm3031, %v2627, %v5453
    %v5455 = vsel %vm3033, %v2636, %v5454
    %v5456 = vsel %vm3035, %v2645, %v5455
    %v5457 = vsel %vm3037, %v2654, %v5456
    %v5458 = vsel %vm3039, %v2663, %v5457
    %v5459 = vsel %vm3041, %v2672, %v5458
    %5462 = vst.msk [vmem:[#allocation43 + $0x8] sm:$0xff] %vm513, %v5452
    %5463 = vst.msk [vmem:[#allocation43 + $0x18] sm:$0xff] %vm513, %v5459
    // Predicated region
    $region206: #{tpu_custom_call.1} parent=1 // pred_check
      _
    $region207: #{tpu_custom_call.1} parent=1 // pred_check_branch
      %5465 = sbr.rel (0) target = $region209
    $region208: #{tpu_custom_call.1} parent=1 // pred_region
      %s5467 = ssub.s32 1024, 1024
      %5468 = vsyncadd [#allocation5], %s5467
      %s5469 = sshll.u32 [#allocation42], 4
      %s5470 = int_to_ptr.vmem [resolvable:$true] %s5469
      %5475 = dma.vmem_to_hbm [thread:$0]  %s5470, 1024, %s26, [#allocation5], 512, 512, 32
    $region209: #{tpu_custom_call.1} parent=1 // pred_fallthru
      _
    // Predicated region
    $region210: #{tpu_custom_call.1} parent=1 // pred_check
      _
    $region211: #{tpu_custom_call.1} parent=1 // pred_check_branch
      %5477 = sbr.rel (0) target = $region213
    $region212: #{tpu_custom_call.1} parent=1 // pred_region
      %s5479 = ssub.s32 512, 512
      %5480 = vsyncadd [#allocation44], %s5479
      %s5481 = sshll.u32 [#allocation43], 4
      %s5482 = int_to_ptr.vmem [resolvable:$true] %s5481
      %5487 = dma.vmem_to_hbm [thread:$0]  %s5482, 512, %s27, [#allocation44], 256, 256, 16
    $region213: #{tpu_custom_call.1} parent=1 // pred_fallthru
      _
    // Predicated region
    $region214: #{tpu_custom_call.1} parent=1 // pred_check
      _
    $region215: #{tpu_custom_call.1} parent=1 // pred_check_branch
      %5489 = sbr.rel (0) target = $region217
    $region216: #{tpu_custom_call.1} parent=1 // pred_region
      %5490 = dma.done [#allocation5], 1024
    $region217: #{tpu_custom_call.1} parent=1 // pred_fallthru
      _
    // Predicated region
    $region218: #{tpu_custom_call.1} parent=1 // pred_check
      _
    $region219: #{tpu_custom_call.1} parent=1 // pred_check_branch
      %5492 = sbr.rel (0) target = $region221
    $region220: #{tpu_custom_call.1} parent=1 // pred_region
      %5493 = dma.done [#allocation44], 512
    $region221: #{tpu_custom_call.1} parent=1 // pred_fallthru
      _
    %5494 = vsyncpa [#allocation4], 1
    %5495 = vsyncpa [#allocation7], 1
    %5496 = vsyncpa [#allocation10], 1
    %5497 = vsyncpa [#allocation13], 1
    %5498 = vsyncpa [#allocation16], 1
    %5499 = vsyncpa [#allocation19], 1
    %5500 = vsyncpa [#allocation22], 1
    %5501 = vsyncpa [#allocation25], 1
    %5502 = vsyncpa [#allocation28], 1
    %5503 = vsyncpa [#allocation31], 1
    %5504 = vsyncpa [#allocation34], 1
    %5505 = vsyncpa [#allocation37], 1
    %5506 = vsyncpa [#allocation40], 1
    %5507 = vsyncpa [#allocation5], 1
    %5508 = vsyncpa [#allocation44], 1

</llo_original>
